<compile_context>
chip_gen: v5e
topology: v5e:2x2
jax: 0.10.0
libtpu: 0.0.40
codegen_flags: <defaults>
</compile_context>

<pallas_src>
import functools
import math

import jax
import jax.numpy as jnp
from jax.experimental import pallas as pl
from jax.experimental.pallas import tpu as pltpu


# ----------------------------------------------------------------------------
# Kernel: full decoder block for a (Bt, S, D) batch chunk in one grid step.
# ----------------------------------------------------------------------------
def _decoder_block_kernel(
    de_ref, en_ref, mask_ref,
    w_att_ref, w1_ref, w2_ref,
    vec_ref, b1_ref, bn_scale_ref, bn_shift_ref,
    y_ref, attw_ref,
    *, heads: int, batch_tile: int,
):
    f32 = jnp.float32
    bf16 = jnp.bfloat16
    Bt = batch_tile
    _, S, D = de_ref.shape
    hd = D // heads
    R = Bt * S
    G = Bt * heads

    de = de_ref[...].reshape(R, D).astype(f32)      # rows (b, s)-ordered
    en = en_ref[...].reshape(R, D).astype(f32)
    neg = mask_ref[...].astype(f32)                 # (S, S) additive attention mask
    vec = vec_ref[...].astype(f32)                  # (16, D) packed per-channel params

    def vrow(i):                                    # (1, D) row of packed params
        return vec[i:i + 1, :]

    def layer_norm(v, wi, bi):
        mu = jnp.mean(v, axis=-1, keepdims=True)
        var = jnp.mean(jnp.square(v - mu), axis=-1, keepdims=True)
        return (v - mu) * jax.lax.rsqrt(var + 1e-5) * vrow(wi) + vrow(bi)

    def proj(x_bf, wi, bi):                         # (R,D)bf16 @ (D,D)bf16 -> f32
        return jnp.dot(x_bf, w_att_ref[wi], preferred_element_type=f32) + vrow(bi)

    def to_heads(x):                                # (R,D) f32 -> (G,S,hd) bf16
        x4 = x.reshape(Bt, S, heads, hd)
        return jnp.transpose(x4, (0, 2, 1, 3)).reshape(G, S, hd).astype(bf16)

    def from_heads(o):                              # (G,S,hd) f32 -> (R,D) f32
        o4 = o.reshape(Bt, heads, S, hd)
        return jnp.transpose(o4, (0, 2, 1, 3)).reshape(R, D)

    def mha(q, k, v, need_weights):
        # one batched attention over G = Bt*heads streams (no per-batch loop)
        qg, kg, vg = to_heads(q), to_heads(k), to_heads(v)
        s = jnp.einsum("gqd,gkd->gqk", qg, kg, preferred_element_type=f32)
        s = s + neg[None, :, :]                     # 1/sqrt(hd) already in W_q/b_q
        s = s - jnp.max(s, axis=-1, keepdims=True)
        e = jnp.exp(s)
        den = jnp.sum(e, axis=-1, keepdims=True)
        if need_weights:
            p = e / den                             # exact: these weights are returned
        else:
            p = e * pl.reciprocal(den, approx=True)
        o = jnp.einsum("gqk,gkd->gqd", p.astype(bf16), vg, preferred_element_type=f32)
        out = from_heads(o)
        if need_weights:
            return out, jnp.mean(p.reshape(Bt, heads, S, S), axis=1)   # head-avg
        return out, None

    # --- 1. self attention on the LayerNormed decoder input -------------------
    dn = layer_norm(de, 0, 1)                       # layer_normal_de_in
    dn_bf = dn.astype(bf16)
    q1 = proj(dn_bf, 0, 8)
    k1 = proj(dn_bf, 1, 9)
    v1 = proj(dn_bf, 2, 10)
    att_heads, attw = mha(q1, k1, v1, need_weights=True)
    att = jnp.dot(att_heads.astype(bf16), w_att_ref[3],
                  preferred_element_type=f32) + vrow(11)
    attw_ref[...] = attw                            # (Bt, S, S) head-averaged
    att_out = att + dn                              # residual vs normalized de_in

    # --- 2. cross attention against the LayerNormed encoder output ------------
    en_n = layer_norm(en, 2, 3)                     # layer_normal_en_out
    att_n = layer_norm(att_out, 4, 5)               # layer_normal_de_out
    en_bf = en_n.astype(bf16)
    att_n_bf = att_n.astype(bf16)
    q2 = proj(att_n_bf, 4, 12)
    k2 = proj(en_bf, 5, 13)
    v2 = proj(en_bf, 6, 14)
    cross_heads, _ = mha(q2, k2, v2, need_weights=False)   # en_weight discarded
    en_output = jnp.dot(cross_heads.astype(bf16), w_att_ref[7],
                        preferred_element_type=f32) + vrow(15)
    en_output = en_output + att_n                   # residual vs normalized att_out

    # torch's permute(1,0,2) is a [S,B,D]->[B,S,D] relayout; rows here are already
    # (b, s)-ordered, so it is a no-op.

    # --- 3. LayerNorm_1 + FFN (Linear -> ReLU -> BN(eval, folded) -> Linear) ---
    y1 = layer_norm(en_output, 6, 7)
    h = jnp.dot(y1.astype(bf16), w1_ref[...], preferred_element_type=f32) + b1_ref[...]
    h = jnp.maximum(h, 0.0)
    h2 = jnp.dot(h.astype(bf16), w2_ref[...], preferred_element_type=f32)   # (R, D)
    # BN folded past lr2: sc_s * (h @ W2) + (sh_s * colsum(W2) + b2)
    out = h2.reshape(Bt, S, D) * bn_scale_ref[...][None, :, :] \
        + bn_shift_ref[...][None, :, :]
    out = out + y1.reshape(Bt, S, D)                # residual vs LN_1 output
    # lane-dense store: (Bt, 1, S*D) slab (S*D is a multiple of 128 at demo sizes)
    y_ref[...] = out.reshape(Bt, 1, S * D)


# ----------------------------------------------------------------------------
# Wrapper: parameter packing + pallas_call.
# ----------------------------------------------------------------------------
def _num_tensorcores() -> int:
    """2 on dual-TensorCore parts (v4/v5p/v7x), 1 on v5e/v6e/unknown."""
    try:
        kind = jax.devices()[0].device_kind.lower()
    except Exception:
        return 1
    if "lite" in kind or "v5e" in kind or "v6e" in kind or "v6" in kind:
        return 1
    if "v4" in kind or "v5p" in kind or "v7" in kind or "7x" in kind:
        return 2
    return 1


def transformer_block_de(de_in, en_out, att_mask, params, heads):
    """Forward pass of TransformerBlock_de.

    de_in, en_out: (S, B, D) seq-first activations (like the PyTorch module).
    att_mask:      (S, S) bool (True = masked) or additive float mask.
    Returns (x, att_weight): x is (B, S, D), att_weight is (B, S, S).
    """
    S, B, D = de_in.shape
    assert D % heads == 0
    hd = D // heads
    F = params["w1"].shape[0]
    f32, bf16 = jnp.float32, jnp.bfloat16
    scale = 1.0 / math.sqrt(hd)

    de = jnp.transpose(de_in, (1, 0, 2)).astype(f32)       # (B, S, D)
    en = jnp.transpose(en_out, (1, 0, 2)).astype(f32)

    if att_mask.dtype == jnp.bool_:
        neg_mask = jnp.where(att_mask, jnp.float32(-1e30), jnp.float32(0.0))
    else:
        neg_mask = att_mask.astype(f32)

    # Grid split only where it buys parallelism (dual-TC parts); single fused
    # step on single-TC parts (a serial grid there is pure overhead).
    n_cores = _num_tensorcores()
    grid_n = n_cores if (n_cores > 1 and B % n_cores == 0) else 1
    Bt = B // grid_n

    # ---- parameter prep (plain-JAX glue, once per call) ----------------------
    # Attention weights: per-stream (D, D) matrices packed on a *leading* axis
    # (no lane-offset slicing in the kernel); (in, out) layout; bf16 for the MXU;
    # 1/sqrt(hd) folded into the Q weights.
    in_w1, in_w2 = params["in_w1"], params["in_w2"]
    w_att = jnp.stack([
        in_w1[0:D].T * scale, in_w1[D:2 * D].T, in_w1[2 * D:].T, params["out_w1"].T,
        in_w2[0:D].T * scale, in_w2[D:2 * D].T, in_w2[2 * D:].T, params["out_w2"].T,
    ], axis=0).astype(bf16)                                 # (8, D, D)
    w1 = params["w1"].T.astype(bf16)                        # (D, F)
    w2_f32 = params["w2"].T.astype(f32)                     # (F, D)
    w2 = w2_f32.astype(bf16)

    b1_in, b2_in = params["in_b1"], params["in_b2"]
    vec = jnp.stack([
        params["ln_de_in_w"], params["ln_de_in_b"],         # rows 0-1
        params["ln_en_out_w"], params["ln_en_out_b"],       # rows 2-3
        params["ln_de_out_w"], params["ln_de_out_b"],       # rows 4-5
        params["ln1_w"], params["ln1_b"],                   # rows 6-7
        b1_in[0:D] * scale, b1_in[D:2 * D], b1_in[2 * D:],  # rows 8-10 (self q/k/v)
        params["out_b1"],                                   # row 11
        b2_in[0:D] * scale, b2_in[D:2 * D], b2_in[2 * D:],  # rows 12-14 (cross q/k/v)
        params["out_b2"],                                   # row 15
    ], axis=0).astype(f32)                                  # (16, D)
    b1 = params["b1"].reshape(1, F).astype(f32)

    # Eval-mode BatchNorm1d(S) folded algebraically past lr2.
    bn_sc = params["bn_g"] * jax.lax.rsqrt(params["bn_v"] + 1e-5)   # (S,)
    bn_sh = params["bn_b"] - params["bn_m"] * bn_sc                 # (S,)
    colsum_w2 = jnp.sum(w2_f32, axis=0)                             # (D,)
    bn_scale_col = bn_sc.reshape(S, 1).astype(f32)                  # (S, 1)
    bn_shift_sd = (bn_sh[:, None] * colsum_w2[None, :]
                   + params["b2"][None, :]).astype(f32)             # (S, D)

    kernel = functools.partial(_decoder_block_kernel, heads=heads, batch_tile=Bt)

    batch3 = lambda g: (g, 0, 0)
    full2 = lambda g: (0, 0)
    full3 = lambda g: (0, 0, 0)

    in_specs = [
        pl.BlockSpec((Bt, S, D), batch3),                   # de chunk
        pl.BlockSpec((Bt, S, D), batch3),                   # en chunk
        pl.BlockSpec((S, S), full2),                        # additive mask
        pl.BlockSpec((8, D, D), full3),                     # packed attention weights
        pl.BlockSpec((D, F), full2),                        # FFN lr1
        pl.BlockSpec((F, D), full2),                        # FFN lr2
        pl.BlockSpec((16, D), full2),                       # packed per-channel params
        pl.BlockSpec((1, F), full2),                        # lr1 bias
        pl.BlockSpec((S, 1), full2),                        # folded BN scale (per s)
        pl.BlockSpec((S, D), full2),                        # folded BN shift + b2
    ]
    out_specs = (
        pl.BlockSpec((Bt, 1, S * D), batch3),               # lane-dense output slab
        pl.BlockSpec((Bt, S, S), batch3),                   # self-attention weights
    )
    out_shape = (
        jax.ShapeDtypeStruct((B, 1, S * D), f32),
        jax.ShapeDtypeStruct((B, S, S), f32),
    )

    # Scoped-VMEM request derived from the actual resident blocks (x3 headroom
    # for pipelining + intermediates), floored at the 16 MiB default.
    blk_bytes = (
        2 * Bt * S * D * 4 + S * S * 4
        + 8 * D * D * 2 + D * F * 2 + F * D * 2
        + 16 * D * 4 + F * 4 + S * 4 + S * D * 4
        + Bt * S * D * 4 + Bt * S * S * 4
    )
    vmem_limit = int(min(100 * 1024 * 1024,
                         max(16 * 1024 * 1024, 3 * blk_bytes + (2 << 20))))

    y, attw = pl.pallas_call(
        kernel,
        grid=(grid_n,),
        in_specs=in_specs,
        out_specs=out_specs,
        out_shape=out_shape,
        compiler_params=pltpu.CompilerParams(
            dimension_semantics=("parallel",),
            vmem_limit_bytes=vmem_limit,
        ),
    )(de, en, neg_mask, w_att, w1, w2, vec, b1, bn_scale_col, bn_shift_sd)
    return y.reshape(B, S, D), attw


# ----------------------------------------------------------------------------
# Deterministic synthetic parameters (PyTorch layout), and the demo driver.
# ----------------------------------------------------------------------------
def init_params(key, embed_dim, forward_expansion, max_seq):
    D = embed_dim
    F = forward_expansion * embed_dim
    S = max_seq - 1
    ks = jax.random.split(key, 12)
    n = lambda k, shape, s=0.05: jax.random.normal(k, shape, jnp.float32) * s
    ones = lambda shape: jnp.ones(shape, jnp.float32)
    zeros = lambda shape: jnp.zeros(shape, jnp.float32)
    return dict(
        # LayerNorms
        ln_de_in_w=ones((D,)), ln_de_in_b=zeros((D,)),
        ln_en_out_w=ones((D,)), ln_en_out_b=zeros((D,)),
        ln_de_out_w=ones((D,)), ln_de_out_b=zeros((D,)),
        ln1_w=ones((D,)), ln1_b=zeros((D,)),
        # multi_att_1 (self attention): in_proj (3D, D)+(3D,), out_proj (D, D)+(D,)
        in_w1=n(ks[0], (3 * D, D)), in_b1=n(ks[1], (3 * D,), 0.01),
        out_w1=n(ks[2], (D, D)), out_b1=n(ks[3], (D,), 0.01),
        # multi_att_2 (cross attention)
        in_w2=n(ks[4], (3 * D, D)), in_b2=n(ks[5], (3 * D,), 0.01),
        out_w2=n(ks[6], (D, D)), out_b2=n(ks[7], (D,), 0.01),
        # FFN: lr1 (F, D), BatchNorm1d(S) running stats, lr2 (D, F)
        w1=n(ks[8], (F, D)), b1=n(ks[9], (F,), 0.01),
        bn_g=ones((S,)), bn_b=zeros((S,)),
        bn_m=zeros((S,)), bn_v=ones((S,)),
        w2=n(ks[10], (D, F)), b2=n(ks[11], (D,), 0.01),
    )


if __name__ == "__main__":
    embed_dim, heads_de = 32, 4
    MAX_SEQ = 9                       # BatchNorm1d(MAX_SEQ - 1) forces S = MAX_SEQ - 1
    forward_expansion = 1
    B = 2
    S = MAX_SEQ - 1

    key = jax.random.PRNGKey(0)
    kp, kd, ke = jax.random.split(key, 3)
    params = init_params(kp, embed_dim, forward_expansion, MAX_SEQ)
    de_in = jax.random.normal(kd, (S, B, embed_dim), jnp.float32)    # seq-first, like torch
    en_out = jax.random.normal(ke, (S, B, embed_dim), jnp.float32)
    att_mask = jnp.triu(jnp.ones((S, S), dtype=bool), k=1)           # causal mask

    x, att_w = transformer_block_de(de_in, en_out, att_mask, params, heads_de)
    jax.block_until_ready((x, att_w))
    assert x.shape == (B, S, embed_dim)
    assert att_w.shape == (B, S, S)
    print("KERNEL_OK")
</pallas_src>

<mosaic_0001>
module attributes {stable_mosaic.version = 11 : i64} {
  func.func @_decoder_block_kernel(%arg0: i32, %arg1: memref<2x8x32xf32, #tpu.memory_space<vmem>>, %arg2: memref<2x8x32xf32, #tpu.memory_space<vmem>>, %arg3: memref<8x8xf32, #tpu.memory_space<vmem>>, %arg4: memref<8x32x32xbf16, #tpu.memory_space<vmem>>, %arg5: memref<32x32xbf16, #tpu.memory_space<vmem>>, %arg6: memref<32x32xbf16, #tpu.memory_space<vmem>>, %arg7: memref<16x32xf32, #tpu.memory_space<vmem>>, %arg8: memref<1x32xf32, #tpu.memory_space<vmem>>, %arg9: memref<8x1xf32, #tpu.memory_space<vmem>>, %arg10: memref<8x32xf32, #tpu.memory_space<vmem>>, %arg11: memref<2x1x256xf32, #tpu.memory_space<vmem>>, %arg12: memref<2x8x8xf32, #tpu.memory_space<vmem>>) attributes {dimension_semantics = [#tpu.dimension_semantics<parallel>], iteration_bounds = array<i64: 1>, scalar_prefetch = 0 : i64, scratch_operands = 0 : i64, tpu.core_type = #tpu.core_type<tc>, window_params = [{transform_indices = @transform_0, window_bounds = array<i64: 2, 8, 32>}, {transform_indices = @transform_1, window_bounds = array<i64: 2, 8, 32>}, {pipeline_mode = #tpu.pipeline_mode<synchronous>, transform_indices = @transform_2, window_bounds = array<i64: 8, 8>}, {pipeline_mode = #tpu.pipeline_mode<synchronous>, transform_indices = @transform_3, window_bounds = array<i64: 8, 32, 32>}, {pipeline_mode = #tpu.pipeline_mode<synchronous>, transform_indices = @transform_4, window_bounds = array<i64: 32, 32>}, {pipeline_mode = #tpu.pipeline_mode<synchronous>, transform_indices = @transform_5, window_bounds = array<i64: 32, 32>}, {pipeline_mode = #tpu.pipeline_mode<synchronous>, transform_indices = @transform_6, window_bounds = array<i64: 16, 32>}, {pipeline_mode = #tpu.pipeline_mode<synchronous>, transform_indices = @transform_7, window_bounds = array<i64: 1, 32>}, {pipeline_mode = #tpu.pipeline_mode<synchronous>, transform_indices = @transform_8, window_bounds = array<i64: 8, 1>}, {pipeline_mode = #tpu.pipeline_mode<synchronous>, transform_indices = @transform_9, window_bounds = array<i64: 8, 32>}, {transform_indices = @transform_10, window_bounds = array<i64: 2, 1, 256>}, {transform_indices = @transform_11, window_bounds = array<i64: 2, 8, 8>}]} {
    %c0 = arith.constant 0 : index
    %c0_0 = arith.constant 0 : index
    %c0_1 = arith.constant 0 : index
    %0 = vector.load %arg1[%c0, %c0_0, %c0_1] : memref<2x8x32xf32, #tpu.memory_space<vmem>>, vector<2x8x32xf32>
    %1 = vector.shape_cast %0 : vector<2x8x32xf32> to vector<16x32xf32>
    %c0_2 = arith.constant 0 : index
    %c0_3 = arith.constant 0 : index
    %c0_4 = arith.constant 0 : index
    %2 = vector.load %arg2[%c0_2, %c0_3, %c0_4] : memref<2x8x32xf32, #tpu.memory_space<vmem>>, vector<2x8x32xf32>
    %3 = vector.shape_cast %2 : vector<2x8x32xf32> to vector<16x32xf32>
    %c0_5 = arith.constant 0 : index
    %c0_6 = arith.constant 0 : index
    %4 = vector.load %arg3[%c0_5, %c0_6] : memref<8x8xf32, #tpu.memory_space<vmem>>, vector<8x8xf32>
    %c0_7 = arith.constant 0 : index
    %c0_8 = arith.constant 0 : index
    %5 = vector.load %arg7[%c0_7, %c0_8] : memref<16x32xf32, #tpu.memory_space<vmem>>, vector<16x32xf32>
    %cst = arith.constant dense<0.000000e+00> : vector<16xf32>
    %6 = vector.multi_reduction <add>, %1, %cst [1] : vector<16x32xf32> to vector<16xf32>
    %7 = vector.shape_cast %6 : vector<16xf32> to vector<16x1xf32>
    %cst_9 = arith.constant 3.200000e+01 : f32
    %8 = vector.broadcast %cst_9 : f32 to vector<16x1xf32>
    %9 = arith.divf %7, %8 : vector<16x1xf32>
    %10 = vector.broadcast %9 : vector<16x1xf32> to vector<16x32xf32>
    %11 = arith.subf %1, %10 : vector<16x32xf32>
    %12 = arith.mulf %11, %11 : vector<16x32xf32>
    %cst_10 = arith.constant dense<0.000000e+00> : vector<16xf32>
    %13 = vector.multi_reduction <add>, %12, %cst_10 [1] : vector<16x32xf32> to vector<16xf32>
    %14 = vector.shape_cast %13 : vector<16xf32> to vector<16x1xf32>
    %cst_11 = arith.constant 3.200000e+01 : f32
    %15 = vector.broadcast %cst_11 : f32 to vector<16x1xf32>
    %16 = arith.divf %14, %15 : vector<16x1xf32>
    %17 = vector.broadcast %9 : vector<16x1xf32> to vector<16x32xf32>
    %18 = arith.subf %1, %17 : vector<16x32xf32>
    %cst_12 = arith.constant 9.99999974E-6 : f32
    %19 = vector.broadcast %cst_12 : f32 to vector<16x1xf32>
    %20 = arith.addf %16, %19 : vector<16x1xf32>
    %21 = math.rsqrt %20 : vector<16x1xf32>
    %22 = vector.broadcast %21 : vector<16x1xf32> to vector<16x32xf32>
    %23 = arith.mulf %18, %22 : vector<16x32xf32>
    %24 = vector.extract_strided_slice %5 {offsets = [0, 0], sizes = [1, 32], strides = [1, 1]} : vector<16x32xf32> to vector<1x32xf32>
    %25 = vector.broadcast %24 : vector<1x32xf32> to vector<16x32xf32>
    %26 = arith.mulf %23, %25 : vector<16x32xf32>
    %27 = vector.extract_strided_slice %5 {offsets = [1, 0], sizes = [1, 32], strides = [1, 1]} : vector<16x32xf32> to vector<1x32xf32>
    %28 = vector.broadcast %27 : vector<1x32xf32> to vector<16x32xf32>
    %29 = arith.addf %26, %28 : vector<16x32xf32>
    %30 = arith.truncf %29 : vector<16x32xf32> to vector<16x32xbf16>
    %c0_13 = arith.constant 0 : index
    %c0_14 = arith.constant 0 : index
    %c0_15 = arith.constant 0 : index
    %31 = vector.load %arg4[%c0_13, %c0_14, %c0_15] : memref<8x32x32xbf16, #tpu.memory_space<vmem>>, vector<1x32x32xbf16>
    %32 = vector.shape_cast %31 : vector<1x32x32xbf16> to vector<32x32xbf16>
    %cst_16 = arith.constant dense<0.000000e+00> : vector<16x32xf32>
    %33 = tpu.matmul %30, %32, %cst_16 {dimension_numbers = #tpu.dot_dimension_numbers<[1], [0], [0], [1], [0, 0, 1, 1], [], []>} : vector<16x32xbf16>, vector<32x32xbf16>, vector<16x32xf32> -> vector<16x32xf32>
    %34 = vector.extract_strided_slice %5 {offsets = [8, 0], sizes = [1, 32], strides = [1, 1]} : vector<16x32xf32> to vector<1x32xf32>
    %35 = vector.broadcast %34 : vector<1x32xf32> to vector<16x32xf32>
    %36 = arith.addf %33, %35 : vector<16x32xf32>
    %c1 = arith.constant 1 : index
    %c0_17 = arith.constant 0 : index
    %c0_18 = arith.constant 0 : index
    %37 = vector.load %arg4[%c1, %c0_17, %c0_18] : memref<8x32x32xbf16, #tpu.memory_space<vmem>>, vector<1x32x32xbf16>
    %38 = vector.shape_cast %37 : vector<1x32x32xbf16> to vector<32x32xbf16>
    %cst_19 = arith.constant dense<0.000000e+00> : vector<16x32xf32>
    %39 = tpu.matmul %30, %38, %cst_19 {dimension_numbers = #tpu.dot_dimension_numbers<[1], [0], [0], [1], [0, 0, 1, 1], [], []>} : vector<16x32xbf16>, vector<32x32xbf16>, vector<16x32xf32> -> vector<16x32xf32>
    %40 = vector.extract_strided_slice %5 {offsets = [9, 0], sizes = [1, 32], strides = [1, 1]} : vector<16x32xf32> to vector<1x32xf32>
    %41 = vector.broadcast %40 : vector<1x32xf32> to vector<16x32xf32>
    %42 = arith.addf %39, %41 : vector<16x32xf32>
    %c2 = arith.constant 2 : index
    %c0_20 = arith.constant 0 : index
    %c0_21 = arith.constant 0 : index
    %43 = vector.load %arg4[%c2, %c0_20, %c0_21] : memref<8x32x32xbf16, #tpu.memory_space<vmem>>, vector<1x32x32xbf16>
    %44 = vector.shape_cast %43 : vector<1x32x32xbf16> to vector<32x32xbf16>
    %cst_22 = arith.constant dense<0.000000e+00> : vector<16x32xf32>
    %45 = tpu.matmul %30, %44, %cst_22 {dimension_numbers = #tpu.dot_dimension_numbers<[1], [0], [0], [1], [0, 0, 1, 1], [], []>} : vector<16x32xbf16>, vector<32x32xbf16>, vector<16x32xf32> -> vector<16x32xf32>
    %46 = vector.extract_strided_slice %5 {offsets = [10, 0], sizes = [1, 32], strides = [1, 1]} : vector<16x32xf32> to vector<1x32xf32>
    %47 = vector.broadcast %46 : vector<1x32xf32> to vector<16x32xf32>
    %48 = arith.addf %45, %47 : vector<16x32xf32>
    %49 = vector.shape_cast %36 : vector<16x32xf32> to vector<2x8x4x8xf32>
    %50 = tpu.transpose %49, [0, 2, 1, 3] : vector<2x8x4x8xf32> -> vector<2x4x8x8xf32>
    %51 = vector.shape_cast %50 : vector<2x4x8x8xf32> to vector<8x8x8xf32>
    %52 = arith.truncf %51 : vector<8x8x8xf32> to vector<8x8x8xbf16>
    %53 = vector.shape_cast %42 : vector<16x32xf32> to vector<2x8x4x8xf32>
    %54 = tpu.transpose %53, [0, 2, 1, 3] : vector<2x8x4x8xf32> -> vector<2x4x8x8xf32>
    %55 = vector.shape_cast %54 : vector<2x4x8x8xf32> to vector<8x8x8xf32>
    %56 = arith.truncf %55 : vector<8x8x8xf32> to vector<8x8x8xbf16>
    %57 = vector.shape_cast %48 : vector<16x32xf32> to vector<2x8x4x8xf32>
    %58 = tpu.transpose %57, [0, 2, 1, 3] : vector<2x8x4x8xf32> -> vector<2x4x8x8xf32>
    %59 = vector.shape_cast %58 : vector<2x4x8x8xf32> to vector<8x8x8xf32>
    %60 = arith.truncf %59 : vector<8x8x8xf32> to vector<8x8x8xbf16>
    "tpu.trace_start"() <{level = 10 : i32, message = "gqd,gkd->gqk"}> : () -> ()
    %cst_23 = arith.constant dense<0.000000e+00> : vector<8x8x8xf32>
    %61 = tpu.matmul %52, %56, %cst_23 {dimension_numbers = #tpu.dot_dimension_numbers<[2], [2], [1], [1], [0, 0, 0, 1, 1, 1], [0], [0]>} : vector<8x8x8xbf16>, vector<8x8x8xbf16>, vector<8x8x8xf32> -> vector<8x8x8xf32>
    "tpu.trace_stop"() : () -> ()
    %62 = vector.shape_cast %4 : vector<8x8xf32> to vector<1x8x8xf32>
    %63 = vector.broadcast %62 : vector<1x8x8xf32> to vector<8x8x8xf32>
    %64 = arith.addf %61, %63 : vector<8x8x8xf32>
    %cst_24 = arith.constant dense<0xFF800000> : vector<8x8xf32>
    %65 = vector.multi_reduction <maximumf>, %64, %cst_24 [2] : vector<8x8x8xf32> to vector<8x8xf32>
    %66 = vector.shape_cast %65 : vector<8x8xf32> to vector<8x8x1xf32>
    %67 = vector.broadcast %66 : vector<8x8x1xf32> to vector<8x8x8xf32>
    %68 = arith.subf %64, %67 : vector<8x8x8xf32>
    %69 = math.exp %68 : vector<8x8x8xf32>
    %cst_25 = arith.constant dense<0.000000e+00> : vector<8x8xf32>
    %70 = vector.multi_reduction <add>, %69, %cst_25 [2] : vector<8x8x8xf32> to vector<8x8xf32>
    %71 = vector.shape_cast %70 : vector<8x8xf32> to vector<8x8x1xf32>
    %72 = vector.broadcast %71 : vector<8x8x1xf32> to vector<8x8x8xf32>
    %73 = arith.divf %69, %72 : vector<8x8x8xf32>
    %74 = arith.truncf %73 : vector<8x8x8xf32> to vector<8x8x8xbf16>
    "tpu.trace_start"() <{level = 10 : i32, message = "gqk,gkd->gqd"}> : () -> ()
    %cst_26 = arith.constant dense<0.000000e+00> : vector<8x8x8xf32>
    %75 = tpu.matmul %74, %60, %cst_26 {dimension_numbers = #tpu.dot_dimension_numbers<[2], [1], [1], [2], [0, 0, 0, 1, 1, 2], [0], [0]>} : vector<8x8x8xbf16>, vector<8x8x8xbf16>, vector<8x8x8xf32> -> vector<8x8x8xf32>
    "tpu.trace_stop"() : () -> ()
    %76 = vector.shape_cast %75 : vector<8x8x8xf32> to vector<2x4x8x8xf32>
    %77 = tpu.transpose %76, [0, 2, 1, 3] : vector<2x4x8x8xf32> -> vector<2x8x4x8xf32>
    %78 = vector.shape_cast %77 : vector<2x8x4x8xf32> to vector<16x32xf32>
    %79 = vector.shape_cast %73 : vector<8x8x8xf32> to vector<2x4x8x8xf32>
    %cst_27 = arith.constant dense<0.000000e+00> : vector<2x8x8xf32>
    %80 = vector.multi_reduction <add>, %79, %cst_27 [1] : vector<2x4x8x8xf32> to vector<2x8x8xf32>
    %cst_28 = arith.constant 4.000000e+00 : f32
    %81 = vector.broadcast %cst_28 : f32 to vector<2x8x8xf32>
    %82 = arith.divf %80, %81 : vector<2x8x8xf32>
    %83 = arith.truncf %78 : vector<16x32xf32> to vector<16x32xbf16>
    %c3 = arith.constant 3 : index
    %c0_29 = arith.constant 0 : index
    %c0_30 = arith.constant 0 : index
    %84 = vector.load %arg4[%c3, %c0_29, %c0_30] : memref<8x32x32xbf16, #tpu.memory_space<vmem>>, vector<1x32x32xbf16>
    %85 = vector.shape_cast %84 : vector<1x32x32xbf16> to vector<32x32xbf16>
    %cst_31 = arith.constant dense<0.000000e+00> : vector<16x32xf32>
    %86 = tpu.matmul %83, %85, %cst_31 {dimension_numbers = #tpu.dot_dimension_numbers<[1], [0], [0], [1], [0, 0, 1, 1], [], []>} : vector<16x32xbf16>, vector<32x32xbf16>, vector<16x32xf32> -> vector<16x32xf32>
    %87 = vector.extract_strided_slice %5 {offsets = [11, 0], sizes = [1, 32], strides = [1, 1]} : vector<16x32xf32> to vector<1x32xf32>
    %88 = vector.broadcast %87 : vector<1x32xf32> to vector<16x32xf32>
    %89 = arith.addf %86, %88 : vector<16x32xf32>
    %c0_32 = arith.constant 0 : index
    %c0_33 = arith.constant 0 : index
    %c0_34 = arith.constant 0 : index
    %90 = vector.load %arg12[%c0_32, %c0_33, %c0_34] : memref<2x8x8xf32, #tpu.memory_space<vmem>>, vector<2x8x8xf32>
    tpu.vector_store %arg12[%c0_32, %c0_33, %c0_34], %82 {strides = array<i32>} : memref<2x8x8xf32, #tpu.memory_space<vmem>>, vector<2x8x8xf32>,
    %91 = arith.addf %89, %29 : vector<16x32xf32>
    %cst_35 = arith.constant dense<0.000000e+00> : vector<16xf32>
    %92 = vector.multi_reduction <add>, %3, %cst_35 [1] : vector<16x32xf32> to vector<16xf32>
    %93 = vector.shape_cast %92 : vector<16xf32> to vector<16x1xf32>
    %cst_36 = arith.constant 3.200000e+01 : f32
    %94 = vector.broadcast %cst_36 : f32 to vector<16x1xf32>
    %95 = arith.divf %93, %94 : vector<16x1xf32>
    %96 = vector.broadcast %95 : vector<16x1xf32> to vector<16x32xf32>
    %97 = arith.subf %3, %96 : vector<16x32xf32>
    %98 = arith.mulf %97, %97 : vector<16x32xf32>
    %cst_37 = arith.constant dense<0.000000e+00> : vector<16xf32>
    %99 = vector.multi_reduction <add>, %98, %cst_37 [1] : vector<16x32xf32> to vector<16xf32>
    %100 = vector.shape_cast %99 : vector<16xf32> to vector<16x1xf32>
    %cst_38 = arith.constant 3.200000e+01 : f32
    %101 = vector.broadcast %cst_38 : f32 to vector<16x1xf32>
    %102 = arith.divf %100, %101 : vector<16x1xf32>
    %103 = vector.broadcast %95 : vector<16x1xf32> to vector<16x32xf32>
    %104 = arith.subf %3, %103 : vector<16x32xf32>
    %cst_39 = arith.constant 9.99999974E-6 : f32
    %105 = vector.broadcast %cst_39 : f32 to vector<16x1xf32>
    %106 = arith.addf %102, %105 : vector<16x1xf32>
    %107 = math.rsqrt %106 : vector<16x1xf32>
    %108 = vector.broadcast %107 : vector<16x1xf32> to vector<16x32xf32>
    %109 = arith.mulf %104, %108 : vector<16x32xf32>
    %110 = vector.extract_strided_slice %5 {offsets = [2, 0], sizes = [1, 32], strides = [1, 1]} : vector<16x32xf32> to vector<1x32xf32>
    %111 = vector.broadcast %110 : vector<1x32xf32> to vector<16x32xf32>
    %112 = arith.mulf %109, %111 : vector<16x32xf32>
    %113 = vector.extract_strided_slice %5 {offsets = [3, 0], sizes = [1, 32], strides = [1, 1]} : vector<16x32xf32> to vector<1x32xf32>
    %114 = vector.broadcast %113 : vector<1x32xf32> to vector<16x32xf32>
    %115 = arith.addf %112, %114 : vector<16x32xf32>
    %cst_40 = arith.constant dense<0.000000e+00> : vector<16xf32>
    %116 = vector.multi_reduction <add>, %91, %cst_40 [1] : vector<16x32xf32> to vector<16xf32>
    %117 = vector.shape_cast %116 : vector<16xf32> to vector<16x1xf32>
    %cst_41 = arith.constant 3.200000e+01 : f32
    %118 = vector.broadcast %cst_41 : f32 to vector<16x1xf32>
    %119 = arith.divf %117, %118 : vector<16x1xf32>
    %120 = vector.broadcast %119 : vector<16x1xf32> to vector<16x32xf32>
    %121 = arith.subf %91, %120 : vector<16x32xf32>
    %122 = arith.mulf %121, %121 : vector<16x32xf32>
    %cst_42 = arith.constant dense<0.000000e+00> : vector<16xf32>
    %123 = vector.multi_reduction <add>, %122, %cst_42 [1] : vector<16x32xf32> to vector<16xf32>
    %124 = vector.shape_cast %123 : vector<16xf32> to vector<16x1xf32>
    %cst_43 = arith.constant 3.200000e+01 : f32
    %125 = vector.broadcast %cst_43 : f32 to vector<16x1xf32>
    %126 = arith.divf %124, %125 : vector<16x1xf32>
    %127 = vector.broadcast %119 : vector<16x1xf32> to vector<16x32xf32>
    %128 = arith.subf %91, %127 : vector<16x32xf32>
    %cst_44 = arith.constant 9.99999974E-6 : f32
    %129 = vector.broadcast %cst_44 : f32 to vector<16x1xf32>
    %130 = arith.addf %126, %129 : vector<16x1xf32>
    %131 = math.rsqrt %130 : vector<16x1xf32>
    %132 = vector.broadcast %131 : vector<16x1xf32> to vector<16x32xf32>
    %133 = arith.mulf %128, %132 : vector<16x32xf32>
    %134 = vector.extract_strided_slice %5 {offsets = [4, 0], sizes = [1, 32], strides = [1, 1]} : vector<16x32xf32> to vector<1x32xf32>
    %135 = vector.broadcast %134 : vector<1x32xf32> to vector<16x32xf32>
    %136 = arith.mulf %133, %135 : vector<16x32xf32>
    %137 = vector.extract_strided_slice %5 {offsets = [5, 0], sizes = [1, 32], strides = [1, 1]} : vector<16x32xf32> to vector<1x32xf32>
    %138 = vector.broadcast %137 : vector<1x32xf32> to vector<16x32xf32>
    %139 = arith.addf %136, %138 : vector<16x32xf32>
    %140 = arith.truncf %115 : vector<16x32xf32> to vector<16x32xbf16>
    %141 = arith.truncf %139 : vector<16x32xf32> to vector<16x32xbf16>
    %c4 = arith.constant 4 : index
    %c0_45 = arith.constant 0 : index
    %c0_46 = arith.constant 0 : index
    %142 = vector.load %arg4[%c4, %c0_45, %c0_46] : memref<8x32x32xbf16, #tpu.memory_space<vmem>>, vector<1x32x32xbf16>
    %143 = vector.shape_cast %142 : vector<1x32x32xbf16> to vector<32x32xbf16>
    %cst_47 = arith.constant dense<0.000000e+00> : vector<16x32xf32>
    %144 = tpu.matmul %141, %143, %cst_47 {dimension_numbers = #tpu.dot_dimension_numbers<[1], [0], [0], [1], [0, 0, 1, 1], [], []>} : vector<16x32xbf16>, vector<32x32xbf16>, vector<16x32xf32> -> vector<16x32xf32>
    %145 = vector.extract_strided_slice %5 {offsets = [12, 0], sizes = [1, 32], strides = [1, 1]} : vector<16x32xf32> to vector<1x32xf32>
    %146 = vector.broadcast %145 : vector<1x32xf32> to vector<16x32xf32>
    %147 = arith.addf %144, %146 : vector<16x32xf32>
    %c5 = arith.constant 5 : index
    %c0_48 = arith.constant 0 : index
    %c0_49 = arith.constant 0 : index
    %148 = vector.load %arg4[%c5, %c0_48, %c0_49] : memref<8x32x32xbf16, #tpu.memory_space<vmem>>, vector<1x32x32xbf16>
    %149 = vector.shape_cast %148 : vector<1x32x32xbf16> to vector<32x32xbf16>
    %cst_50 = arith.constant dense<0.000000e+00> : vector<16x32xf32>
    %150 = tpu.matmul %140, %149, %cst_50 {dimension_numbers = #tpu.dot_dimension_numbers<[1], [0], [0], [1], [0, 0, 1, 1], [], []>} : vector<16x32xbf16>, vector<32x32xbf16>, vector<16x32xf32> -> vector<16x32xf32>
    %151 = vector.extract_strided_slice %5 {offsets = [13, 0], sizes = [1, 32], strides = [1, 1]} : vector<16x32xf32> to vector<1x32xf32>
    %152 = vector.broadcast %151 : vector<1x32xf32> to vector<16x32xf32>
    %153 = arith.addf %150, %152 : vector<16x32xf32>
    %c6 = arith.constant 6 : index
    %c0_51 = arith.constant 0 : index
    %c0_52 = arith.constant 0 : index
    %154 = vector.load %arg4[%c6, %c0_51, %c0_52] : memref<8x32x32xbf16, #tpu.memory_space<vmem>>, vector<1x32x32xbf16>
    %155 = vector.shape_cast %154 : vector<1x32x32xbf16> to vector<32x32xbf16>
    %cst_53 = arith.constant dense<0.000000e+00> : vector<16x32xf32>
    %156 = tpu.matmul %140, %155, %cst_53 {dimension_numbers = #tpu.dot_dimension_numbers<[1], [0], [0], [1], [0, 0, 1, 1], [], []>} : vector<16x32xbf16>, vector<32x32xbf16>, vector<16x32xf32> -> vector<16x32xf32>
    %157 = vector.extract_strided_slice %5 {offsets = [14, 0], sizes = [1, 32], strides = [1, 1]} : vector<16x32xf32> to vector<1x32xf32>
    %158 = vector.broadcast %157 : vector<1x32xf32> to vector<16x32xf32>
    %159 = arith.addf %156, %158 : vector<16x32xf32>
    %160 = vector.shape_cast %147 : vector<16x32xf32> to vector<2x8x4x8xf32>
    %161 = tpu.transpose %160, [0, 2, 1, 3] : vector<2x8x4x8xf32> -> vector<2x4x8x8xf32>
    %162 = vector.shape_cast %161 : vector<2x4x8x8xf32> to vector<8x8x8xf32>
    %163 = arith.truncf %162 : vector<8x8x8xf32> to vector<8x8x8xbf16>
    %164 = vector.shape_cast %153 : vector<16x32xf32> to vector<2x8x4x8xf32>
    %165 = tpu.transpose %164, [0, 2, 1, 3] : vector<2x8x4x8xf32> -> vector<2x4x8x8xf32>
    %166 = vector.shape_cast %165 : vector<2x4x8x8xf32> to vector<8x8x8xf32>
    %167 = arith.truncf %166 : vector<8x8x8xf32> to vector<8x8x8xbf16>
    %168 = vector.shape_cast %159 : vector<16x32xf32> to vector<2x8x4x8xf32>
    %169 = tpu.transpose %168, [0, 2, 1, 3] : vector<2x8x4x8xf32> -> vector<2x4x8x8xf32>
    %170 = vector.shape_cast %169 : vector<2x4x8x8xf32> to vector<8x8x8xf32>
    %171 = arith.truncf %170 : vector<8x8x8xf32> to vector<8x8x8xbf16>
    "tpu.trace_start"() <{level = 10 : i32, message = "gqd,gkd->gqk"}> : () -> ()
    %cst_54 = arith.constant dense<0.000000e+00> : vector<8x8x8xf32>
    %172 = tpu.matmul %163, %167, %cst_54 {dimension_numbers = #tpu.dot_dimension_numbers<[2], [2], [1], [1], [0, 0, 0, 1, 1, 1], [0], [0]>} : vector<8x8x8xbf16>, vector<8x8x8xbf16>, vector<8x8x8xf32> -> vector<8x8x8xf32>
    "tpu.trace_stop"() : () -> ()
    %173 = vector.shape_cast %4 : vector<8x8xf32> to vector<1x8x8xf32>
    %174 = vector.broadcast %173 : vector<1x8x8xf32> to vector<8x8x8xf32>
    %175 = arith.addf %172, %174 : vector<8x8x8xf32>
    %cst_55 = arith.constant dense<0xFF800000> : vector<8x8xf32>
    %176 = vector.multi_reduction <maximumf>, %175, %cst_55 [2] : vector<8x8x8xf32> to vector<8x8xf32>
    %177 = vector.shape_cast %176 : vector<8x8xf32> to vector<8x8x1xf32>
    %178 = vector.broadcast %177 : vector<8x8x1xf32> to vector<8x8x8xf32>
    %179 = arith.subf %175, %178 : vector<8x8x8xf32>
    %180 = math.exp %179 : vector<8x8x8xf32>
    %cst_56 = arith.constant dense<0.000000e+00> : vector<8x8xf32>
    %181 = vector.multi_reduction <add>, %180, %cst_56 [2] : vector<8x8x8xf32> to vector<8x8xf32>
    %182 = vector.shape_cast %181 : vector<8x8xf32> to vector<8x8x1xf32>
    %183 = tpu.reciprocal %182 {approx = true} : vector<8x8x1xf32> -> vector<8x8x1xf32>
    %184 = vector.broadcast %183 : vector<8x8x1xf32> to vector<8x8x8xf32>
    %185 = arith.mulf %180, %184 : vector<8x8x8xf32>
    %186 = arith.truncf %185 : vector<8x8x8xf32> to vector<8x8x8xbf16>
    "tpu.trace_start"() <{level = 10 : i32, message = "gqk,gkd->gqd"}> : () -> ()
    %cst_57 = arith.constant dense<0.000000e+00> : vector<8x8x8xf32>
    %187 = tpu.matmul %186, %171, %cst_57 {dimension_numbers = #tpu.dot_dimension_numbers<[2], [1], [1], [2], [0, 0, 0, 1, 1, 2], [0], [0]>} : vector<8x8x8xbf16>, vector<8x8x8xbf16>, vector<8x8x8xf32> -> vector<8x8x8xf32>
    "tpu.trace_stop"() : () -> ()
    %188 = vector.shape_cast %187 : vector<8x8x8xf32> to vector<2x4x8x8xf32>
    %189 = tpu.transpose %188, [0, 2, 1, 3] : vector<2x4x8x8xf32> -> vector<2x8x4x8xf32>
    %190 = vector.shape_cast %189 : vector<2x8x4x8xf32> to vector<16x32xf32>
    %191 = arith.truncf %190 : vector<16x32xf32> to vector<16x32xbf16>
    %c7 = arith.constant 7 : index
    %c0_58 = arith.constant 0 : index
    %c0_59 = arith.constant 0 : index
    %192 = vector.load %arg4[%c7, %c0_58, %c0_59] : memref<8x32x32xbf16, #tpu.memory_space<vmem>>, vector<1x32x32xbf16>
    %193 = vector.shape_cast %192 : vector<1x32x32xbf16> to vector<32x32xbf16>
    %cst_60 = arith.constant dense<0.000000e+00> : vector<16x32xf32>
    %194 = tpu.matmul %191, %193, %cst_60 {dimension_numbers = #tpu.dot_dimension_numbers<[1], [0], [0], [1], [0, 0, 1, 1], [], []>} : vector<16x32xbf16>, vector<32x32xbf16>, vector<16x32xf32> -> vector<16x32xf32>
    %195 = vector.extract_strided_slice %5 {offsets = [15, 0], sizes = [1, 32], strides = [1, 1]} : vector<16x32xf32> to vector<1x32xf32>
    %196 = vector.broadcast %195 : vector<1x32xf32> to vector<16x32xf32>
    %197 = arith.addf %194, %196 : vector<16x32xf32>
    %198 = arith.addf %197, %139 : vector<16x32xf32>
    %cst_61 = arith.constant dense<0.000000e+00> : vector<16xf32>
    %199 = vector.multi_reduction <add>, %198, %cst_61 [1] : vector<16x32xf32> to vector<16xf32>
    %200 = vector.shape_cast %199 : vector<16xf32> to vector<16x1xf32>
    %cst_62 = arith.constant 3.200000e+01 : f32
    %201 = vector.broadcast %cst_62 : f32 to vector<16x1xf32>
    %202 = arith.divf %200, %201 : vector<16x1xf32>
    %203 = vector.broadcast %202 : vector<16x1xf32> to vector<16x32xf32>
    %204 = arith.subf %198, %203 : vector<16x32xf32>
    %205 = arith.mulf %204, %204 : vector<16x32xf32>
    %cst_63 = arith.constant dense<0.000000e+00> : vector<16xf32>
    %206 = vector.multi_reduction <add>, %205, %cst_63 [1] : vector<16x32xf32> to vector<16xf32>
    %207 = vector.shape_cast %206 : vector<16xf32> to vector<16x1xf32>
    %cst_64 = arith.constant 3.200000e+01 : f32
    %208 = vector.broadcast %cst_64 : f32 to vector<16x1xf32>
    %209 = arith.divf %207, %208 : vector<16x1xf32>
    %210 = vector.broadcast %202 : vector<16x1xf32> to vector<16x32xf32>
    %211 = arith.subf %198, %210 : vector<16x32xf32>
    %cst_65 = arith.constant 9.99999974E-6 : f32
    %212 = vector.broadcast %cst_65 : f32 to vector<16x1xf32>
    %213 = arith.addf %209, %212 : vector<16x1xf32>
    %214 = math.rsqrt %213 : vector<16x1xf32>
    %215 = vector.broadcast %214 : vector<16x1xf32> to vector<16x32xf32>
    %216 = arith.mulf %211, %215 : vector<16x32xf32>
    %217 = vector.extract_strided_slice %5 {offsets = [6, 0], sizes = [1, 32], strides = [1, 1]} : vector<16x32xf32> to vector<1x32xf32>
    %218 = vector.broadcast %217 : vector<1x32xf32> to vector<16x32xf32>
    %219 = arith.mulf %216, %218 : vector<16x32xf32>
    %220 = vector.extract_strided_slice %5 {offsets = [7, 0], sizes = [1, 32], strides = [1, 1]} : vector<16x32xf32> to vector<1x32xf32>
    %221 = vector.broadcast %220 : vector<1x32xf32> to vector<16x32xf32>
    %222 = arith.addf %219, %221 : vector<16x32xf32>
    %223 = arith.truncf %222 : vector<16x32xf32> to vector<16x32xbf16>
    %c0_66 = arith.constant 0 : index
    %c0_67 = arith.constant 0 : index
    %224 = vector.load %arg5[%c0_66, %c0_67] : memref<32x32xbf16, #tpu.memory_space<vmem>>, vector<32x32xbf16>
    %cst_68 = arith.constant dense<0.000000e+00> : vector<16x32xf32>
    %225 = tpu.matmul %223, %224, %cst_68 {dimension_numbers = #tpu.dot_dimension_numbers<[1], [0], [0], [1], [0, 0, 1, 1], [], []>} : vector<16x32xbf16>, vector<32x32xbf16>, vector<16x32xf32> -> vector<16x32xf32>
    %c0_69 = arith.constant 0 : index
    %c0_70 = arith.constant 0 : index
    %226 = vector.load %arg8[%c0_69, %c0_70] : memref<1x32xf32, #tpu.memory_space<vmem>>, vector<1x32xf32>
    %227 = vector.broadcast %226 : vector<1x32xf32> to vector<16x32xf32>
    %228 = arith.addf %225, %227 : vector<16x32xf32>
    %cst_71 = arith.constant 0.000000e+00 : f32
    %229 = vector.broadcast %cst_71 : f32 to vector<16x32xf32>
    %230 = arith.maximumf %228, %229 : vector<16x32xf32>
    %231 = arith.truncf %230 : vector<16x32xf32> to vector<16x32xbf16>
    %c0_72 = arith.constant 0 : index
    %c0_73 = arith.constant 0 : index
    %232 = vector.load %arg6[%c0_72, %c0_73] : memref<32x32xbf16, #tpu.memory_space<vmem>>, vector<32x32xbf16>
    %cst_74 = arith.constant dense<0.000000e+00> : vector<16x32xf32>
    %233 = tpu.matmul %231, %232, %cst_74 {dimension_numbers = #tpu.dot_dimension_numbers<[1], [0], [0], [1], [0, 0, 1, 1], [], []>} : vector<16x32xbf16>, vector<32x32xbf16>, vector<16x32xf32> -> vector<16x32xf32>
    %234 = vector.shape_cast %233 : vector<16x32xf32> to vector<2x8x32xf32>
    %c0_75 = arith.constant 0 : index
    %c0_76 = arith.constant 0 : index
    %235 = vector.load %arg9[%c0_75, %c0_76] : memref<8x1xf32, #tpu.memory_space<vmem>>, vector<8x1xf32>
    %236 = vector.shape_cast %235 : vector<8x1xf32> to vector<1x8x1xf32>
    %237 = vector.broadcast %236 : vector<1x8x1xf32> to vector<2x8x32xf32>
    %238 = arith.mulf %234, %237 : vector<2x8x32xf32>
    %c0_77 = arith.constant 0 : index
    %c0_78 = arith.constant 0 : index
    %239 = vector.load %arg10[%c0_77, %c0_78] : memref<8x32xf32, #tpu.memory_space<vmem>>, vector<8x32xf32>
    %240 = vector.shape_cast %239 : vector<8x32xf32> to vector<1x8x32xf32>
    %241 = vector.broadcast %240 : vector<1x8x32xf32> to vector<2x8x32xf32>
    %242 = arith.addf %238, %241 : vector<2x8x32xf32>
    %243 = vector.shape_cast %222 : vector<16x32xf32> to vector<2x8x32xf32>
    %244 = arith.addf %242, %243 : vector<2x8x32xf32>
    %245 = vector.shape_cast %244 : vector<2x8x32xf32> to vector<2x1x256xf32>
    %c0_79 = arith.constant 0 : index
    %c0_80 = arith.constant 0 : index
    %c0_81 = arith.constant 0 : index
    %246 = vector.load %arg11[%c0_79, %c0_80, %c0_81] : memref<2x1x256xf32, #tpu.memory_space<vmem>>, vector<2x1x256xf32>
    tpu.vector_store %arg11[%c0_79, %c0_80, %c0_81], %245 {strides = array<i32>} : memref<2x1x256xf32, #tpu.memory_space<vmem>>, vector<2x1x256xf32>,
    return
  }
  func.func @transform_0(%arg0: i32) -> (i32, i32, i32) {
    %c0_i32 = arith.constant 0 : i32
    %c0_i32_0 = arith.constant 0 : i32
    %c0_i32_1 = arith.constant 0 : i32
    return %arg0, %c0_i32, %c0_i32_0 : i32, i32, i32
  }
  func.func @transform_1(%arg0: i32) -> (i32, i32, i32) {
    %c0_i32 = arith.constant 0 : i32
    %c0_i32_0 = arith.constant 0 : i32
    %c0_i32_1 = arith.constant 0 : i32
    return %arg0, %c0_i32, %c0_i32_0 : i32, i32, i32
  }
  func.func @transform_2(%arg0: i32) -> (i32, i32) {
    %c0_i32 = arith.constant 0 : i32
    %c0_i32_0 = arith.constant 0 : i32
    %c0_i32_1 = arith.constant 0 : i32
    return %c0_i32, %c0_i32_0 : i32, i32
  }
  func.func @transform_3(%arg0: i32) -> (i32, i32, i32) {
    %c0_i32 = arith.constant 0 : i32
    %c0_i32_0 = arith.constant 0 : i32
    %c0_i32_1 = arith.constant 0 : i32
    %c0_i32_2 = arith.constant 0 : i32
    return %c0_i32, %c0_i32_0, %c0_i32_1 : i32, i32, i32
  }
  func.func @transform_4(%arg0: i32) -> (i32, i32) {
    %c0_i32 = arith.constant 0 : i32
    %c0_i32_0 = arith.constant 0 : i32
    %c0_i32_1 = arith.constant 0 : i32
    return %c0_i32, %c0_i32_0 : i32, i32
  }
  func.func @transform_5(%arg0: i32) -> (i32, i32) {
    %c0_i32 = arith.constant 0 : i32
    %c0_i32_0 = arith.constant 0 : i32
    %c0_i32_1 = arith.constant 0 : i32
    return %c0_i32, %c0_i32_0 : i32, i32
  }
  func.func @transform_6(%arg0: i32) -> (i32, i32) {
    %c0_i32 = arith.constant 0 : i32
    %c0_i32_0 = arith.constant 0 : i32
    %c0_i32_1 = arith.constant 0 : i32
    return %c0_i32, %c0_i32_0 : i32, i32
  }
  func.func @transform_7(%arg0: i32) -> (i32, i32) {
    %c0_i32 = arith.constant 0 : i32
    %c0_i32_0 = arith.constant 0 : i32
    %c0_i32_1 = arith.constant 0 : i32
    return %c0_i32, %c0_i32_0 : i32, i32
  }
  func.func @transform_8(%arg0: i32) -> (i32, i32) {
    %c0_i32 = arith.constant 0 : i32
    %c0_i32_0 = arith.constant 0 : i32
    %c0_i32_1 = arith.constant 0 : i32
    return %c0_i32, %c0_i32_0 : i32, i32
  }
  func.func @transform_9(%arg0: i32) -> (i32, i32) {
    %c0_i32 = arith.constant 0 : i32
    %c0_i32_0 = arith.constant 0 : i32
    %c0_i32_1 = arith.constant 0 : i32
    return %c0_i32, %c0_i32_0 : i32, i32
  }
  func.func @transform_10(%arg0: i32) -> (i32, i32, i32) {
    %c0_i32 = arith.constant 0 : i32
    %c0_i32_0 = arith.constant 0 : i32
    %c0_i32_1 = arith.constant 0 : i32
    return %arg0, %c0_i32, %c0_i32_0 : i32, i32, i32
  }
  func.func @transform_11(%arg0: i32) -> (i32, i32, i32) {
    %c0_i32 = arith.constant 0 : i32
    %c0_i32_0 = arith.constant 0 : i32
    %c0_i32_1 = arith.constant 0 : i32
    return %arg0, %c0_i32, %c0_i32_0 : i32, i32, i32
  }
}

</mosaic_0001>

<llo_original>
// kernel: tpu_custom_call.1
$region0: #{tpu_custom_call.1}
  #allocation0 [shape = 'u32[]', space=smem, size = 0x4, offset = 0x4, fixed_abs, tag = 'smem constant byte address 0x4 - core index']
  #allocation1 [shape = 'u32[72,128]{1,0:T(1,128)}', space=vmem, size = 0x9000, scoped, tag = 'internal scratch']
  %s0 = inlined_call_operand.hbm [shape: f32[2,8,32], index: 0, kind: input, shape index: {}]
  %s1 = inlined_call_operand.hbm [shape: f32[2,8,32], index: 1, kind: input, shape index: {}]
  %s2 = inlined_call_operand.vmem [shape: f32[8,8], index: 2, kind: input, shape index: {}]
  %s3 = inlined_call_operand.hbm [shape: bf16[8,32,32], index: 3, kind: input, shape index: {}]
  %s4 = inlined_call_operand.hbm [shape: bf16[32,32], index: 4, kind: input, shape index: {}]
  %s5 = inlined_call_operand.hbm [shape: bf16[32,32], index: 5, kind: input, shape index: {}]
  %s6 = inlined_call_operand.hbm [shape: f32[16,32], index: 6, kind: input, shape index: {}]
  %s7 = inlined_call_operand.vmem [shape: f32[1,32], index: 7, kind: input, shape index: {}]
  %s8 = inlined_call_operand.vmem [shape: f32[8,1], index: 8, kind: input, shape index: {}]
  %s9 = inlined_call_operand.hbm [shape: f32[8,32], index: 9, kind: input, shape index: {}]
  %s10 = inlined_call_operand.hbm [shape: f32[2,1,256], index: 10, kind: output, shape index: {0}]
  %s11 = inlined_call_operand.hbm [shape: f32[2,8,8], index: 11, kind: output, shape index: {1}]
  %12 = xla_tuple %s10, %s11
  %s13 = sld [smem:[#allocation0]]
  $region86: #{tpu_custom_call.1} parent=0
    _
  %s15 = ssub.s32 1, %s13
  %s16 = scalar_select 0, %s15, %s13
  $region1: #{tpu_custom_call.1} parent=0
    #allocation2 [shape = 'u8[8192]{0}', space=vmem, size = 0x2000, scoped, tag = 'input window, operand 0, single buffered']
    #allocation3 [shape = 's32[1]{0}', space=sflag, size = 0x4, scoped, tag = 'scoped memory for tpu_custom_call.1']
    #allocation4 [shape = 's32[1]{0}', space=sflag, size = 0x4, scoped, tag = 'scoped memory for tpu_custom_call.1']
    #allocation5 [shape = 'u8[8192]{0}', space=vmem, size = 0x2000, scoped, tag = 'input window, operand 1, single buffered']
    #allocation6 [shape = 's32[1]{0}', space=sflag, size = 0x4, scoped, tag = 'scoped memory for tpu_custom_call.1']
    #allocation7 [shape = 'u8[65536]{0}', space=vmem, size = 0x10000, scoped, tag = 'input window, operand 3, single buffered']
    #allocation8 [shape = 'u8[8192]{0}', space=vmem, size = 0x2000, scoped, tag = 'input window, operand 4, single buffered']
    #allocation9 [shape = 's32[1]{0}', space=sflag, size = 0x4, scoped, tag = 'scoped memory for tpu_custom_call.1']
    #allocation10 [shape = 'u8[8192]{0}', space=vmem, size = 0x2000, scoped, tag = 'input window, operand 5, single buffered']
    #allocation11 [shape = 'u8[8192]{0}', space=vmem, size = 0x2000, scoped, tag = 'input window, operand 6, single buffered']
    #allocation12 [shape = 's32[1]{0}', space=sflag, size = 0x4, scoped, tag = 'scoped memory for tpu_custom_call.1']
    #allocation13 [shape = 'u8[4096]{0}', space=vmem, size = 0x1000, scoped, tag = 'input window, operand 9, single buffered']
    #allocation14 [shape = 'u8[2048]{0}', space=vmem, size = 0x800, scoped, tag = 'output window, operand 0, single buffered']
    #allocation15 [shape = 'u8[8192]{0}', space=vmem, size = 0x2000, scoped, tag = 'output window, operand 1, single buffered']
    #allocation16 [shape = 's32[1]{0}', space=sflag, size = 0x4, scoped, tag = 'scoped memory for tpu_custom_call.1']
    %17 = vsyncpa [#allocation3], 0
    %18 = vsyncpa [#allocation6], 0
    %19 = vsyncpa [#allocation9], 0
    %20 = vsyncpa [#allocation12], 0
    %21 = vsyncpa [#allocation4], 0
    %22 = vsyncpa [#allocation16], 0
    // Predicated region
    $region2: #{tpu_custom_call.1} parent=1 // pred_check
      _
    $region3: #{tpu_custom_call.1} parent=1 // pred_check_branch
      %24 = sbr.rel (0) target = $region5
    $region4: #{tpu_custom_call.1} parent=1 // pred_region
      %26 = vsyncadd [#allocation3], 0
      %s27 = sshll.u32 %s0, 4
      %s28 = int_to_ptr.hbm [resolvable:$true] %s27
      %s29 = sshll.u32 [#allocation2], 4
      %s30 = int_to_ptr.vmem [resolvable:$true] %s29
      %35 = dma.hbm_to_vmem [thread:$0]  %s28, 256, %s30, [#allocation3], 128, 128, 8
    $region5: #{tpu_custom_call.1} parent=1 // pred_fallthru
      _
    // Predicated region
    $region6: #{tpu_custom_call.1} parent=1 // pred_check
      _
    $region7: #{tpu_custom_call.1} parent=1 // pred_check_branch
      %37 = sbr.rel (0) target = $region9
    $region8: #{tpu_custom_call.1} parent=1 // pred_region
      %39 = vsyncadd [#allocation6], 0
      %s40 = sshll.u32 %s1, 4
      %s41 = int_to_ptr.hbm [resolvable:$true] %s40
      %s42 = sshll.u32 [#allocation5], 4
      %s43 = int_to_ptr.vmem [resolvable:$true] %s42
      %48 = dma.hbm_to_vmem [thread:$0]  %s41, 256, %s43, [#allocation6], 128, 128, 8
    $region9: #{tpu_custom_call.1} parent=1 // pred_fallthru
      _
    // Predicated region
    $region10: #{tpu_custom_call.1} parent=1 // pred_check
      _
    $region11: #{tpu_custom_call.1} parent=1 // pred_check_branch
      %50 = sbr.rel (0) target = $region13
    $region12: #{tpu_custom_call.1} parent=1 // pred_region
      _
    $region13: #{tpu_custom_call.1} parent=1 // pred_fallthru
      _
    // Predicated region
    $region14: #{tpu_custom_call.1} parent=1 // pred_check
      _
    $region15: #{tpu_custom_call.1} parent=1 // pred_check_branch
      %52 = sbr.rel (0) target = $region17
    $region16: #{tpu_custom_call.1} parent=1 // pred_region
      %54 = vsyncadd [#allocation6], 0
      %s55 = sshll.u32 %s3, 4
      %s56 = int_to_ptr.hbm [resolvable:$true] %s55
      %s57 = sshll.u32 [#allocation7], 4
      %s58 = int_to_ptr.vmem [resolvable:$true] %s57
      %63 = dma.hbm_to_vmem [thread:$0]  %s56, 2048, %s58, [#allocation6], 64, 64, 4
    $region17: #{tpu_custom_call.1} parent=1 // pred_fallthru
      _
    // Predicated region
    $region18: #{tpu_custom_call.1} parent=1 // pred_check
      _
    $region19: #{tpu_custom_call.1} parent=1 // pred_check_branch
      %65 = sbr.rel (0) target = $region21
    $region20: #{tpu_custom_call.1} parent=1 // pred_region
      %67 = vsyncadd [#allocation9], 0
      %s68 = sshll.u32 %s4, 4
      %s69 = int_to_ptr.hbm [resolvable:$true] %s68
      %s70 = sshll.u32 [#allocation8], 4
      %s71 = int_to_ptr.vmem [resolvable:$true] %s70
      %76 = dma.hbm_to_vmem [thread:$0]  %s69, 256, %s71, [#allocation9], 64, 64, 4
    $region21: #{tpu_custom_call.1} parent=1 // pred_fallthru
      _
    // Predicated region
    $region22: #{tpu_custom_call.1} parent=1 // pred_check
      _
    $region23: #{tpu_custom_call.1} parent=1 // pred_check_branch
      %78 = sbr.rel (0) target = $region25
    $region24: #{tpu_custom_call.1} parent=1 // pred_region
      %80 = vsyncadd [#allocation9], 0
      %s81 = sshll.u32 %s5, 4
      %s82 = int_to_ptr.hbm [resolvable:$true] %s81
      %s83 = sshll.u32 [#allocation10], 4
      %s84 = int_to_ptr.vmem [resolvable:$true] %s83
      %89 = dma.hbm_to_vmem [thread:$0]  %s82, 256, %s84, [#allocation9], 64, 64, 4
    $region25: #{tpu_custom_call.1} parent=1 // pred_fallthru
      _
    // Predicated region
    $region26: #{tpu_custom_call.1} parent=1 // pred_check
      _
    $region27: #{tpu_custom_call.1} parent=1 // pred_check_branch
      %91 = sbr.rel (0) target = $region29
    $region28: #{tpu_custom_call.1} parent=1 // pred_region
      %93 = vsyncadd [#allocation12], 0
      %s94 = sshll.u32 %s6, 4
      %s95 = int_to_ptr.hbm [resolvable:$true] %s94
      %s96 = sshll.u32 [#allocation11], 4
      %s97 = int_to_ptr.vmem [resolvable:$true] %s96
      %102 = dma.hbm_to_vmem [thread:$0]  %s95, 256, %s97, [#allocation12], 128, 128, 8
    $region29: #{tpu_custom_call.1} parent=1 // pred_fallthru
      _
    // Predicated region
    $region30: #{tpu_custom_call.1} parent=1 // pred_check
      _
    $region31: #{tpu_custom_call.1} parent=1 // pred_check_branch
      %104 = sbr.rel (0) target = $region33
    $region32: #{tpu_custom_call.1} parent=1 // pred_region
      _
    $region33: #{tpu_custom_call.1} parent=1 // pred_fallthru
      _
    // Predicated region
    $region34: #{tpu_custom_call.1} parent=1 // pred_check
      _
    $region35: #{tpu_custom_call.1} parent=1 // pred_check_branch
      %106 = sbr.rel (0) target = $region37
    $region36: #{tpu_custom_call.1} parent=1 // pred_region
      _
    $region37: #{tpu_custom_call.1} parent=1 // pred_fallthru
      _
    // Predicated region
    $region38: #{tpu_custom_call.1} parent=1 // pred_check
      _
    $region39: #{tpu_custom_call.1} parent=1 // pred_check_branch
      %108 = sbr.rel (0) target = $region41
    $region40: #{tpu_custom_call.1} parent=1 // pred_region
      %110 = vsyncadd [#allocation12], 0
      %s112 = sshll.u32 %s9, 4
      %s113 = int_to_ptr.hbm [resolvable:$true] %s112
      %s114 = sshll.u32 [#allocation13], 4
      %s115 = int_to_ptr.vmem [resolvable:$true] %s114
      %117 = dma.hbm_to_vmem [thread:$0]  %s113, 128, %s115, [#allocation12]
    $region41: #{tpu_custom_call.1} parent=1 // pred_fallthru
      _
    // Predicated region
    $region42: #{tpu_custom_call.1} parent=1 // pred_check
      _
    $region43: #{tpu_custom_call.1} parent=1 // pred_check_branch
      %119 = sbr.rel (0) target = $region45
    $region44: #{tpu_custom_call.1} parent=1 // pred_region
      %121 = dma.done [#allocation3], 256
    $region45: #{tpu_custom_call.1} parent=1 // pred_fallthru
      _
    // Predicated region
    $region46: #{tpu_custom_call.1} parent=1 // pred_check
      _
    $region47: #{tpu_custom_call.1} parent=1 // pred_check_branch
      %123 = sbr.rel (0) target = $region49
    $region48: #{tpu_custom_call.1} parent=1 // pred_region
      %125 = dma.done [#allocation6], 256
    $region49: #{tpu_custom_call.1} parent=1 // pred_fallthru
      _
    // Predicated region
    $region50: #{tpu_custom_call.1} parent=1 // pred_check
      _
    $region51: #{tpu_custom_call.1} parent=1 // pred_check_branch
      %127 = sbr.rel (0) target = $region53
    $region52: #{tpu_custom_call.1} parent=1 // pred_region
      %129 = dma.done [#allocation6], 2048
    $region53: #{tpu_custom_call.1} parent=1 // pred_fallthru
      _
    // Predicated region
    $region54: #{tpu_custom_call.1} parent=1 // pred_check
      _
    $region55: #{tpu_custom_call.1} parent=1 // pred_check_branch
      %131 = sbr.rel (0) target = $region57
    $region56: #{tpu_custom_call.1} parent=1 // pred_region
      %133 = dma.done [#allocation9], 256
    $region57: #{tpu_custom_call.1} parent=1 // pred_fallthru
      _
    // Predicated region
    $region58: #{tpu_custom_call.1} parent=1 // pred_check
      _
    $region59: #{tpu_custom_call.1} parent=1 // pred_check_branch
      %135 = sbr.rel (0) target = $region61
    $region60: #{tpu_custom_call.1} parent=1 // pred_region
      %137 = dma.done [#allocation9], 256
    $region61: #{tpu_custom_call.1} parent=1 // pred_fallthru
      _
    // Predicated region
    $region62: #{tpu_custom_call.1} parent=1 // pred_check
      _
    $region63: #{tpu_custom_call.1} parent=1 // pred_check_branch
      %139 = sbr.rel (0) target = $region65
    $region64: #{tpu_custom_call.1} parent=1 // pred_region
      %141 = dma.done [#allocation12], 256
    $region65: #{tpu_custom_call.1} parent=1 // pred_fallthru
      _
    // Predicated region
    $region66: #{tpu_custom_call.1} parent=1 // pred_check
      _
    $region67: #{tpu_custom_call.1} parent=1 // pred_check_branch
      %143 = sbr.rel (0) target = $region69
    $region68: #{tpu_custom_call.1} parent=1 // pred_region
      %145 = dma.done [#allocation12], 128
    $region69: #{tpu_custom_call.1} parent=1 // pred_fallthru
      _
    %v147 = vld [vmem:[#allocation2] sm:$0xff]
    %v148 = vld [vmem:[#allocation2 + $0x8] sm:$0xff]
    %v149 = vld [vmem:[#allocation5] sm:$0xff]
    %v150 = vld [vmem:[#allocation5 + $0x8] sm:$0xff]
    %v151 = vld [vmem:[%s2] sm:$0xff]
    %v152 = vld [vmem:[#allocation11] sm:$0xff]
    %v153 = vld [vmem:[#allocation11 + $0x8] sm:$0xff]
    %vm154 = vcmask 261120
    %v155 = vsel %vm154, %v147, 0.0
    %156 = vadd.xlane.f32.xlu0 %v155
    %v157 = vpop.xlane.xlu0 %156
    %v158 = vsel %vm154, %v148, 0.0
    %159 = vadd.xlane.f32.xlu0 %v158
    %v160 = vpop.xlane.xlu0 %159
    %v161 = vrcp.pop 32.0
    %v162 = vmul.f32 32.0, %v161
    %v163 = vsub.f32 1.0, %v162
    %v164 = vmul.f32 %v161, %v163
    %v165 = vadd.f32 %v161, %v164
    %vm166 = vweird.f32 %v161
    %v167 = vsel %vm166, %v161, %v165
    %v168 = vmul.f32 %v157, %v167
    %v169 = vmul.f32 %v160, %v167
    %v170 = vsub.f32 %v147, %v168
    %v171 = vsub.f32 %v148, %v169
    %v172 = vmul.f32 %v170, %v170
    %v173 = vmul.f32 %v171, %v171
    %v174 = vsel %vm154, %v172, 0.0
    %175 = vadd.xlane.f32.xlu0 %v174
    %v176 = vpop.xlane.xlu0 %175
    %v177 = vsel %vm154, %v173, 0.0
    %178 = vadd.xlane.f32.xlu0 %v177
    %v179 = vpop.xlane.xlu0 %178
    %v180 = vmul.f32 %v176, %v167
    %v181 = vmul.f32 %v179, %v167
    %v182 = vadd.f32 %v180, 1e-05
    %v183 = vadd.f32 %v181, 1e-05
    %v184 = vrsqrt.pop %v182
    %v185 = vmul.f32 %v184, %v182
    %v186 = vmul.f32 %v185, %v184
    %v187 = vmul.f32 0.5, %v186
    %v188 = vsub.f32 1.5, %v187
    %v189 = vmul.f32 %v184, %v188
    %vm190 = vweird.f32 %v182
    %vm191 = vweird.f32 %v184
    %vm192 = vmor %vm190, %vm191
    %v193 = vsel %vm192, %v184, %v189
    %v194 = vrsqrt.pop %v183
    %v195 = vmul.f32 %v194, %v183
    %v196 = vmul.f32 %v195, %v194
    %v197 = vmul.f32 0.5, %v196
    %v198 = vsub.f32 1.5, %v197
    %v199 = vmul.f32 %v194, %v198
    %vm200 = vweird.f32 %v183
    %vm201 = vweird.f32 %v194
    %vm202 = vmor %vm200, %vm201
    %v203 = vsel %vm202, %v194, %v199
    %v204 = vmul.f32 %v170, %v193
    %v205 = vmul.f32 %v171, %v203
    %v206 = vperm.slane %v152, 0
    %v207 = vmul.f32 %v204, %v206
    %v208 = vmul.f32 %v205, %v206
    %v209 = vperm.slane %v152, 1
    %v210 = vadd.f32 %v207, %v209
    %v211 = vadd.f32 %v208, %v209
    %v212 = vpack.c.bf16 %v211, %v210
    %v213 = vld [vmem:[#allocation7] sm:$0xf]
    %v214 = vld [vmem:[#allocation7 + $0x4] sm:$0xf]
    %v215 = vld [vmem:[#allocation7 + $0x8] sm:$0xf]
    %v216 = vld [vmem:[#allocation7 + $0xc] sm:$0xf]
    %v217 = vperm.slane %v153, 0
    %v222 = vunpack.c.l.b16 %v213
    %v223 = vunpack.c.l.b16 %v214
    %v224 = vunpack.c.l.b16 %v215
    %v225 = vunpack.c.l.b16 %v216
    %v226 = vpack.c.b16 %v223, %v222
    %v227 = vpack.c.b16 %v225, %v224
    %v231 = vsel %vm154, %v212, 0
    %233 = vmatpush.bf16.msra.mxu0 0
    %234 = vmatpush.bf16.msra.mxu0 0
    %235 = vmatpush.bf16.msra.mxu0 0
    %236 = vmatpush.bf16.msra.mxu0 0
    %237 = vmatpush.bf16.msra.mxu0 0
    %238 = vmatpush.bf16.msra.mxu0 0
    %239 = vmatpush.bf16.msra.mxu0 %v227
    %240 = vmatpush.bf16.msra.mxu0 %v226
    %241 = vmatmul.bf16.gmra.mxu0 %v231
    %v242 = vpop.f32.mrf.mxu0
    %v243 = vadd.f32 %v217, %v242
    %v244 = vpop.f32.mrf.mxu0
    %v245 = vadd.f32 %v217, %v244
    %246 = vdwg.mxu0
    %s247 = scalar_lea.vmem [#allocation7], 16
    %v248 = vld [vmem:[%s247] sm:$0xf]
    %v249 = vld [vmem:[%s247 + $0x4] sm:$0xf]
    %v250 = vld [vmem:[%s247 + $0x8] sm:$0xf]
    %v251 = vld [vmem:[%s247 + $0xc] sm:$0xf]
    %v252 = vperm.slane %v153, 1
    %v257 = vunpack.c.l.b16 %v248
    %v258 = vunpack.c.l.b16 %v249
    %v259 = vunpack.c.l.b16 %v250
    %v260 = vunpack.c.l.b16 %v251
    %v261 = vpack.c.b16 %v258, %v257
    %v262 = vpack.c.b16 %v260, %v259
    %265 = vmatpush.bf16.msra.mxu0 0
    %266 = vmatpush.bf16.msra.mxu0 0
    %267 = vmatpush.bf16.msra.mxu0 0
    %268 = vmatpush.bf16.msra.mxu0 0
    %269 = vmatpush.bf16.msra.mxu0 0
    %270 = vmatpush.bf16.msra.mxu0 0
    %271 = vmatpush.bf16.msra.mxu0 %v262
    %272 = vmatpush.bf16.msra.mxu0 %v261
    %273 = vmatmul.bf16.gmra.mxu0 %v231
    %v274 = vpop.f32.mrf.mxu0
    %v275 = vadd.f32 %v252, %v274
    %v276 = vpop.f32.mrf.mxu0
    %v277 = vadd.f32 %v252, %v276
    %278 = vdwg.mxu0
    %s279 = scalar_lea.vmem [#allocation7], 32
    %v280 = vld [vmem:[%s279] sm:$0xf]
    %v281 = vld [vmem:[%s279 + $0x4] sm:$0xf]
    %v282 = vld [vmem:[%s279 + $0x8] sm:$0xf]
    %v283 = vld [vmem:[%s279 + $0xc] sm:$0xf]
    %v284 = vperm.slane %v153, 2
    %v289 = vunpack.c.l.b16 %v280
    %v290 = vunpack.c.l.b16 %v281
    %v291 = vunpack.c.l.b16 %v282
    %v292 = vunpack.c.l.b16 %v283
    %v293 = vpack.c.b16 %v290, %v289
    %v294 = vpack.c.b16 %v292, %v291
    %297 = vmatpush.bf16.msra.mxu0 0
    %298 = vmatpush.bf16.msra.mxu0 0
    %299 = vmatpush.bf16.msra.mxu0 0
    %300 = vmatpush.bf16.msra.mxu0 0
    %301 = vmatpush.bf16.msra.mxu0 0
    %302 = vmatpush.bf16.msra.mxu0 0
    %303 = vmatpush.bf16.msra.mxu0 %v294
    %304 = vmatpush.bf16.msra.mxu0 %v293
    %305 = vmatmul.bf16.gmra.mxu0 %v231
    %v306 = vpop.f32.mrf.mxu0
    %v307 = vadd.f32 %v284, %v306
    %v308 = vpop.f32.mrf.mxu0
    %v309 = vadd.f32 %v284, %v308
    %310 = vdwg.mxu0
    %313 = vrot.lane.b32.xlu0 %v243, 120
    %v314 = vpop.permute.xlu0 %313
    %315 = vrot.lane.b32.xlu0 %v245, 120
    %v316 = vpop.permute.xlu0 %315
    %319 = vrot.lane.b32.xlu0 %v243, 112
    %v320 = vpop.permute.xlu0 %319
    %321 = vrot.lane.b32.xlu0 %v245, 112
    %v322 = vpop.permute.xlu0 %321
    %325 = vrot.lane.b32.xlu0 %v243, 104
    %v326 = vpop.permute.xlu0 %325
    %327 = vrot.lane.b32.xlu0 %v245, 104
    %v328 = vpop.permute.xlu0 %327
    %v331 = vrot.slane %v320, 4
    %vm332 = vcmask 1047556
    %v333 = vsel %vm332, %v331, %v243
    %v334 = vrot.slane %v243, 4
    %v335 = vsel %vm332, %v320, %v334
    %v337 = vunpack.c.l.s4 1983009808
    %v338 = vunpack.c.0.s8 %v337
    %v339 = vperm.slane %v333, %v338
    %v341 = vunpack.c.l.s4 1983009808
    %v342 = vunpack.c.0.s8 %v341
    %v343 = vperm.slane %v335, %v342
    %v344 = vrot.slane %v326, 4
    %v345 = vsel %vm332, %v344, %v314
    %v346 = vrot.slane %v314, 4
    %v347 = vsel %vm332, %v326, %v346
    %v349 = vunpack.c.l.s4 1983009808
    %v350 = vunpack.c.0.s8 %v349
    %v351 = vperm.slane %v345, %v350
    %v353 = vunpack.c.l.s4 1983009808
    %v354 = vunpack.c.0.s8 %v353
    %v355 = vperm.slane %v347, %v354
    %v356 = vrot.slane %v351, 4
    %v357 = vsel %vm332, %v356, %v339
    %v358 = vrot.slane %v339, 4
    %v359 = vsel %vm332, %v351, %v358
    %v361 = vunpack.c.l.s4 1934713408
    %v362 = vunpack.c.0.s8 %v361
    %v363 = vperm.slane %v357, %v362
    %v365 = vunpack.c.l.s4 1934713408
    %v366 = vunpack.c.0.s8 %v365
    %v367 = vperm.slane %v359, %v366
    %v368 = vrot.slane %v355, 4
    %v369 = vsel %vm332, %v368, %v343
    %v370 = vrot.slane %v343, 4
    %v371 = vsel %vm332, %v355, %v370
    %v373 = vunpack.c.l.s4 1934713408
    %v374 = vunpack.c.0.s8 %v373
    %v375 = vperm.slane %v369, %v374
    %v377 = vunpack.c.l.s4 1934713408
    %v378 = vunpack.c.0.s8 %v377
    %v379 = vperm.slane %v371, %v378
    %v380 = vrot.slane %v363, 4
    %v381 = vsel %vm332, 0.0, %v380
    %v382 = vrot.slane %v367, 4
    %v383 = vsel %vm332, 0.0, %v382
    %v384 = vrot.slane %v375, 4
    %v385 = vsel %vm332, 0.0, %v384
    %v386 = vrot.slane %v379, 4
    %v387 = vsel %vm332, 0.0, %v386
    %v388 = vrot.slane %v322, 4
    %v389 = vsel %vm332, %v388, %v245
    %v390 = vrot.slane %v245, 4
    %v391 = vsel %vm332, %v322, %v390
    %v393 = vunpack.c.l.s4 1983009808
    %v394 = vunpack.c.0.s8 %v393
    %v395 = vperm.slane %v389, %v394
    %v397 = vunpack.c.l.s4 1983009808
    %v398 = vunpack.c.0.s8 %v397
    %v399 = vperm.slane %v391, %v398
    %v400 = vrot.slane %v328, 4
    %v401 = vsel %vm332, %v400, %v316
    %v402 = vrot.slane %v316, 4
    %v403 = vsel %vm332, %v328, %v402
    %v405 = vunpack.c.l.s4 1983009808
    %v406 = vunpack.c.0.s8 %v405
    %v407 = vperm.slane %v401, %v406
    %v409 = vunpack.c.l.s4 1983009808
    %v410 = vunpack.c.0.s8 %v409
    %v411 = vperm.slane %v403, %v410
    %v412 = vrot.slane %v407, 4
    %v413 = vsel %vm332, %v412, %v395
    %v414 = vrot.slane %v395, 4
    %v415 = vsel %vm332, %v407, %v414
    %v417 = vunpack.c.l.s4 1934713408
    %v418 = vunpack.c.0.s8 %v417
    %v419 = vperm.slane %v413, %v418
    %v421 = vunpack.c.l.s4 1934713408
    %v422 = vunpack.c.0.s8 %v421
    %v423 = vperm.slane %v415, %v422
    %v424 = vrot.slane %v411, 4
    %v425 = vsel %vm332, %v424, %v399
    %v426 = vrot.slane %v399, 4
    %v427 = vsel %vm332, %v411, %v426
    %v429 = vunpack.c.l.s4 1934713408
    %v430 = vunpack.c.0.s8 %v429
    %v431 = vperm.slane %v425, %v430
    %v433 = vunpack.c.l.s4 1934713408
    %v434 = vunpack.c.0.s8 %v433
    %v435 = vperm.slane %v427, %v434
    %v436 = vrot.slane %v419, 4
    %v437 = vsel %vm332, 0.0, %v436
    %v438 = vrot.slane %v423, 4
    %v439 = vsel %vm332, 0.0, %v438
    %v440 = vrot.slane %v431, 4
    %v441 = vsel %vm332, 0.0, %v440
    %v442 = vrot.slane %v435, 4
    %v443 = vsel %vm332, 0.0, %v442
    %v444 = vsel %vm332, %v382, %v363
    %v446 = vunpack.c.l.s4 1983009808
    %v447 = vunpack.c.0.s8 %v446
    %v448 = vperm.slane %v444, %v447
    %v449 = vrot.slane %v383, 4
    %v450 = vsel %vm332, %v449, %v381
    %v452 = vunpack.c.l.s4 1983009808
    %v453 = vunpack.c.0.s8 %v452
    %v454 = vperm.slane %v450, %v453
    %v455 = vsel %vm332, %v386, %v375
    %v457 = vunpack.c.l.s4 1983009808
    %v458 = vunpack.c.0.s8 %v457
    %v459 = vperm.slane %v455, %v458
    %v460 = vrot.slane %v387, 4
    %v461 = vsel %vm332, %v460, %v385
    %v463 = vunpack.c.l.s4 1983009808
    %v464 = vunpack.c.0.s8 %v463
    %v465 = vperm.slane %v461, %v464
    %v466 = vrot.slane %v454, 4
    %v467 = vsel %vm332, %v466, %v448
    %v468 = vrot.slane %v448, 4
    %v469 = vsel %vm332, %v454, %v468
    %v471 = vunpack.c.l.s4 1934713408
    %v472 = vunpack.c.0.s8 %v471
    %v473 = vperm.slane %v467, %v472
    %v475 = vunpack.c.l.s4 1934713408
    %v476 = vunpack.c.0.s8 %v475
    %v477 = vperm.slane %v469, %v476
    %v478 = vrot.slane %v465, 4
    %v479 = vsel %vm332, %v478, %v459
    %v480 = vrot.slane %v459, 4
    %v481 = vsel %vm332, %v465, %v480
    %v483 = vunpack.c.l.s4 1934713408
    %v484 = vunpack.c.0.s8 %v483
    %v485 = vperm.slane %v479, %v484
    %v487 = vunpack.c.l.s4 1934713408
    %v488 = vunpack.c.0.s8 %v487
    %v489 = vperm.slane %v481, %v488
    %v490 = vrot.slane %v485, 4
    %v491 = vsel %vm332, %v490, %v473
    %v492 = vrot.slane %v473, 4
    %v493 = vsel %vm332, %v485, %v492
    %v494 = vrot.slane %v489, 4
    %v495 = vsel %vm332, %v494, %v477
    %v496 = vrot.slane %v477, 4
    %v497 = vsel %vm332, %v489, %v496
    %v498 = vsel %vm332, %v438, %v419
    %v500 = vunpack.c.l.s4 1983009808
    %v501 = vunpack.c.0.s8 %v500
    %v502 = vperm.slane %v498, %v501
    %v503 = vrot.slane %v439, 4
    %v504 = vsel %vm332, %v503, %v437
    %v506 = vunpack.c.l.s4 1983009808
    %v507 = vunpack.c.0.s8 %v506
    %v508 = vperm.slane %v504, %v507
    %v509 = vsel %vm332, %v442, %v431
    %v511 = vunpack.c.l.s4 1983009808
    %v512 = vunpack.c.0.s8 %v511
    %v513 = vperm.slane %v509, %v512
    %v514 = vrot.slane %v443, 4
    %v515 = vsel %vm332, %v514, %v441
    %v517 = vunpack.c.l.s4 1983009808
    %v518 = vunpack.c.0.s8 %v517
    %v519 = vperm.slane %v515, %v518
    %v520 = vrot.slane %v508, 4
    %v521 = vsel %vm332, %v520, %v502
    %v522 = vrot.slane %v502, 4
    %v523 = vsel %vm332, %v508, %v522
    %v525 = vunpack.c.l.s4 1934713408
    %v526 = vunpack.c.0.s8 %v525
    %v527 = vperm.slane %v521, %v526
    %v529 = vunpack.c.l.s4 1934713408
    %v530 = vunpack.c.0.s8 %v529
    %v531 = vperm.slane %v523, %v530
    %v532 = vrot.slane %v519, 4
    %v533 = vsel %vm332, %v532, %v513
    %v534 = vrot.slane %v513, 4
    %v535 = vsel %vm332, %v519, %v534
    %v537 = vunpack.c.l.s4 1934713408
    %v538 = vunpack.c.0.s8 %v537
    %v539 = vperm.slane %v533, %v538
    %v541 = vunpack.c.l.s4 1934713408
    %v542 = vunpack.c.0.s8 %v541
    %v543 = vperm.slane %v535, %v542
    %v544 = vrot.slane %v539, 4
    %v545 = vsel %vm332, %v544, %v527
    %v546 = vrot.slane %v527, 4
    %v547 = vsel %vm332, %v539, %v546
    %v548 = vrot.slane %v543, 4
    %v549 = vsel %vm332, %v548, %v531
    %v550 = vrot.slane %v531, 4
    %v551 = vsel %vm332, %v543, %v550
    %v552 = vpack.c.bf16 %v491, %v491
    %v553 = vpack.c.bf16 %v493, %v493
    %v554 = vpack.c.bf16 %v495, %v495
    %v555 = vpack.c.bf16 %v497, %v497
    %v556 = vpack.c.bf16 %v545, %v545
    %v557 = vpack.c.bf16 %v547, %v547
    %v558 = vpack.c.bf16 %v549, %v549
    %v559 = vpack.c.bf16 %v551, %v551
    %562 = vrot.lane.b32.xlu0 %v275, 120
    %v563 = vpop.permute.xlu0 %562
    %564 = vrot.lane.b32.xlu0 %v277, 120
    %v565 = vpop.permute.xlu0 %564
    %568 = vrot.lane.b32.xlu0 %v275, 112
    %v569 = vpop.permute.xlu0 %568
    %570 = vrot.lane.b32.xlu0 %v277, 112
    %v571 = vpop.permute.xlu0 %570
    %574 = vrot.lane.b32.xlu0 %v275, 104
    %v575 = vpop.permute.xlu0 %574
    %576 = vrot.lane.b32.xlu0 %v277, 104
    %v577 = vpop.permute.xlu0 %576
    %v580 = vrot.slane %v569, 4
    %v581 = vsel %vm332, %v580, %v275
    %v582 = vrot.slane %v275, 4
    %v583 = vsel %vm332, %v569, %v582
    %v585 = vunpack.c.l.s4 1983009808
    %v586 = vunpack.c.0.s8 %v585
    %v587 = vperm.slane %v581, %v586
    %v589 = vunpack.c.l.s4 1983009808
    %v590 = vunpack.c.0.s8 %v589
    %v591 = vperm.slane %v583, %v590
    %v592 = vrot.slane %v575, 4
    %v593 = vsel %vm332, %v592, %v563
    %v594 = vrot.slane %v563, 4
    %v595 = vsel %vm332, %v575, %v594
    %v597 = vunpack.c.l.s4 1983009808
    %v598 = vunpack.c.0.s8 %v597
    %v599 = vperm.slane %v593, %v598
    %v601 = vunpack.c.l.s4 1983009808
    %v602 = vunpack.c.0.s8 %v601
    %v603 = vperm.slane %v595, %v602
    %v604 = vrot.slane %v599, 4
    %v605 = vsel %vm332, %v604, %v587
    %v606 = vrot.slane %v587, 4
    %v607 = vsel %vm332, %v599, %v606
    %v609 = vunpack.c.l.s4 1934713408
    %v610 = vunpack.c.0.s8 %v609
    %v611 = vperm.slane %v605, %v610
    %v613 = vunpack.c.l.s4 1934713408
    %v614 = vunpack.c.0.s8 %v613
    %v615 = vperm.slane %v607, %v614
    %v616 = vrot.slane %v603, 4
    %v617 = vsel %vm332, %v616, %v591
    %v618 = vrot.slane %v591, 4
    %v619 = vsel %vm332, %v603, %v618
    %v621 = vunpack.c.l.s4 1934713408
    %v622 = vunpack.c.0.s8 %v621
    %v623 = vperm.slane %v617, %v622
    %v625 = vunpack.c.l.s4 1934713408
    %v626 = vunpack.c.0.s8 %v625
    %v627 = vperm.slane %v619, %v626
    %v628 = vrot.slane %v611, 4
    %v629 = vsel %vm332, 0.0, %v628
    %v630 = vrot.slane %v615, 4
    %v631 = vsel %vm332, 0.0, %v630
    %v632 = vrot.slane %v623, 4
    %v633 = vsel %vm332, 0.0, %v632
    %v634 = vrot.slane %v627, 4
    %v635 = vsel %vm332, 0.0, %v634
    %v636 = vrot.slane %v571, 4
    %v637 = vsel %vm332, %v636, %v277
    %v638 = vrot.slane %v277, 4
    %v639 = vsel %vm332, %v571, %v638
    %v641 = vunpack.c.l.s4 1983009808
    %v642 = vunpack.c.0.s8 %v641
    %v643 = vperm.slane %v637, %v642
    %v645 = vunpack.c.l.s4 1983009808
    %v646 = vunpack.c.0.s8 %v645
    %v647 = vperm.slane %v639, %v646
    %v648 = vrot.slane %v577, 4
    %v649 = vsel %vm332, %v648, %v565
    %v650 = vrot.slane %v565, 4
    %v651 = vsel %vm332, %v577, %v650
    %v653 = vunpack.c.l.s4 1983009808
    %v654 = vunpack.c.0.s8 %v653
    %v655 = vperm.slane %v649, %v654
    %v657 = vunpack.c.l.s4 1983009808
    %v658 = vunpack.c.0.s8 %v657
    %v659 = vperm.slane %v651, %v658
    %v660 = vrot.slane %v655, 4
    %v661 = vsel %vm332, %v660, %v643
    %v662 = vrot.slane %v643, 4
    %v663 = vsel %vm332, %v655, %v662
    %v665 = vunpack.c.l.s4 1934713408
    %v666 = vunpack.c.0.s8 %v665
    %v667 = vperm.slane %v661, %v666
    %v669 = vunpack.c.l.s4 1934713408
    %v670 = vunpack.c.0.s8 %v669
    %v671 = vperm.slane %v663, %v670
    %v672 = vrot.slane %v659, 4
    %v673 = vsel %vm332, %v672, %v647
    %v674 = vrot.slane %v647, 4
    %v675 = vsel %vm332, %v659, %v674
    %v677 = vunpack.c.l.s4 1934713408
    %v678 = vunpack.c.0.s8 %v677
    %v679 = vperm.slane %v673, %v678
    %v681 = vunpack.c.l.s4 1934713408
    %v682 = vunpack.c.0.s8 %v681
    %v683 = vperm.slane %v675, %v682
    %v684 = vrot.slane %v667, 4
    %v685 = vsel %vm332, 0.0, %v684
    %v686 = vrot.slane %v671, 4
    %v687 = vsel %vm332, 0.0, %v686
    %v688 = vrot.slane %v679, 4
    %v689 = vsel %vm332, 0.0, %v688
    %v690 = vrot.slane %v683, 4
    %v691 = vsel %vm332, 0.0, %v690
    %v692 = vsel %vm332, %v630, %v611
    %v694 = vunpack.c.l.s4 1983009808
    %v695 = vunpack.c.0.s8 %v694
    %v696 = vperm.slane %v692, %v695
    %v697 = vrot.slane %v631, 4
    %v698 = vsel %vm332, %v697, %v629
    %v700 = vunpack.c.l.s4 1983009808
    %v701 = vunpack.c.0.s8 %v700
    %v702 = vperm.slane %v698, %v701
    %v703 = vsel %vm332, %v634, %v623
    %v705 = vunpack.c.l.s4 1983009808
    %v706 = vunpack.c.0.s8 %v705
    %v707 = vperm.slane %v703, %v706
    %v708 = vrot.slane %v635, 4
    %v709 = vsel %vm332, %v708, %v633
    %v711 = vunpack.c.l.s4 1983009808
    %v712 = vunpack.c.0.s8 %v711
    %v713 = vperm.slane %v709, %v712
    %v714 = vrot.slane %v702, 4
    %v715 = vsel %vm332, %v714, %v696
    %v716 = vrot.slane %v696, 4
    %v717 = vsel %vm332, %v702, %v716
    %v719 = vunpack.c.l.s4 1934713408
    %v720 = vunpack.c.0.s8 %v719
    %v721 = vperm.slane %v715, %v720
    %v723 = vunpack.c.l.s4 1934713408
    %v724 = vunpack.c.0.s8 %v723
    %v725 = vperm.slane %v717, %v724
    %v726 = vrot.slane %v713, 4
    %v727 = vsel %vm332, %v726, %v707
    %v728 = vrot.slane %v707, 4
    %v729 = vsel %vm332, %v713, %v728
    %v731 = vunpack.c.l.s4 1934713408
    %v732 = vunpack.c.0.s8 %v731
    %v733 = vperm.slane %v727, %v732
    %v735 = vunpack.c.l.s4 1934713408
    %v736 = vunpack.c.0.s8 %v735
    %v737 = vperm.slane %v729, %v736
    %v738 = vrot.slane %v733, 4
    %v739 = vsel %vm332, %v738, %v721
    %v740 = vrot.slane %v721, 4
    %v741 = vsel %vm332, %v733, %v740
    %v742 = vrot.slane %v737, 4
    %v743 = vsel %vm332, %v742, %v725
    %v744 = vrot.slane %v725, 4
    %v745 = vsel %vm332, %v737, %v744
    %v746 = vsel %vm332, %v686, %v667
    %v748 = vunpack.c.l.s4 1983009808
    %v749 = vunpack.c.0.s8 %v748
    %v750 = vperm.slane %v746, %v749
    %v751 = vrot.slane %v687, 4
    %v752 = vsel %vm332, %v751, %v685
    %v754 = vunpack.c.l.s4 1983009808
    %v755 = vunpack.c.0.s8 %v754
    %v756 = vperm.slane %v752, %v755
    %v757 = vsel %vm332, %v690, %v679
    %v759 = vunpack.c.l.s4 1983009808
    %v760 = vunpack.c.0.s8 %v759
    %v761 = vperm.slane %v757, %v760
    %v762 = vrot.slane %v691, 4
    %v763 = vsel %vm332, %v762, %v689
    %v765 = vunpack.c.l.s4 1983009808
    %v766 = vunpack.c.0.s8 %v765
    %v767 = vperm.slane %v763, %v766
    %v768 = vrot.slane %v756, 4
    %v769 = vsel %vm332, %v768, %v750
    %v770 = vrot.slane %v750, 4
    %v771 = vsel %vm332, %v756, %v770
    %v773 = vunpack.c.l.s4 1934713408
    %v774 = vunpack.c.0.s8 %v773
    %v775 = vperm.slane %v769, %v774
    %v777 = vunpack.c.l.s4 1934713408
    %v778 = vunpack.c.0.s8 %v777
    %v779 = vperm.slane %v771, %v778
    %v780 = vrot.slane %v767, 4
    %v781 = vsel %vm332, %v780, %v761
    %v782 = vrot.slane %v761, 4
    %v783 = vsel %vm332, %v767, %v782
    %v785 = vunpack.c.l.s4 1934713408
    %v786 = vunpack.c.0.s8 %v785
    %v787 = vperm.slane %v781, %v786
    %v789 = vunpack.c.l.s4 1934713408
    %v790 = vunpack.c.0.s8 %v789
    %v791 = vperm.slane %v783, %v790
    %v792 = vrot.slane %v787, 4
    %v793 = vsel %vm332, %v792, %v775
    %v794 = vrot.slane %v775, 4
    %v795 = vsel %vm332, %v787, %v794
    %v796 = vrot.slane %v791, 4
    %v797 = vsel %vm332, %v796, %v779
    %v798 = vrot.slane %v779, 4
    %v799 = vsel %vm332, %v791, %v798
    %v800 = vpack.c.bf16 %v739, %v739
    %v801 = vpack.c.bf16 %v741, %v741
    %v802 = vpack.c.bf16 %v743, %v743
    %v803 = vpack.c.bf16 %v745, %v745
    %v804 = vpack.c.bf16 %v793, %v793
    %v805 = vpack.c.bf16 %v795, %v795
    %v806 = vpack.c.bf16 %v797, %v797
    %v807 = vpack.c.bf16 %v799, %v799
    %810 = vrot.lane.b32.xlu0 %v307, 120
    %v811 = vpop.permute.xlu0 %810
    %812 = vrot.lane.b32.xlu0 %v309, 120
    %v813 = vpop.permute.xlu0 %812
    %816 = vrot.lane.b32.xlu0 %v307, 112
    %v817 = vpop.permute.xlu0 %816
    %818 = vrot.lane.b32.xlu0 %v309, 112
    %v819 = vpop.permute.xlu0 %818
    %822 = vrot.lane.b32.xlu0 %v307, 104
    %v823 = vpop.permute.xlu0 %822
    %824 = vrot.lane.b32.xlu0 %v309, 104
    %v825 = vpop.permute.xlu0 %824
    %v828 = vrot.slane %v817, 4
    %v829 = vsel %vm332, %v828, %v307
    %v830 = vrot.slane %v307, 4
    %v831 = vsel %vm332, %v817, %v830
    %v833 = vunpack.c.l.s4 1983009808
    %v834 = vunpack.c.0.s8 %v833
    %v835 = vperm.slane %v829, %v834
    %v837 = vunpack.c.l.s4 1983009808
    %v838 = vunpack.c.0.s8 %v837
    %v839 = vperm.slane %v831, %v838
    %v840 = vrot.slane %v823, 4
    %v841 = vsel %vm332, %v840, %v811
    %v842 = vrot.slane %v811, 4
    %v843 = vsel %vm332, %v823, %v842
    %v845 = vunpack.c.l.s4 1983009808
    %v846 = vunpack.c.0.s8 %v845
    %v847 = vperm.slane %v841, %v846
    %v849 = vunpack.c.l.s4 1983009808
    %v850 = vunpack.c.0.s8 %v849
    %v851 = vperm.slane %v843, %v850
    %v852 = vrot.slane %v847, 4
    %v853 = vsel %vm332, %v852, %v835
    %v854 = vrot.slane %v835, 4
    %v855 = vsel %vm332, %v847, %v854
    %v857 = vunpack.c.l.s4 1934713408
    %v858 = vunpack.c.0.s8 %v857
    %v859 = vperm.slane %v853, %v858
    %v861 = vunpack.c.l.s4 1934713408
    %v862 = vunpack.c.0.s8 %v861
    %v863 = vperm.slane %v855, %v862
    %v864 = vrot.slane %v851, 4
    %v865 = vsel %vm332, %v864, %v839
    %v866 = vrot.slane %v839, 4
    %v867 = vsel %vm332, %v851, %v866
    %v869 = vunpack.c.l.s4 1934713408
    %v870 = vunpack.c.0.s8 %v869
    %v871 = vperm.slane %v865, %v870
    %v873 = vunpack.c.l.s4 1934713408
    %v874 = vunpack.c.0.s8 %v873
    %v875 = vperm.slane %v867, %v874
    %v876 = vrot.slane %v859, 4
    %v877 = vsel %vm332, 0.0, %v876
    %v878 = vrot.slane %v863, 4
    %v879 = vsel %vm332, 0.0, %v878
    %v880 = vrot.slane %v871, 4
    %v881 = vsel %vm332, 0.0, %v880
    %v882 = vrot.slane %v875, 4
    %v883 = vsel %vm332, 0.0, %v882
    %v884 = vrot.slane %v819, 4
    %v885 = vsel %vm332, %v884, %v309
    %v886 = vrot.slane %v309, 4
    %v887 = vsel %vm332, %v819, %v886
    %v889 = vunpack.c.l.s4 1983009808
    %v890 = vunpack.c.0.s8 %v889
    %v891 = vperm.slane %v885, %v890
    %v893 = vunpack.c.l.s4 1983009808
    %v894 = vunpack.c.0.s8 %v893
    %v895 = vperm.slane %v887, %v894
    %v896 = vrot.slane %v825, 4
    %v897 = vsel %vm332, %v896, %v813
    %v898 = vrot.slane %v813, 4
    %v899 = vsel %vm332, %v825, %v898
    %v901 = vunpack.c.l.s4 1983009808
    %v902 = vunpack.c.0.s8 %v901
    %v903 = vperm.slane %v897, %v902
    %v905 = vunpack.c.l.s4 1983009808
    %v906 = vunpack.c.0.s8 %v905
    %v907 = vperm.slane %v899, %v906
    %v908 = vrot.slane %v903, 4
    %v909 = vsel %vm332, %v908, %v891
    %v910 = vrot.slane %v891, 4
    %v911 = vsel %vm332, %v903, %v910
    %v913 = vunpack.c.l.s4 1934713408
    %v914 = vunpack.c.0.s8 %v913
    %v915 = vperm.slane %v909, %v914
    %v917 = vunpack.c.l.s4 1934713408
    %v918 = vunpack.c.0.s8 %v917
    %v919 = vperm.slane %v911, %v918
    %v920 = vrot.slane %v907, 4
    %v921 = vsel %vm332, %v920, %v895
    %v922 = vrot.slane %v895, 4
    %v923 = vsel %vm332, %v907, %v922
    %v925 = vunpack.c.l.s4 1934713408
    %v926 = vunpack.c.0.s8 %v925
    %v927 = vperm.slane %v921, %v926
    %v929 = vunpack.c.l.s4 1934713408
    %v930 = vunpack.c.0.s8 %v929
    %v931 = vperm.slane %v923, %v930
    %v932 = vrot.slane %v915, 4
    %v933 = vsel %vm332, 0.0, %v932
    %v934 = vrot.slane %v919, 4
    %v935 = vsel %vm332, 0.0, %v934
    %v936 = vrot.slane %v927, 4
    %v937 = vsel %vm332, 0.0, %v936
    %v938 = vrot.slane %v931, 4
    %v939 = vsel %vm332, 0.0, %v938
    %v940 = vsel %vm332, %v878, %v859
    %v942 = vunpack.c.l.s4 1983009808
    %v943 = vunpack.c.0.s8 %v942
    %v944 = vperm.slane %v940, %v943
    %v945 = vrot.slane %v879, 4
    %v946 = vsel %vm332, %v945, %v877
    %v948 = vunpack.c.l.s4 1983009808
    %v949 = vunpack.c.0.s8 %v948
    %v950 = vperm.slane %v946, %v949
    %v951 = vsel %vm332, %v882, %v871
    %v953 = vunpack.c.l.s4 1983009808
    %v954 = vunpack.c.0.s8 %v953
    %v955 = vperm.slane %v951, %v954
    %v956 = vrot.slane %v883, 4
    %v957 = vsel %vm332, %v956, %v881
    %v959 = vunpack.c.l.s4 1983009808
    %v960 = vunpack.c.0.s8 %v959
    %v961 = vperm.slane %v957, %v960
    %v962 = vrot.slane %v950, 4
    %v963 = vsel %vm332, %v962, %v944
    %v964 = vrot.slane %v944, 4
    %v965 = vsel %vm332, %v950, %v964
    %v967 = vunpack.c.l.s4 1934713408
    %v968 = vunpack.c.0.s8 %v967
    %v969 = vperm.slane %v963, %v968
    %v971 = vunpack.c.l.s4 1934713408
    %v972 = vunpack.c.0.s8 %v971
    %v973 = vperm.slane %v965, %v972
    %v974 = vrot.slane %v961, 4
    %v975 = vsel %vm332, %v974, %v955
    %v976 = vrot.slane %v955, 4
    %v977 = vsel %vm332, %v961, %v976
    %v979 = vunpack.c.l.s4 1934713408
    %v980 = vunpack.c.0.s8 %v979
    %v981 = vperm.slane %v975, %v980
    %v983 = vunpack.c.l.s4 1934713408
    %v984 = vunpack.c.0.s8 %v983
    %v985 = vperm.slane %v977, %v984
    %v986 = vrot.slane %v981, 4
    %v987 = vsel %vm332, %v986, %v969
    %v988 = vrot.slane %v969, 4
    %v989 = vsel %vm332, %v981, %v988
    %v990 = vrot.slane %v985, 4
    %v991 = vsel %vm332, %v990, %v973
    %v992 = vrot.slane %v973, 4
    %v993 = vsel %vm332, %v985, %v992
    %v994 = vsel %vm332, %v934, %v915
    %v996 = vunpack.c.l.s4 1983009808
    %v997 = vunpack.c.0.s8 %v996
    %v998 = vperm.slane %v994, %v997
    %v999 = vrot.slane %v935, 4
    %v1000 = vsel %vm332, %v999, %v933
    %v1002 = vunpack.c.l.s4 1983009808
    %v1003 = vunpack.c.0.s8 %v1002
    %v1004 = vperm.slane %v1000, %v1003
    %v1005 = vsel %vm332, %v938, %v927
    %v1007 = vunpack.c.l.s4 1983009808
    %v1008 = vunpack.c.0.s8 %v1007
    %v1009 = vperm.slane %v1005, %v1008
    %v1010 = vrot.slane %v939, 4
    %v1011 = vsel %vm332, %v1010, %v937
    %v1013 = vunpack.c.l.s4 1983009808
    %v1014 = vunpack.c.0.s8 %v1013
    %v1015 = vperm.slane %v1011, %v1014
    %v1016 = vrot.slane %v1004, 4
    %v1017 = vsel %vm332, %v1016, %v998
    %v1018 = vrot.slane %v998, 4
    %v1019 = vsel %vm332, %v1004, %v1018
    %v1021 = vunpack.c.l.s4 1934713408
    %v1022 = vunpack.c.0.s8 %v1021
    %v1023 = vperm.slane %v1017, %v1022
    %v1025 = vunpack.c.l.s4 1934713408
    %v1026 = vunpack.c.0.s8 %v1025
    %v1027 = vperm.slane %v1019, %v1026
    %v1028 = vrot.slane %v1015, 4
    %v1029 = vsel %vm332, %v1028, %v1009
    %v1030 = vrot.slane %v1009, 4
    %v1031 = vsel %vm332, %v1015, %v1030
    %v1033 = vunpack.c.l.s4 1934713408
    %v1034 = vunpack.c.0.s8 %v1033
    %v1035 = vperm.slane %v1029, %v1034
    %v1037 = vunpack.c.l.s4 1934713408
    %v1038 = vunpack.c.0.s8 %v1037
    %v1039 = vperm.slane %v1031, %v1038
    %v1040 = vrot.slane %v1035, 4
    %v1041 = vsel %vm332, %v1040, %v1023
    %v1042 = vrot.slane %v1023, 4
    %v1043 = vsel %vm332, %v1035, %v1042
    %v1044 = vrot.slane %v1039, 4
    %v1045 = vsel %vm332, %v1044, %v1027
    %v1046 = vrot.slane %v1027, 4
    %v1047 = vsel %vm332, %v1039, %v1046
    %v1048 = vpack.c.bf16 %v987, %v987
    %v1049 = vpack.c.bf16 %v989, %v989
    %v1050 = vpack.c.bf16 %v991, %v991
    %v1051 = vpack.c.bf16 %v993, %v993
    %v1052 = vpack.c.bf16 %v1041, %v1041
    %v1053 = vpack.c.bf16 %v1043, %v1043
    %v1054 = vpack.c.bf16 %v1045, %v1045
    %v1055 = vpack.c.bf16 %v1047, %v1047
    %vm1056 = vcmask 64512
    %v1058 = vsel %vm1056, %v552, 0
    %v1061 = vsel %vm1056, %v800, 0
    %1063 = vmatpush.bf16.xpose.msra.mxu0 0
    %1064 = vmatpush.bf16.xpose.msra.mxu0 0
    %1065 = vmatpush.bf16.xpose.msra.mxu0 0
    %1066 = vmatpush.bf16.xpose.msra.mxu0 0
    %1067 = vmatpush.bf16.xpose.msra.mxu0 0
    %1068 = vmatpush.bf16.xpose.msra.mxu0 0
    %1069 = vmatpush.bf16.xpose.msra.mxu0 0
    %1070 = vmatpush.bf16.xpose.msra.mxu0 %v1061
    %1071 = vmatmul.bf16.gmra.mxu0 %v1058
    %v1072 = vpop.f32.mrf.mxu0
    %v1073 = vadd.f32 %v151, %v1072
    %v1074 = vpop.f32.mrf.mxu0
    %1075 = vdwg.mxu0
    %v1077 = vsel %vm1056, %v553, 0
    %v1080 = vsel %vm1056, %v801, 0
    %1082 = vmatpush.bf16.xpose.msra.mxu0 0
    %1083 = vmatpush.bf16.xpose.msra.mxu0 0
    %1084 = vmatpush.bf16.xpose.msra.mxu0 0
    %1085 = vmatpush.bf16.xpose.msra.mxu0 0
    %1086 = vmatpush.bf16.xpose.msra.mxu0 0
    %1087 = vmatpush.bf16.xpose.msra.mxu0 0
    %1088 = vmatpush.bf16.xpose.msra.mxu0 0
    %1089 = vmatpush.bf16.xpose.msra.mxu0 %v1080
    %1090 = vmatmul.bf16.gmra.mxu0 %v1077
    %v1091 = vpop.f32.mrf.mxu0
    %v1092 = vadd.f32 %v151, %v1091
    %v1093 = vpop.f32.mrf.mxu0
    %1094 = vdwg.mxu0
    %v1096 = vsel %vm1056, %v554, 0
    %v1099 = vsel %vm1056, %v802, 0
    %1101 = vmatpush.bf16.xpose.msra.mxu0 0
    %1102 = vmatpush.bf16.xpose.msra.mxu0 0
    %1103 = vmatpush.bf16.xpose.msra.mxu0 0
    %1104 = vmatpush.bf16.xpose.msra.mxu0 0
    %1105 = vmatpush.bf16.xpose.msra.mxu0 0
    %1106 = vmatpush.bf16.xpose.msra.mxu0 0
    %1107 = vmatpush.bf16.xpose.msra.mxu0 0
    %1108 = vmatpush.bf16.xpose.msra.mxu0 %v1099
    %1109 = vmatmul.bf16.gmra.mxu0 %v1096
    %v1110 = vpop.f32.mrf.mxu0
    %v1111 = vadd.f32 %v151, %v1110
    %v1112 = vpop.f32.mrf.mxu0
    %1113 = vdwg.mxu0
    %v1115 = vsel %vm1056, %v555, 0
    %v1118 = vsel %vm1056, %v803, 0
    %1120 = vmatpush.bf16.xpose.msra.mxu0 0
    %1121 = vmatpush.bf16.xpose.msra.mxu0 0
    %1122 = vmatpush.bf16.xpose.msra.mxu0 0
    %1123 = vmatpush.bf16.xpose.msra.mxu0 0
    %1124 = vmatpush.bf16.xpose.msra.mxu0 0
    %1125 = vmatpush.bf16.xpose.msra.mxu0 0
    %1126 = vmatpush.bf16.xpose.msra.mxu0 0
    %1127 = vmatpush.bf16.xpose.msra.mxu0 %v1118
    %1128 = vmatmul.bf16.gmra.mxu0 %v1115
    %v1129 = vpop.f32.mrf.mxu0
    %v1130 = vadd.f32 %v151, %v1129
    %v1131 = vpop.f32.mrf.mxu0
    %1132 = vdwg.mxu0
    %v1134 = vsel %vm1056, %v556, 0
    %v1137 = vsel %vm1056, %v804, 0
    %1139 = vmatpush.bf16.xpose.msra.mxu0 0
    %1140 = vmatpush.bf16.xpose.msra.mxu0 0
    %1141 = vmatpush.bf16.xpose.msra.mxu0 0
    %1142 = vmatpush.bf16.xpose.msra.mxu0 0
    %1143 = vmatpush.bf16.xpose.msra.mxu0 0
    %1144 = vmatpush.bf16.xpose.msra.mxu0 0
    %1145 = vmatpush.bf16.xpose.msra.mxu0 0
    %1146 = vmatpush.bf16.xpose.msra.mxu0 %v1137
    %1147 = vmatmul.bf16.gmra.mxu0 %v1134
    %v1148 = vpop.f32.mrf.mxu0
    %v1149 = vadd.f32 %v151, %v1148
    %v1150 = vpop.f32.mrf.mxu0
    %1151 = vdwg.mxu0
    %v1153 = vsel %vm1056, %v557, 0
    %v1156 = vsel %vm1056, %v805, 0
    %1158 = vmatpush.bf16.xpose.msra.mxu0 0
    %1159 = vmatpush.bf16.xpose.msra.mxu0 0
    %1160 = vmatpush.bf16.xpose.msra.mxu0 0
    %1161 = vmatpush.bf16.xpose.msra.mxu0 0
    %1162 = vmatpush.bf16.xpose.msra.mxu0 0
    %1163 = vmatpush.bf16.xpose.msra.mxu0 0
    %1164 = vmatpush.bf16.xpose.msra.mxu0 0
    %1165 = vmatpush.bf16.xpose.msra.mxu0 %v1156
    %1166 = vmatmul.bf16.gmra.mxu0 %v1153
    %v1167 = vpop.f32.mrf.mxu0
    %v1168 = vadd.f32 %v151, %v1167
    %v1169 = vpop.f32.mrf.mxu0
    %1170 = vdwg.mxu0
    %v1172 = vsel %vm1056, %v558, 0
    %v1175 = vsel %vm1056, %v806, 0
    %1177 = vmatpush.bf16.xpose.msra.mxu0 0
    %1178 = vmatpush.bf16.xpose.msra.mxu0 0
    %1179 = vmatpush.bf16.xpose.msra.mxu0 0
    %1180 = vmatpush.bf16.xpose.msra.mxu0 0
    %1181 = vmatpush.bf16.xpose.msra.mxu0 0
    %1182 = vmatpush.bf16.xpose.msra.mxu0 0
    %1183 = vmatpush.bf16.xpose.msra.mxu0 0
    %1184 = vmatpush.bf16.xpose.msra.mxu0 %v1175
    %1185 = vmatmul.bf16.gmra.mxu0 %v1172
    %v1186 = vpop.f32.mrf.mxu0
    %v1187 = vadd.f32 %v151, %v1186
    %v1188 = vpop.f32.mrf.mxu0
    %1189 = vdwg.mxu0
    %v1191 = vsel %vm1056, %v559, 0
    %v1194 = vsel %vm1056, %v807, 0
    %1196 = vmatpush.bf16.xpose.msra.mxu0 0
    %1197 = vmatpush.bf16.xpose.msra.mxu0 0
    %1198 = vmatpush.bf16.xpose.msra.mxu0 0
    %1199 = vmatpush.bf16.xpose.msra.mxu0 0
    %1200 = vmatpush.bf16.xpose.msra.mxu0 0
    %1201 = vmatpush.bf16.xpose.msra.mxu0 0
    %1202 = vmatpush.bf16.xpose.msra.mxu0 0
    %1203 = vmatpush.bf16.xpose.msra.mxu0 %v1194
    %1204 = vmatmul.bf16.gmra.mxu0 %v1191
    %v1205 = vpop.f32.mrf.mxu0
    %v1206 = vadd.f32 %v151, %v1205
    %v1207 = vpop.f32.mrf.mxu0
    %1208 = vdwg.mxu0
    %v1209 = vsel %vm1056, %v1073, -inf
    %1210 = vmax.xlane.f32.xlu0 %v1209
    %v1211 = vpop.xlane.xlu0 %1210
    %v1212 = vsel %vm1056, %v1092, -inf
    %1213 = vmax.xlane.f32.xlu0 %v1212
    %v1214 = vpop.xlane.xlu0 %1213
    %v1215 = vsel %vm1056, %v1111, -inf
    %1216 = vmax.xlane.f32.xlu0 %v1215
    %v1217 = vpop.xlane.xlu0 %1216
    %v1218 = vsel %vm1056, %v1130, -inf
    %1219 = vmax.xlane.f32.xlu0 %v1218
    %v1220 = vpop.xlane.xlu0 %1219
    %v1221 = vsel %vm1056, %v1149, -inf
    %1222 = vmax.xlane.f32.xlu0 %v1221
    %v1223 = vpop.xlane.xlu0 %1222
    %v1224 = vsel %vm1056, %v1168, -inf
    %1225 = vmax.xlane.f32.xlu0 %v1224
    %v1226 = vpop.xlane.xlu0 %1225
    %v1227 = vsel %vm1056, %v1187, -inf
    %1228 = vmax.xlane.f32.xlu0 %v1227
    %v1229 = vpop.xlane.xlu0 %1228
    %v1230 = vsel %vm1056, %v1206, -inf
    %1231 = vmax.xlane.f32.xlu0 %v1230
    %v1232 = vpop.xlane.xlu0 %1231
    %v1233 = vsub.f32 %v1073, %v1211
    %v1234 = vsub.f32 %v1092, %v1214
    %v1235 = vsub.f32 %v1111, %v1217
    %v1236 = vsub.f32 %v1130, %v1220
    %v1237 = vsub.f32 %v1149, %v1223
    %v1238 = vsub.f32 %v1168, %v1226
    %v1239 = vsub.f32 %v1187, %v1229
    %v1240 = vsub.f32 %v1206, %v1232
    %v1241 = vmul.f32 %v1233, 1.442695
    %v1242 = vpow.pop %v1241
    %v1243 = vmul.f32 %v1234, 1.442695
    %v1244 = vpow.pop %v1243
    %v1245 = vmul.f32 %v1235, 1.442695
    %v1246 = vpow.pop %v1245
    %v1247 = vmul.f32 %v1236, 1.442695
    %v1248 = vpow.pop %v1247
    %v1249 = vmul.f32 %v1237, 1.442695
    %v1250 = vpow.pop %v1249
    %v1251 = vmul.f32 %v1238, 1.442695
    %v1252 = vpow.pop %v1251
    %v1253 = vmul.f32 %v1239, 1.442695
    %v1254 = vpow.pop %v1253
    %v1255 = vmul.f32 %v1240, 1.442695
    %v1256 = vpow.pop %v1255
    %v1257 = vsel %vm1056, %v1242, 0.0
    %1258 = vadd.xlane.f32.xlu0 %v1257
    %v1259 = vpop.xlane.xlu0 %1258
    %v1260 = vsel %vm1056, %v1244, 0.0
    %1261 = vadd.xlane.f32.xlu0 %v1260
    %v1262 = vpop.xlane.xlu0 %1261
    %v1263 = vsel %vm1056, %v1246, 0.0
    %1264 = vadd.xlane.f32.xlu0 %v1263
    %v1265 = vpop.xlane.xlu0 %1264
    %v1266 = vsel %vm1056, %v1248, 0.0
    %1267 = vadd.xlane.f32.xlu0 %v1266
    %v1268 = vpop.xlane.xlu0 %1267
    %v1269 = vsel %vm1056, %v1250, 0.0
    %1270 = vadd.xlane.f32.xlu0 %v1269
    %v1271 = vpop.xlane.xlu0 %1270
    %v1272 = vsel %vm1056, %v1252, 0.0
    %1273 = vadd.xlane.f32.xlu0 %v1272
    %v1274 = vpop.xlane.xlu0 %1273
    %v1275 = vsel %vm1056, %v1254, 0.0
    %1276 = vadd.xlane.f32.xlu0 %v1275
    %v1277 = vpop.xlane.xlu0 %1276
    %v1278 = vsel %vm1056, %v1256, 0.0
    %1279 = vadd.xlane.f32.xlu0 %v1278
    %v1280 = vpop.xlane.xlu0 %1279
    %v1281 = vrcp.pop %v1259
    %v1282 = vmul.f32 %v1259, %v1281
    %v1283 = vsub.f32 1.0, %v1282
    %v1284 = vmul.f32 %v1281, %v1283
    %v1285 = vadd.f32 %v1281, %v1284
    %vm1286 = vweird.f32 %v1259
    %vm1287 = vweird.f32 %v1281
    %vm1288 = vmor %vm1286, %vm1287
    %v1289 = vsel %vm1288, %v1281, %v1285
    %v1290 = vand.u32 2147483647, %v1259
    %vm1291 = vcmp.eq.f32.partialorder %v1290, 8.507059e+37
    %v1292 = vand.u32 %v1259, 2147483648
    %v1293 = vor.u32 1.1754944e-38, %v1292
    %v1294 = vsel %vm1291, %v1293, %v1289
    %v1295 = vmul.f32 %v1242, %v1294
    %v1296 = vrcp.pop %v1262
    %v1297 = vmul.f32 %v1262, %v1296
    %v1298 = vsub.f32 1.0, %v1297
    %v1299 = vmul.f32 %v1296, %v1298
    %v1300 = vadd.f32 %v1296, %v1299
    %vm1301 = vweird.f32 %v1262
    %vm1302 = vweird.f32 %v1296
    %vm1303 = vmor %vm1301, %vm1302
    %v1304 = vsel %vm1303, %v1296, %v1300
    %v1305 = vand.u32 2147483647, %v1262
    %vm1306 = vcmp.eq.f32.partialorder %v1305, 8.507059e+37
    %v1307 = vand.u32 %v1262, 2147483648
    %v1308 = vor.u32 1.1754944e-38, %v1307
    %v1309 = vsel %vm1306, %v1308, %v1304
    %v1310 = vmul.f32 %v1244, %v1309
    %v1311 = vrcp.pop %v1265
    %v1312 = vmul.f32 %v1265, %v1311
    %v1313 = vsub.f32 1.0, %v1312
    %v1314 = vmul.f32 %v1311, %v1313
    %v1315 = vadd.f32 %v1311, %v1314
    %vm1316 = vweird.f32 %v1265
    %vm1317 = vweird.f32 %v1311
    %vm1318 = vmor %vm1316, %vm1317
    %v1319 = vsel %vm1318, %v1311, %v1315
    %v1320 = vand.u32 2147483647, %v1265
    %vm1321 = vcmp.eq.f32.partialorder %v1320, 8.507059e+37
    %v1322 = vand.u32 %v1265, 2147483648
    %v1323 = vor.u32 1.1754944e-38, %v1322
    %v1324 = vsel %vm1321, %v1323, %v1319
    %v1325 = vmul.f32 %v1246, %v1324
    %v1326 = vrcp.pop %v1268
    %v1327 = vmul.f32 %v1268, %v1326
    %v1328 = vsub.f32 1.0, %v1327
    %v1329 = vmul.f32 %v1326, %v1328
    %v1330 = vadd.f32 %v1326, %v1329
    %vm1331 = vweird.f32 %v1268
    %vm1332 = vweird.f32 %v1326
    %vm1333 = vmor %vm1331, %vm1332
    %v1334 = vsel %vm1333, %v1326, %v1330
    %v1335 = vand.u32 2147483647, %v1268
    %vm1336 = vcmp.eq.f32.partialorder %v1335, 8.507059e+37
    %v1337 = vand.u32 %v1268, 2147483648
    %v1338 = vor.u32 1.1754944e-38, %v1337
    %v1339 = vsel %vm1336, %v1338, %v1334
    %v1340 = vmul.f32 %v1248, %v1339
    %v1341 = vrcp.pop %v1271
    %v1342 = vmul.f32 %v1271, %v1341
    %v1343 = vsub.f32 1.0, %v1342
    %v1344 = vmul.f32 %v1341, %v1343
    %v1345 = vadd.f32 %v1341, %v1344
    %vm1346 = vweird.f32 %v1271
    %vm1347 = vweird.f32 %v1341
    %vm1348 = vmor %vm1346, %vm1347
    %v1349 = vsel %vm1348, %v1341, %v1345
    %v1350 = vand.u32 2147483647, %v1271
    %vm1351 = vcmp.eq.f32.partialorder %v1350, 8.507059e+37
    %v1352 = vand.u32 %v1271, 2147483648
    %v1353 = vor.u32 1.1754944e-38, %v1352
    %v1354 = vsel %vm1351, %v1353, %v1349
    %v1355 = vmul.f32 %v1250, %v1354
    %v1356 = vrcp.pop %v1274
    %v1357 = vmul.f32 %v1274, %v1356
    %v1358 = vsub.f32 1.0, %v1357
    %v1359 = vmul.f32 %v1356, %v1358
    %v1360 = vadd.f32 %v1356, %v1359
    %vm1361 = vweird.f32 %v1274
    %vm1362 = vweird.f32 %v1356
    %vm1363 = vmor %vm1361, %vm1362
    %v1364 = vsel %vm1363, %v1356, %v1360
    %v1365 = vand.u32 2147483647, %v1274
    %vm1366 = vcmp.eq.f32.partialorder %v1365, 8.507059e+37
    %v1367 = vand.u32 %v1274, 2147483648
    %v1368 = vor.u32 1.1754944e-38, %v1367
    %v1369 = vsel %vm1366, %v1368, %v1364
    %v1370 = vmul.f32 %v1252, %v1369
    %v1371 = vrcp.pop %v1277
    %v1372 = vmul.f32 %v1277, %v1371
    %v1373 = vsub.f32 1.0, %v1372
    %v1374 = vmul.f32 %v1371, %v1373
    %v1375 = vadd.f32 %v1371, %v1374
    %vm1376 = vweird.f32 %v1277
    %vm1377 = vweird.f32 %v1371
    %vm1378 = vmor %vm1376, %vm1377
    %v1379 = vsel %vm1378, %v1371, %v1375
    %v1380 = vand.u32 2147483647, %v1277
    %vm1381 = vcmp.eq.f32.partialorder %v1380, 8.507059e+37
    %v1382 = vand.u32 %v1277, 2147483648
    %v1383 = vor.u32 1.1754944e-38, %v1382
    %v1384 = vsel %vm1381, %v1383, %v1379
    %v1385 = vmul.f32 %v1254, %v1384
    %v1386 = vrcp.pop %v1280
    %v1387 = vmul.f32 %v1280, %v1386
    %v1388 = vsub.f32 1.0, %v1387
    %v1389 = vmul.f32 %v1386, %v1388
    %v1390 = vadd.f32 %v1386, %v1389
    %vm1391 = vweird.f32 %v1280
    %vm1392 = vweird.f32 %v1386
    %vm1393 = vmor %vm1391, %vm1392
    %v1394 = vsel %vm1393, %v1386, %v1390
    %v1395 = vand.u32 2147483647, %v1280
    %vm1396 = vcmp.eq.f32.partialorder %v1395, 8.507059e+37
    %v1397 = vand.u32 %v1280, 2147483648
    %v1398 = vor.u32 1.1754944e-38, %v1397
    %v1399 = vsel %vm1396, %v1398, %v1394
    %v1400 = vmul.f32 %v1256, %v1399
    %v1401 = vpack.c.bf16 %v1295, %v1295
    %v1402 = vpack.c.bf16 %v1310, %v1310
    %v1403 = vpack.c.bf16 %v1325, %v1325
    %v1404 = vpack.c.bf16 %v1340, %v1340
    %v1405 = vpack.c.bf16 %v1355, %v1355
    %v1406 = vpack.c.bf16 %v1370, %v1370
    %v1407 = vpack.c.bf16 %v1385, %v1385
    %v1408 = vpack.c.bf16 %v1400, %v1400
    %v1410 = vsel %vm1056, %v1401, 0
    %vm1412 = vcmask 1043456
    %v1414 = vsel %vm1412, %v1048, 0
    %1416 = vmatpush.bf16.msra.mxu0 0
    %1417 = vmatpush.bf16.msra.mxu0 0
    %1418 = vmatpush.bf16.msra.mxu0 0
    %1419 = vmatpush.bf16.msra.mxu0 0
    %1420 = vmatpush.bf16.msra.mxu0 0
    %1421 = vmatpush.bf16.msra.mxu0 0
    %1422 = vmatpush.bf16.msra.mxu0 0
    %1423 = vmatpush.bf16.msra.mxu0 %v1414
    %1424 = vmatmul.bf16.gmra.mxu0 %v1410
    %v1425 = vpop.f32.mrf.mxu0
    %v1426 = vadd.f32 0.0, %v1425
    %v1427 = vpop.f32.mrf.mxu0
    %1428 = vdwg.mxu0
    %v1430 = vsel %vm1056, %v1402, 0
    %v1433 = vsel %vm1412, %v1049, 0
    %1435 = vmatpush.bf16.msra.mxu0 0
    %1436 = vmatpush.bf16.msra.mxu0 0
    %1437 = vmatpush.bf16.msra.mxu0 0
    %1438 = vmatpush.bf16.msra.mxu0 0
    %1439 = vmatpush.bf16.msra.mxu0 0
    %1440 = vmatpush.bf16.msra.mxu0 0
    %1441 = vmatpush.bf16.msra.mxu0 0
    %1442 = vmatpush.bf16.msra.mxu0 %v1433
    %1443 = vmatmul.bf16.gmra.mxu0 %v1430
    %v1444 = vpop.f32.mrf.mxu0
    %v1445 = vadd.f32 0.0, %v1444
    %v1446 = vpop.f32.mrf.mxu0
    %1447 = vdwg.mxu0
    %v1449 = vsel %vm1056, %v1403, 0
    %v1452 = vsel %vm1412, %v1050, 0
    %1454 = vmatpush.bf16.msra.mxu0 0
    %1455 = vmatpush.bf16.msra.mxu0 0
    %1456 = vmatpush.bf16.msra.mxu0 0
    %1457 = vmatpush.bf16.msra.mxu0 0
    %1458 = vmatpush.bf16.msra.mxu0 0
    %1459 = vmatpush.bf16.msra.mxu0 0
    %1460 = vmatpush.bf16.msra.mxu0 0
    %1461 = vmatpush.bf16.msra.mxu0 %v1452
    %1462 = vmatmul.bf16.gmra.mxu0 %v1449
    %v1463 = vpop.f32.mrf.mxu0
    %v1464 = vadd.f32 0.0, %v1463
    %v1465 = vpop.f32.mrf.mxu0
    %1466 = vdwg.mxu0
    %v1468 = vsel %vm1056, %v1404, 0
    %v1471 = vsel %vm1412, %v1051, 0
    %1473 = vmatpush.bf16.msra.mxu0 0
    %1474 = vmatpush.bf16.msra.mxu0 0
    %1475 = vmatpush.bf16.msra.mxu0 0
    %1476 = vmatpush.bf16.msra.mxu0 0
    %1477 = vmatpush.bf16.msra.mxu0 0
    %1478 = vmatpush.bf16.msra.mxu0 0
    %1479 = vmatpush.bf16.msra.mxu0 0
    %1480 = vmatpush.bf16.msra.mxu0 %v1471
    %1481 = vmatmul.bf16.gmra.mxu0 %v1468
    %v1482 = vpop.f32.mrf.mxu0
    %v1483 = vadd.f32 0.0, %v1482
    %v1484 = vpop.f32.mrf.mxu0
    %1485 = vdwg.mxu0
    %v1487 = vsel %vm1056, %v1405, 0
    %v1490 = vsel %vm1412, %v1052, 0
    %1492 = vmatpush.bf16.msra.mxu0 0
    %1493 = vmatpush.bf16.msra.mxu0 0
    %1494 = vmatpush.bf16.msra.mxu0 0
    %1495 = vmatpush.bf16.msra.mxu0 0
    %1496 = vmatpush.bf16.msra.mxu0 0
    %1497 = vmatpush.bf16.msra.mxu0 0
    %1498 = vmatpush.bf16.msra.mxu0 0
    %1499 = vmatpush.bf16.msra.mxu0 %v1490
    %1500 = vmatmul.bf16.gmra.mxu0 %v1487
    %v1501 = vpop.f32.mrf.mxu0
    %v1502 = vadd.f32 0.0, %v1501
    %v1503 = vpop.f32.mrf.mxu0
    %1504 = vdwg.mxu0
    %v1506 = vsel %vm1056, %v1406, 0
    %v1509 = vsel %vm1412, %v1053, 0
    %1511 = vmatpush.bf16.msra.mxu0 0
    %1512 = vmatpush.bf16.msra.mxu0 0
    %1513 = vmatpush.bf16.msra.mxu0 0
    %1514 = vmatpush.bf16.msra.mxu0 0
    %1515 = vmatpush.bf16.msra.mxu0 0
    %1516 = vmatpush.bf16.msra.mxu0 0
    %1517 = vmatpush.bf16.msra.mxu0 0
    %1518 = vmatpush.bf16.msra.mxu0 %v1509
    %1519 = vmatmul.bf16.gmra.mxu0 %v1506
    %v1520 = vpop.f32.mrf.mxu0
    %v1521 = vadd.f32 0.0, %v1520
    %v1522 = vpop.f32.mrf.mxu0
    %1523 = vdwg.mxu0
    %v1525 = vsel %vm1056, %v1407, 0
    %v1528 = vsel %vm1412, %v1054, 0
    %1530 = vmatpush.bf16.msra.mxu0 0
    %1531 = vmatpush.bf16.msra.mxu0 0
    %1532 = vmatpush.bf16.msra.mxu0 0
    %1533 = vmatpush.bf16.msra.mxu0 0
    %1534 = vmatpush.bf16.msra.mxu0 0
    %1535 = vmatpush.bf16.msra.mxu0 0
    %1536 = vmatpush.bf16.msra.mxu0 0
    %1537 = vmatpush.bf16.msra.mxu0 %v1528
    %1538 = vmatmul.bf16.gmra.mxu0 %v1525
    %v1539 = vpop.f32.mrf.mxu0
    %v1540 = vadd.f32 0.0, %v1539
    %v1541 = vpop.f32.mrf.mxu0
    %1542 = vdwg.mxu0
    %v1544 = vsel %vm1056, %v1408, 0
    %v1547 = vsel %vm1412, %v1055, 0
    %1549 = vmatpush.bf16.msra.mxu0 0
    %1550 = vmatpush.bf16.msra.mxu0 0
    %1551 = vmatpush.bf16.msra.mxu0 0
    %1552 = vmatpush.bf16.msra.mxu0 0
    %1553 = vmatpush.bf16.msra.mxu0 0
    %1554 = vmatpush.bf16.msra.mxu0 0
    %1555 = vmatpush.bf16.msra.mxu0 0
    %1556 = vmatpush.bf16.msra.mxu0 %v1547
    %1557 = vmatmul.bf16.gmra.mxu0 %v1544
    %v1558 = vpop.f32.mrf.mxu0
    %v1559 = vadd.f32 0.0, %v1558
    %v1560 = vpop.f32.mrf.mxu0
    %1561 = vdwg.mxu0
    %v1562 = vrot.slane %v1464, 4
    %v1563 = vsel %vm332, %v1562, %v1426
    %v1564 = vrot.slane %v1426, 4
    %v1565 = vsel %vm332, %v1464, %v1564
    %v1567 = vunpack.c.l.s4 1983009808
    %v1568 = vunpack.c.0.s8 %v1567
    %v1569 = vperm.slane %v1563, %v1568
    %v1571 = vunpack.c.l.s4 1983009808
    %v1572 = vunpack.c.0.s8 %v1571
    %v1573 = vperm.slane %v1565, %v1572
    %v1574 = vrot.slane %v1483, 4
    %v1575 = vsel %vm332, %v1574, %v1445
    %v1576 = vrot.slane %v1445, 4
    %v1577 = vsel %vm332, %v1483, %v1576
    %v1579 = vunpack.c.l.s4 1983009808
    %v1580 = vunpack.c.0.s8 %v1579
    %v1581 = vperm.slane %v1575, %v1580
    %v1583 = vunpack.c.l.s4 1983009808
    %v1584 = vunpack.c.0.s8 %v1583
    %v1585 = vperm.slane %v1577, %v1584
    %v1586 = vrot.slane %v1581, 4
    %v1587 = vsel %vm332, %v1586, %v1569
    %v1588 = vrot.slane %v1569, 4
    %v1589 = vsel %vm332, %v1581, %v1588
    %v1591 = vunpack.c.l.s4 1934713408
    %v1592 = vunpack.c.0.s8 %v1591
    %v1593 = vperm.slane %v1587, %v1592
    %v1595 = vunpack.c.l.s4 1934713408
    %v1596 = vunpack.c.0.s8 %v1595
    %v1597 = vperm.slane %v1589, %v1596
    %v1598 = vrot.slane %v1585, 4
    %v1599 = vsel %vm332, %v1598, %v1573
    %v1600 = vrot.slane %v1573, 4
    %v1601 = vsel %vm332, %v1585, %v1600
    %v1603 = vunpack.c.l.s4 1934713408
    %v1604 = vunpack.c.0.s8 %v1603
    %v1605 = vperm.slane %v1599, %v1604
    %v1607 = vunpack.c.l.s4 1934713408
    %v1608 = vunpack.c.0.s8 %v1607
    %v1609 = vperm.slane %v1601, %v1608
    %v1610 = vrot.slane %v1593, 4
    %v1611 = vsel %vm332, 0.0, %v1610
    %v1612 = vrot.slane %v1597, 4
    %v1613 = vsel %vm332, 0.0, %v1612
    %v1614 = vrot.slane %v1605, 4
    %v1615 = vsel %vm332, 0.0, %v1614
    %v1616 = vrot.slane %v1609, 4
    %v1617 = vsel %vm332, 0.0, %v1616
    %v1618 = vrot.slane %v1540, 4
    %v1619 = vsel %vm332, %v1618, %v1502
    %v1620 = vrot.slane %v1502, 4
    %v1621 = vsel %vm332, %v1540, %v1620
    %v1623 = vunpack.c.l.s4 1983009808
    %v1624 = vunpack.c.0.s8 %v1623
    %v1625 = vperm.slane %v1619, %v1624
    %v1627 = vunpack.c.l.s4 1983009808
    %v1628 = vunpack.c.0.s8 %v1627
    %v1629 = vperm.slane %v1621, %v1628
    %v1630 = vrot.slane %v1559, 4
    %v1631 = vsel %vm332, %v1630, %v1521
    %v1632 = vrot.slane %v1521, 4
    %v1633 = vsel %vm332, %v1559, %v1632
    %v1635 = vunpack.c.l.s4 1983009808
    %v1636 = vunpack.c.0.s8 %v1635
    %v1637 = vperm.slane %v1631, %v1636
    %v1639 = vunpack.c.l.s4 1983009808
    %v1640 = vunpack.c.0.s8 %v1639
    %v1641 = vperm.slane %v1633, %v1640
    %v1642 = vrot.slane %v1637, 4
    %v1643 = vsel %vm332, %v1642, %v1625
    %v1644 = vrot.slane %v1625, 4
    %v1645 = vsel %vm332, %v1637, %v1644
    %v1647 = vunpack.c.l.s4 1934713408
    %v1648 = vunpack.c.0.s8 %v1647
    %v1649 = vperm.slane %v1643, %v1648
    %v1651 = vunpack.c.l.s4 1934713408
    %v1652 = vunpack.c.0.s8 %v1651
    %v1653 = vperm.slane %v1645, %v1652
    %v1654 = vrot.slane %v1641, 4
    %v1655 = vsel %vm332, %v1654, %v1629
    %v1656 = vrot.slane %v1629, 4
    %v1657 = vsel %vm332, %v1641, %v1656
    %v1659 = vunpack.c.l.s4 1934713408
    %v1660 = vunpack.c.0.s8 %v1659
    %v1661 = vperm.slane %v1655, %v1660
    %v1663 = vunpack.c.l.s4 1934713408
    %v1664 = vunpack.c.0.s8 %v1663
    %v1665 = vperm.slane %v1657, %v1664
    %v1666 = vrot.slane %v1649, 4
    %v1667 = vsel %vm332, 0.0, %v1666
    %v1668 = vrot.slane %v1653, 4
    %v1669 = vsel %vm332, 0.0, %v1668
    %v1670 = vrot.slane %v1661, 4
    %v1671 = vsel %vm332, 0.0, %v1670
    %v1672 = vrot.slane %v1665, 4
    %v1673 = vsel %vm332, 0.0, %v1672
    %v1674 = vsel %vm332, %v1612, %v1593
    %v1676 = vunpack.c.l.s4 1983009808
    %v1677 = vunpack.c.0.s8 %v1676
    %v1678 = vperm.slane %v1674, %v1677
    %v1679 = vrot.slane %v1613, 4
    %v1680 = vsel %vm332, %v1679, %v1611
    %v1682 = vunpack.c.l.s4 1983009808
    %v1683 = vunpack.c.0.s8 %v1682
    %v1684 = vperm.slane %v1680, %v1683
    %v1685 = vsel %vm332, %v1616, %v1605
    %v1687 = vunpack.c.l.s4 1983009808
    %v1688 = vunpack.c.0.s8 %v1687
    %v1689 = vperm.slane %v1685, %v1688
    %v1690 = vrot.slane %v1617, 4
    %v1691 = vsel %vm332, %v1690, %v1615
    %v1693 = vunpack.c.l.s4 1983009808
    %v1694 = vunpack.c.0.s8 %v1693
    %v1695 = vperm.slane %v1691, %v1694
    %v1696 = vrot.slane %v1684, 4
    %v1697 = vsel %vm332, %v1696, %v1678
    %v1698 = vrot.slane %v1678, 4
    %v1699 = vsel %vm332, %v1684, %v1698
    %v1701 = vunpack.c.l.s4 1934713408
    %v1702 = vunpack.c.0.s8 %v1701
    %v1703 = vperm.slane %v1697, %v1702
    %v1705 = vunpack.c.l.s4 1934713408
    %v1706 = vunpack.c.0.s8 %v1705
    %v1707 = vperm.slane %v1699, %v1706
    %v1708 = vrot.slane %v1695, 4
    %v1709 = vsel %vm332, %v1708, %v1689
    %v1710 = vrot.slane %v1689, 4
    %v1711 = vsel %vm332, %v1695, %v1710
    %v1713 = vunpack.c.l.s4 1934713408
    %v1714 = vunpack.c.0.s8 %v1713
    %v1715 = vperm.slane %v1709, %v1714
    %v1717 = vunpack.c.l.s4 1934713408
    %v1718 = vunpack.c.0.s8 %v1717
    %v1719 = vperm.slane %v1711, %v1718
    %v1720 = vrot.slane %v1715, 4
    %v1721 = vsel %vm332, %v1720, %v1703
    %v1722 = vrot.slane %v1703, 4
    %v1723 = vsel %vm332, %v1715, %v1722
    %v1724 = vrot.slane %v1719, 4
    %v1725 = vsel %vm332, %v1724, %v1707
    %v1726 = vrot.slane %v1707, 4
    %v1727 = vsel %vm332, %v1719, %v1726
    %v1728 = vsel %vm332, %v1668, %v1649
    %v1730 = vunpack.c.l.s4 1983009808
    %v1731 = vunpack.c.0.s8 %v1730
    %v1732 = vperm.slane %v1728, %v1731
    %v1733 = vrot.slane %v1669, 4
    %v1734 = vsel %vm332, %v1733, %v1667
    %v1736 = vunpack.c.l.s4 1983009808
    %v1737 = vunpack.c.0.s8 %v1736
    %v1738 = vperm.slane %v1734, %v1737
    %v1739 = vsel %vm332, %v1672, %v1661
    %v1741 = vunpack.c.l.s4 1983009808
    %v1742 = vunpack.c.0.s8 %v1741
    %v1743 = vperm.slane %v1739, %v1742
    %v1744 = vrot.slane %v1673, 4
    %v1745 = vsel %vm332, %v1744, %v1671
    %v1747 = vunpack.c.l.s4 1983009808
    %v1748 = vunpack.c.0.s8 %v1747
    %v1749 = vperm.slane %v1745, %v1748
    %v1750 = vrot.slane %v1738, 4
    %v1751 = vsel %vm332, %v1750, %v1732
    %v1752 = vrot.slane %v1732, 4
    %v1753 = vsel %vm332, %v1738, %v1752
    %v1755 = vunpack.c.l.s4 1934713408
    %v1756 = vunpack.c.0.s8 %v1755
    %v1757 = vperm.slane %v1751, %v1756
    %v1759 = vunpack.c.l.s4 1934713408
    %v1760 = vunpack.c.0.s8 %v1759
    %v1761 = vperm.slane %v1753, %v1760
    %v1762 = vrot.slane %v1749, 4
    %v1763 = vsel %vm332, %v1762, %v1743
    %v1764 = vrot.slane %v1743, 4
    %v1765 = vsel %vm332, %v1749, %v1764
    %v1767 = vunpack.c.l.s4 1934713408
    %v1768 = vunpack.c.0.s8 %v1767
    %v1769 = vperm.slane %v1763, %v1768
    %v1771 = vunpack.c.l.s4 1934713408
    %v1772 = vunpack.c.0.s8 %v1771
    %v1773 = vperm.slane %v1765, %v1772
    %v1774 = vrot.slane %v1769, 4
    %v1775 = vsel %vm332, %v1774, %v1757
    %v1776 = vrot.slane %v1757, 4
    %v1777 = vsel %vm332, %v1769, %v1776
    %v1778 = vrot.slane %v1773, 4
    %v1779 = vsel %vm332, %v1778, %v1761
    %v1780 = vrot.slane %v1761, 4
    %v1781 = vsel %vm332, %v1773, %v1780
    %1784 = vrot.lane.b32.xlu0 %v1723, 8
    %v1785 = vpop.permute.xlu0 %1784
    %1786 = vrot.lane.b32.xlu0 %v1777, 8
    %v1787 = vpop.permute.xlu0 %1786
    %1792 = vrot.lane.b32.xlu0 %v1725, 16
    %v1793 = vpop.permute.xlu0 %1792
    %1794 = vrot.lane.b32.xlu0 %v1779, 16
    %v1795 = vpop.permute.xlu0 %1794
    %1800 = vrot.lane.b32.xlu0 %v1727, 24
    %v1801 = vpop.permute.xlu0 %1800
    %1802 = vrot.lane.b32.xlu0 %v1781, 24
    %v1803 = vpop.permute.xlu0 %1802
    %v1806 = vsel %vm1056, %v1721, %v1785
    %v1807 = vsel %vm1056, %v1775, %v1787
    %vm1808 = vcmask 130048
    %v1809 = vsel %vm1808, %v1806, %v1793
    %v1810 = vsel %vm1808, %v1807, %v1795
    %vm1811 = vcmask 195584
    %v1812 = vsel %vm1811, %v1809, %v1801
    %v1813 = vsel %vm1811, %v1810, %v1803
    %v1814 = vsel %vm1056, %v1295, 0.0
    %v1815 = vsel %vm1056, %v1310, 0.0
    %v1816 = vadd.f32 %v1814, %v1815
    %v1817 = vsel %vm1056, %v1325, 0.0
    %v1818 = vadd.f32 %v1816, %v1817
    %v1819 = vsel %vm1056, %v1340, 0.0
    %v1820 = vadd.f32 %v1818, %v1819
    %v1821 = vsel %vm1056, %v1355, 0.0
    %v1822 = vsel %vm1056, %v1370, 0.0
    %v1823 = vadd.f32 %v1821, %v1822
    %v1824 = vsel %vm1056, %v1385, 0.0
    %v1825 = vadd.f32 %v1823, %v1824
    %v1826 = vsel %vm1056, %v1400, 0.0
    %v1827 = vadd.f32 %v1825, %v1826
    %v1828 = vrcp.pop 4.0
    %v1829 = vmul.f32 4.0, %v1828
    %v1830 = vsub.f32 1.0, %v1829
    %v1831 = vmul.f32 %v1828, %v1830
    %v1832 = vadd.f32 %v1828, %v1831
    %vm1833 = vweird.f32 %v1828
    %v1834 = vsel %vm1833, %v1828, %v1832
    %v1835 = vmul.f32 %v1820, %v1834
    %v1836 = vmul.f32 %v1827, %v1834
    %v1837 = vpack.c.bf16 %v1813, %v1812
    %s1838 = scalar_lea.vmem [#allocation7], 48
    %v1839 = vld [vmem:[%s1838] sm:$0xf]
    %v1840 = vld [vmem:[%s1838 + $0x4] sm:$0xf]
    %v1841 = vld [vmem:[%s1838 + $0x8] sm:$0xf]
    %v1842 = vld [vmem:[%s1838 + $0xc] sm:$0xf]
    %v1843 = vperm.slane %v153, 3
    %v1848 = vunpack.c.l.b16 %v1839
    %v1849 = vunpack.c.l.b16 %v1840
    %v1850 = vunpack.c.l.b16 %v1841
    %v1851 = vunpack.c.l.b16 %v1842
    %v1852 = vpack.c.b16 %v1849, %v1848
    %v1853 = vpack.c.b16 %v1851, %v1850
    %v1857 = vsel %vm154, %v1837, 0
    %1859 = vmatpush.bf16.msra.mxu0 0
    %1860 = vmatpush.bf16.msra.mxu0 0
    %1861 = vmatpush.bf16.msra.mxu0 0
    %1862 = vmatpush.bf16.msra.mxu0 0
    %1863 = vmatpush.bf16.msra.mxu0 0
    %1864 = vmatpush.bf16.msra.mxu0 0
    %1865 = vmatpush.bf16.msra.mxu0 %v1853
    %1866 = vmatpush.bf16.msra.mxu0 %v1852
    %1867 = vmatmul.bf16.gmra.mxu0 %v1857
    %v1868 = vpop.f32.mrf.mxu0
    %v1869 = vadd.f32 %v1843, %v1868
    %v1870 = vpop.f32.mrf.mxu0
    %v1871 = vadd.f32 %v1843, %v1870
    %1872 = vdwg.mxu0
    %1873 = vst.msk [vmem:[#allocation15] sm:$0xff] %vm1056, %v1835
    %1874 = vst.msk [vmem:[#allocation15 + $0x8] sm:$0xff] %vm1056, %v1836
    %v1875 = vadd.f32 %v1869, %v210
    %v1876 = vadd.f32 %v1871, %v211
    %v1877 = vsel %vm154, %v149, 0.0
    %1878 = vadd.xlane.f32.xlu0 %v1877
    %v1879 = vpop.xlane.xlu0 %1878
    %v1880 = vsel %vm154, %v150, 0.0
    %1881 = vadd.xlane.f32.xlu0 %v1880
    %v1882 = vpop.xlane.xlu0 %1881
    %v1883 = vmul.f32 %v1879, %v167
    %v1884 = vmul.f32 %v1882, %v167
    %v1885 = vsub.f32 %v149, %v1883
    %v1886 = vsub.f32 %v150, %v1884
    %v1887 = vmul.f32 %v1885, %v1885
    %v1888 = vmul.f32 %v1886, %v1886
    %v1889 = vsel %vm154, %v1887, 0.0
    %1890 = vadd.xlane.f32.xlu0 %v1889
    %v1891 = vpop.xlane.xlu0 %1890
    %v1892 = vsel %vm154, %v1888, 0.0
    %1893 = vadd.xlane.f32.xlu0 %v1892
    %v1894 = vpop.xlane.xlu0 %1893
    %v1895 = vmul.f32 %v1891, %v167
    %v1896 = vmul.f32 %v1894, %v167
    %v1897 = vadd.f32 %v1895, 1e-05
    %v1898 = vadd.f32 %v1896, 1e-05
    %v1899 = vrsqrt.pop %v1897
    %v1900 = vmul.f32 %v1899, %v1897
    %v1901 = vmul.f32 %v1900, %v1899
    %v1902 = vmul.f32 0.5, %v1901
    %v1903 = vsub.f32 1.5, %v1902
    %v1904 = vmul.f32 %v1899, %v1903
    %vm1905 = vweird.f32 %v1897
    %vm1906 = vweird.f32 %v1899
    %vm1907 = vmor %vm1905, %vm1906
    %v1908 = vsel %vm1907, %v1899, %v1904
    %v1909 = vrsqrt.pop %v1898
    %v1910 = vmul.f32 %v1909, %v1898
    %v1911 = vmul.f32 %v1910, %v1909
    %v1912 = vmul.f32 0.5, %v1911
    %v1913 = vsub.f32 1.5, %v1912
    %v1914 = vmul.f32 %v1909, %v1913
    %vm1915 = vweird.f32 %v1898
    %vm1916 = vweird.f32 %v1909
    %vm1917 = vmor %vm1915, %vm1916
    %v1918 = vsel %vm1917, %v1909, %v1914
    %v1919 = vmul.f32 %v1885, %v1908
    %v1920 = vmul.f32 %v1886, %v1918
    %v1921 = vperm.slane %v152, 2
    %v1922 = vmul.f32 %v1919, %v1921
    %v1923 = vmul.f32 %v1920, %v1921
    %v1924 = vperm.slane %v152, 3
    %v1925 = vadd.f32 %v1922, %v1924
    %v1926 = vadd.f32 %v1923, %v1924
    %v1927 = vsel %vm154, %v1875, 0.0
    %1928 = vadd.xlane.f32.xlu0 %v1927
    %v1929 = vpop.xlane.xlu0 %1928
    %v1930 = vsel %vm154, %v1876, 0.0
    %1931 = vadd.xlane.f32.xlu0 %v1930
    %v1932 = vpop.xlane.xlu0 %1931
    %v1933 = vmul.f32 %v1929, %v167
    %v1934 = vmul.f32 %v1932, %v167
    %v1935 = vsub.f32 %v1875, %v1933
    %v1936 = vsub.f32 %v1876, %v1934
    %v1937 = vmul.f32 %v1935, %v1935
    %v1938 = vmul.f32 %v1936, %v1936
    %v1939 = vsel %vm154, %v1937, 0.0
    %1940 = vadd.xlane.f32.xlu0 %v1939
    %v1941 = vpop.xlane.xlu0 %1940
    %v1942 = vsel %vm154, %v1938, 0.0
    %1943 = vadd.xlane.f32.xlu0 %v1942
    %v1944 = vpop.xlane.xlu0 %1943
    %v1945 = vmul.f32 %v1941, %v167
    %v1946 = vmul.f32 %v1944, %v167
    %v1947 = vadd.f32 %v1945, 1e-05
    %v1948 = vadd.f32 %v1946, 1e-05
    %v1949 = vrsqrt.pop %v1947
    %v1950 = vmul.f32 %v1949, %v1947
    %v1951 = vmul.f32 %v1950, %v1949
    %v1952 = vmul.f32 0.5, %v1951
    %v1953 = vsub.f32 1.5, %v1952
    %v1954 = vmul.f32 %v1949, %v1953
    %vm1955 = vweird.f32 %v1947
    %vm1956 = vweird.f32 %v1949
    %vm1957 = vmor %vm1955, %vm1956
    %v1958 = vsel %vm1957, %v1949, %v1954
    %v1959 = vrsqrt.pop %v1948
    %v1960 = vmul.f32 %v1959, %v1948
    %v1961 = vmul.f32 %v1960, %v1959
    %v1962 = vmul.f32 0.5, %v1961
    %v1963 = vsub.f32 1.5, %v1962
    %v1964 = vmul.f32 %v1959, %v1963
    %vm1965 = vweird.f32 %v1948
    %vm1966 = vweird.f32 %v1959
    %vm1967 = vmor %vm1965, %vm1966
    %v1968 = vsel %vm1967, %v1959, %v1964
    %v1969 = vmul.f32 %v1935, %v1958
    %v1970 = vmul.f32 %v1936, %v1968
    %v1971 = vperm.slane %v152, 4
    %v1972 = vmul.f32 %v1969, %v1971
    %v1973 = vmul.f32 %v1970, %v1971
    %v1974 = vperm.slane %v152, 5
    %v1975 = vadd.f32 %v1972, %v1974
    %v1976 = vadd.f32 %v1973, %v1974
    %v1977 = vpack.c.bf16 %v1926, %v1925
    %v1978 = vpack.c.bf16 %v1976, %v1975
    %s1979 = scalar_lea.vmem [#allocation7], 64
    %v1980 = vld [vmem:[%s1979] sm:$0xf]
    %v1981 = vld [vmem:[%s1979 + $0x4] sm:$0xf]
    %v1982 = vld [vmem:[%s1979 + $0x8] sm:$0xf]
    %v1983 = vld [vmem:[%s1979 + $0xc] sm:$0xf]
    %v1984 = vperm.slane %v153, 4
    %v1989 = vunpack.c.l.b16 %v1980
    %v1990 = vunpack.c.l.b16 %v1981
    %v1991 = vunpack.c.l.b16 %v1982
    %v1992 = vunpack.c.l.b16 %v1983
    %v1993 = vpack.c.b16 %v1990, %v1989
    %v1994 = vpack.c.b16 %v1992, %v1991
    %v1998 = vsel %vm154, %v1978, 0
    %2000 = vmatpush.bf16.msra.mxu0 0
    %2001 = vmatpush.bf16.msra.mxu0 0
    %2002 = vmatpush.bf16.msra.mxu0 0
    %2003 = vmatpush.bf16.msra.mxu0 0
    %2004 = vmatpush.bf16.msra.mxu0 0
    %2005 = vmatpush.bf16.msra.mxu0 0
    %2006 = vmatpush.bf16.msra.mxu0 %v1994
    %2007 = vmatpush.bf16.msra.mxu0 %v1993
    %2008 = vmatmul.bf16.gmra.mxu0 %v1998
    %v2009 = vpop.f32.mrf.mxu0
    %v2010 = vadd.f32 %v1984, %v2009
    %v2011 = vpop.f32.mrf.mxu0
    %v2012 = vadd.f32 %v1984, %v2011
    %2013 = vdwg.mxu0
    %s2014 = scalar_lea.vmem [#allocation7], 80
    %v2015 = vld [vmem:[%s2014] sm:$0xf]
    %v2016 = vld [vmem:[%s2014 + $0x4] sm:$0xf]
    %v2017 = vld [vmem:[%s2014 + $0x8] sm:$0xf]
    %v2018 = vld [vmem:[%s2014 + $0xc] sm:$0xf]
    %v2019 = vperm.slane %v153, 5
    %v2024 = vunpack.c.l.b16 %v2015
    %v2025 = vunpack.c.l.b16 %v2016
    %v2026 = vunpack.c.l.b16 %v2017
    %v2027 = vunpack.c.l.b16 %v2018
    %v2028 = vpack.c.b16 %v2025, %v2024
    %v2029 = vpack.c.b16 %v2027, %v2026
    %v2033 = vsel %vm154, %v1977, 0
    %2035 = vmatpush.bf16.msra.mxu0 0
    %2036 = vmatpush.bf16.msra.mxu0 0
    %2037 = vmatpush.bf16.msra.mxu0 0
    %2038 = vmatpush.bf16.msra.mxu0 0
    %2039 = vmatpush.bf16.msra.mxu0 0
    %2040 = vmatpush.bf16.msra.mxu0 0
    %2041 = vmatpush.bf16.msra.mxu0 %v2029
    %2042 = vmatpush.bf16.msra.mxu0 %v2028
    %2043 = vmatmul.bf16.gmra.mxu0 %v2033
    %v2044 = vpop.f32.mrf.mxu0
    %v2045 = vadd.f32 %v2019, %v2044
    %v2046 = vpop.f32.mrf.mxu0
    %v2047 = vadd.f32 %v2019, %v2046
    %2048 = vdwg.mxu0
    %s2049 = scalar_lea.vmem [#allocation7], 96
    %v2050 = vld [vmem:[%s2049] sm:$0xf]
    %v2051 = vld [vmem:[%s2049 + $0x4] sm:$0xf]
    %v2052 = vld [vmem:[%s2049 + $0x8] sm:$0xf]
    %v2053 = vld [vmem:[%s2049 + $0xc] sm:$0xf]
    %v2054 = vperm.slane %v153, 6
    %v2059 = vunpack.c.l.b16 %v2050
    %v2060 = vunpack.c.l.b16 %v2051
    %v2061 = vunpack.c.l.b16 %v2052
    %v2062 = vunpack.c.l.b16 %v2053
    %v2063 = vpack.c.b16 %v2060, %v2059
    %v2064 = vpack.c.b16 %v2062, %v2061
    %2067 = vmatpush.bf16.msra.mxu0 0
    %2068 = vmatpush.bf16.msra.mxu0 0
    %2069 = vmatpush.bf16.msra.mxu0 0
    %2070 = vmatpush.bf16.msra.mxu0 0
    %2071 = vmatpush.bf16.msra.mxu0 0
    %2072 = vmatpush.bf16.msra.mxu0 0
    %2073 = vmatpush.bf16.msra.mxu0 %v2064
    %2074 = vmatpush.bf16.msra.mxu0 %v2063
    %2075 = vmatmul.bf16.gmra.mxu0 %v2033
    %v2076 = vpop.f32.mrf.mxu0
    %v2077 = vadd.f32 %v2054, %v2076
    %v2078 = vpop.f32.mrf.mxu0
    %v2079 = vadd.f32 %v2054, %v2078
    %2080 = vdwg.mxu0
    %2083 = vrot.lane.b32.xlu0 %v2010, 120
    %v2084 = vpop.permute.xlu0 %2083
    %2085 = vrot.lane.b32.xlu0 %v2012, 120
    %v2086 = vpop.permute.xlu0 %2085
    %2089 = vrot.lane.b32.xlu0 %v2010, 112
    %v2090 = vpop.permute.xlu0 %2089
    %2091 = vrot.lane.b32.xlu0 %v2012, 112
    %v2092 = vpop.permute.xlu0 %2091
    %2095 = vrot.lane.b32.xlu0 %v2010, 104
    %v2096 = vpop.permute.xlu0 %2095
    %2097 = vrot.lane.b32.xlu0 %v2012, 104
    %v2098 = vpop.permute.xlu0 %2097
    %v2101 = vrot.slane %v2090, 4
    %v2102 = vsel %vm332, %v2101, %v2010
    %v2103 = vrot.slane %v2010, 4
    %v2104 = vsel %vm332, %v2090, %v2103
    %v2106 = vunpack.c.l.s4 1983009808
    %v2107 = vunpack.c.0.s8 %v2106
    %v2108 = vperm.slane %v2102, %v2107
    %v2110 = vunpack.c.l.s4 1983009808
    %v2111 = vunpack.c.0.s8 %v2110
    %v2112 = vperm.slane %v2104, %v2111
    %v2113 = vrot.slane %v2096, 4
    %v2114 = vsel %vm332, %v2113, %v2084
    %v2115 = vrot.slane %v2084, 4
    %v2116 = vsel %vm332, %v2096, %v2115
    %v2118 = vunpack.c.l.s4 1983009808
    %v2119 = vunpack.c.0.s8 %v2118
    %v2120 = vperm.slane %v2114, %v2119
    %v2122 = vunpack.c.l.s4 1983009808
    %v2123 = vunpack.c.0.s8 %v2122
    %v2124 = vperm.slane %v2116, %v2123
    %v2125 = vrot.slane %v2120, 4
    %v2126 = vsel %vm332, %v2125, %v2108
    %v2127 = vrot.slane %v2108, 4
    %v2128 = vsel %vm332, %v2120, %v2127
    %v2130 = vunpack.c.l.s4 1934713408
    %v2131 = vunpack.c.0.s8 %v2130
    %v2132 = vperm.slane %v2126, %v2131
    %v2134 = vunpack.c.l.s4 1934713408
    %v2135 = vunpack.c.0.s8 %v2134
    %v2136 = vperm.slane %v2128, %v2135
    %v2137 = vrot.slane %v2124, 4
    %v2138 = vsel %vm332, %v2137, %v2112
    %v2139 = vrot.slane %v2112, 4
    %v2140 = vsel %vm332, %v2124, %v2139
    %v2142 = vunpack.c.l.s4 1934713408
    %v2143 = vunpack.c.0.s8 %v2142
    %v2144 = vperm.slane %v2138, %v2143
    %v2146 = vunpack.c.l.s4 1934713408
    %v2147 = vunpack.c.0.s8 %v2146
    %v2148 = vperm.slane %v2140, %v2147
    %v2149 = vrot.slane %v2132, 4
    %v2150 = vsel %vm332, 0.0, %v2149
    %v2151 = vrot.slane %v2136, 4
    %v2152 = vsel %vm332, 0.0, %v2151
    %v2153 = vrot.slane %v2144, 4
    %v2154 = vsel %vm332, 0.0, %v2153
    %v2155 = vrot.slane %v2148, 4
    %v2156 = vsel %vm332, 0.0, %v2155
    %v2157 = vrot.slane %v2092, 4
    %v2158 = vsel %vm332, %v2157, %v2012
    %v2159 = vrot.slane %v2012, 4
    %v2160 = vsel %vm332, %v2092, %v2159
    %v2162 = vunpack.c.l.s4 1983009808
    %v2163 = vunpack.c.0.s8 %v2162
    %v2164 = vperm.slane %v2158, %v2163
    %v2166 = vunpack.c.l.s4 1983009808
    %v2167 = vunpack.c.0.s8 %v2166
    %v2168 = vperm.slane %v2160, %v2167
    %v2169 = vrot.slane %v2098, 4
    %v2170 = vsel %vm332, %v2169, %v2086
    %v2171 = vrot.slane %v2086, 4
    %v2172 = vsel %vm332, %v2098, %v2171
    %v2174 = vunpack.c.l.s4 1983009808
    %v2175 = vunpack.c.0.s8 %v2174
    %v2176 = vperm.slane %v2170, %v2175
    %v2178 = vunpack.c.l.s4 1983009808
    %v2179 = vunpack.c.0.s8 %v2178
    %v2180 = vperm.slane %v2172, %v2179
    %v2181 = vrot.slane %v2176, 4
    %v2182 = vsel %vm332, %v2181, %v2164
    %v2183 = vrot.slane %v2164, 4
    %v2184 = vsel %vm332, %v2176, %v2183
    %v2186 = vunpack.c.l.s4 1934713408
    %v2187 = vunpack.c.0.s8 %v2186
    %v2188 = vperm.slane %v2182, %v2187
    %v2190 = vunpack.c.l.s4 1934713408
    %v2191 = vunpack.c.0.s8 %v2190
    %v2192 = vperm.slane %v2184, %v2191
    %v2193 = vrot.slane %v2180, 4
    %v2194 = vsel %vm332, %v2193, %v2168
    %v2195 = vrot.slane %v2168, 4
    %v2196 = vsel %vm332, %v2180, %v2195
    %v2198 = vunpack.c.l.s4 1934713408
    %v2199 = vunpack.c.0.s8 %v2198
    %v2200 = vperm.slane %v2194, %v2199
    %v2202 = vunpack.c.l.s4 1934713408
    %v2203 = vunpack.c.0.s8 %v2202
    %v2204 = vperm.slane %v2196, %v2203
    %v2205 = vrot.slane %v2188, 4
    %v2206 = vsel %vm332, 0.0, %v2205
    %v2207 = vrot.slane %v2192, 4
    %v2208 = vsel %vm332, 0.0, %v2207
    %v2209 = vrot.slane %v2200, 4
    %v2210 = vsel %vm332, 0.0, %v2209
    %v2211 = vrot.slane %v2204, 4
    %v2212 = vsel %vm332, 0.0, %v2211
    %v2213 = vsel %vm332, %v2151, %v2132
    %v2215 = vunpack.c.l.s4 1983009808
    %v2216 = vunpack.c.0.s8 %v2215
    %v2217 = vperm.slane %v2213, %v2216
    %v2218 = vrot.slane %v2152, 4
    %v2219 = vsel %vm332, %v2218, %v2150
    %v2221 = vunpack.c.l.s4 1983009808
    %v2222 = vunpack.c.0.s8 %v2221
    %v2223 = vperm.slane %v2219, %v2222
    %v2224 = vsel %vm332, %v2155, %v2144
    %v2226 = vunpack.c.l.s4 1983009808
    %v2227 = vunpack.c.0.s8 %v2226
    %v2228 = vperm.slane %v2224, %v2227
    %v2229 = vrot.slane %v2156, 4
    %v2230 = vsel %vm332, %v2229, %v2154
    %v2232 = vunpack.c.l.s4 1983009808
    %v2233 = vunpack.c.0.s8 %v2232
    %v2234 = vperm.slane %v2230, %v2233
    %v2235 = vrot.slane %v2223, 4
    %v2236 = vsel %vm332, %v2235, %v2217
    %v2237 = vrot.slane %v2217, 4
    %v2238 = vsel %vm332, %v2223, %v2237
    %v2240 = vunpack.c.l.s4 1934713408
    %v2241 = vunpack.c.0.s8 %v2240
    %v2242 = vperm.slane %v2236, %v2241
    %v2244 = vunpack.c.l.s4 1934713408
    %v2245 = vunpack.c.0.s8 %v2244
    %v2246 = vperm.slane %v2238, %v2245
    %v2247 = vrot.slane %v2234, 4
    %v2248 = vsel %vm332, %v2247, %v2228
    %v2249 = vrot.slane %v2228, 4
    %v2250 = vsel %vm332, %v2234, %v2249
    %v2252 = vunpack.c.l.s4 1934713408
    %v2253 = vunpack.c.0.s8 %v2252
    %v2254 = vperm.slane %v2248, %v2253
    %v2256 = vunpack.c.l.s4 1934713408
    %v2257 = vunpack.c.0.s8 %v2256
    %v2258 = vperm.slane %v2250, %v2257
    %v2259 = vrot.slane %v2254, 4
    %v2260 = vsel %vm332, %v2259, %v2242
    %v2261 = vrot.slane %v2242, 4
    %v2262 = vsel %vm332, %v2254, %v2261
    %v2263 = vrot.slane %v2258, 4
    %v2264 = vsel %vm332, %v2263, %v2246
    %v2265 = vrot.slane %v2246, 4
    %v2266 = vsel %vm332, %v2258, %v2265
    %v2267 = vsel %vm332, %v2207, %v2188
    %v2269 = vunpack.c.l.s4 1983009808
    %v2270 = vunpack.c.0.s8 %v2269
    %v2271 = vperm.slane %v2267, %v2270
    %v2272 = vrot.slane %v2208, 4
    %v2273 = vsel %vm332, %v2272, %v2206
    %v2275 = vunpack.c.l.s4 1983009808
    %v2276 = vunpack.c.0.s8 %v2275
    %v2277 = vperm.slane %v2273, %v2276
    %v2278 = vsel %vm332, %v2211, %v2200
    %v2280 = vunpack.c.l.s4 1983009808
    %v2281 = vunpack.c.0.s8 %v2280
    %v2282 = vperm.slane %v2278, %v2281
    %v2283 = vrot.slane %v2212, 4
    %v2284 = vsel %vm332, %v2283, %v2210
    %v2286 = vunpack.c.l.s4 1983009808
    %v2287 = vunpack.c.0.s8 %v2286
    %v2288 = vperm.slane %v2284, %v2287
    %v2289 = vrot.slane %v2277, 4
    %v2290 = vsel %vm332, %v2289, %v2271
    %v2291 = vrot.slane %v2271, 4
    %v2292 = vsel %vm332, %v2277, %v2291
    %v2294 = vunpack.c.l.s4 1934713408
    %v2295 = vunpack.c.0.s8 %v2294
    %v2296 = vperm.slane %v2290, %v2295
    %v2298 = vunpack.c.l.s4 1934713408
    %v2299 = vunpack.c.0.s8 %v2298
    %v2300 = vperm.slane %v2292, %v2299
    %v2301 = vrot.slane %v2288, 4
    %v2302 = vsel %vm332, %v2301, %v2282
    %v2303 = vrot.slane %v2282, 4
    %v2304 = vsel %vm332, %v2288, %v2303
    %v2306 = vunpack.c.l.s4 1934713408
    %v2307 = vunpack.c.0.s8 %v2306
    %v2308 = vperm.slane %v2302, %v2307
    %v2310 = vunpack.c.l.s4 1934713408
    %v2311 = vunpack.c.0.s8 %v2310
    %v2312 = vperm.slane %v2304, %v2311
    %v2313 = vrot.slane %v2308, 4
    %v2314 = vsel %vm332, %v2313, %v2296
    %v2315 = vrot.slane %v2296, 4
    %v2316 = vsel %vm332, %v2308, %v2315
    %v2317 = vrot.slane %v2312, 4
    %v2318 = vsel %vm332, %v2317, %v2300
    %v2319 = vrot.slane %v2300, 4
    %v2320 = vsel %vm332, %v2312, %v2319
    %v2321 = vpack.c.bf16 %v2260, %v2260
    %v2322 = vpack.c.bf16 %v2262, %v2262
    %v2323 = vpack.c.bf16 %v2264, %v2264
    %v2324 = vpack.c.bf16 %v2266, %v2266
    %v2325 = vpack.c.bf16 %v2314, %v2314
    %v2326 = vpack.c.bf16 %v2316, %v2316
    %v2327 = vpack.c.bf16 %v2318, %v2318
    %v2328 = vpack.c.bf16 %v2320, %v2320
    %2331 = vrot.lane.b32.xlu0 %v2045, 120
    %v2332 = vpop.permute.xlu0 %2331
    %2333 = vrot.lane.b32.xlu0 %v2047, 120
    %v2334 = vpop.permute.xlu0 %2333
    %2337 = vrot.lane.b32.xlu0 %v2045, 112
    %v2338 = vpop.permute.xlu0 %2337
    %2339 = vrot.lane.b32.xlu0 %v2047, 112
    %v2340 = vpop.permute.xlu0 %2339
    %2343 = vrot.lane.b32.xlu0 %v2045, 104
    %v2344 = vpop.permute.xlu0 %2343
    %2345 = vrot.lane.b32.xlu0 %v2047, 104
    %v2346 = vpop.permute.xlu0 %2345
    %v2349 = vrot.slane %v2338, 4
    %v2350 = vsel %vm332, %v2349, %v2045
    %v2351 = vrot.slane %v2045, 4
    %v2352 = vsel %vm332, %v2338, %v2351
    %v2354 = vunpack.c.l.s4 1983009808
    %v2355 = vunpack.c.0.s8 %v2354
    %v2356 = vperm.slane %v2350, %v2355
    %v2358 = vunpack.c.l.s4 1983009808
    %v2359 = vunpack.c.0.s8 %v2358
    %v2360 = vperm.slane %v2352, %v2359
    %v2361 = vrot.slane %v2344, 4
    %v2362 = vsel %vm332, %v2361, %v2332
    %v2363 = vrot.slane %v2332, 4
    %v2364 = vsel %vm332, %v2344, %v2363
    %v2366 = vunpack.c.l.s4 1983009808
    %v2367 = vunpack.c.0.s8 %v2366
    %v2368 = vperm.slane %v2362, %v2367
    %v2370 = vunpack.c.l.s4 1983009808
    %v2371 = vunpack.c.0.s8 %v2370
    %v2372 = vperm.slane %v2364, %v2371
    %v2373 = vrot.slane %v2368, 4
    %v2374 = vsel %vm332, %v2373, %v2356
    %v2375 = vrot.slane %v2356, 4
    %v2376 = vsel %vm332, %v2368, %v2375
    %v2378 = vunpack.c.l.s4 1934713408
    %v2379 = vunpack.c.0.s8 %v2378
    %v2380 = vperm.slane %v2374, %v2379
    %v2382 = vunpack.c.l.s4 1934713408
    %v2383 = vunpack.c.0.s8 %v2382
    %v2384 = vperm.slane %v2376, %v2383
    %v2385 = vrot.slane %v2372, 4
    %v2386 = vsel %vm332, %v2385, %v2360
    %v2387 = vrot.slane %v2360, 4
    %v2388 = vsel %vm332, %v2372, %v2387
    %v2390 = vunpack.c.l.s4 1934713408
    %v2391 = vunpack.c.0.s8 %v2390
    %v2392 = vperm.slane %v2386, %v2391
    %v2394 = vunpack.c.l.s4 1934713408
    %v2395 = vunpack.c.0.s8 %v2394
    %v2396 = vperm.slane %v2388, %v2395
    %v2397 = vrot.slane %v2380, 4
    %v2398 = vsel %vm332, 0.0, %v2397
    %v2399 = vrot.slane %v2384, 4
    %v2400 = vsel %vm332, 0.0, %v2399
    %v2401 = vrot.slane %v2392, 4
    %v2402 = vsel %vm332, 0.0, %v2401
    %v2403 = vrot.slane %v2396, 4
    %v2404 = vsel %vm332, 0.0, %v2403
    %v2405 = vrot.slane %v2340, 4
    %v2406 = vsel %vm332, %v2405, %v2047
    %v2407 = vrot.slane %v2047, 4
    %v2408 = vsel %vm332, %v2340, %v2407
    %v2410 = vunpack.c.l.s4 1983009808
    %v2411 = vunpack.c.0.s8 %v2410
    %v2412 = vperm.slane %v2406, %v2411
    %v2414 = vunpack.c.l.s4 1983009808
    %v2415 = vunpack.c.0.s8 %v2414
    %v2416 = vperm.slane %v2408, %v2415
    %v2417 = vrot.slane %v2346, 4
    %v2418 = vsel %vm332, %v2417, %v2334
    %v2419 = vrot.slane %v2334, 4
    %v2420 = vsel %vm332, %v2346, %v2419
    %v2422 = vunpack.c.l.s4 1983009808
    %v2423 = vunpack.c.0.s8 %v2422
    %v2424 = vperm.slane %v2418, %v2423
    %v2426 = vunpack.c.l.s4 1983009808
    %v2427 = vunpack.c.0.s8 %v2426
    %v2428 = vperm.slane %v2420, %v2427
    %v2429 = vrot.slane %v2424, 4
    %v2430 = vsel %vm332, %v2429, %v2412
    %v2431 = vrot.slane %v2412, 4
    %v2432 = vsel %vm332, %v2424, %v2431
    %v2434 = vunpack.c.l.s4 1934713408
    %v2435 = vunpack.c.0.s8 %v2434
    %v2436 = vperm.slane %v2430, %v2435
    %v2438 = vunpack.c.l.s4 1934713408
    %v2439 = vunpack.c.0.s8 %v2438
    %v2440 = vperm.slane %v2432, %v2439
    %v2441 = vrot.slane %v2428, 4
    %v2442 = vsel %vm332, %v2441, %v2416
    %v2443 = vrot.slane %v2416, 4
    %v2444 = vsel %vm332, %v2428, %v2443
    %v2446 = vunpack.c.l.s4 1934713408
    %v2447 = vunpack.c.0.s8 %v2446
    %v2448 = vperm.slane %v2442, %v2447
    %v2450 = vunpack.c.l.s4 1934713408
    %v2451 = vunpack.c.0.s8 %v2450
    %v2452 = vperm.slane %v2444, %v2451
    %v2453 = vrot.slane %v2436, 4
    %v2454 = vsel %vm332, 0.0, %v2453
    %v2455 = vrot.slane %v2440, 4
    %v2456 = vsel %vm332, 0.0, %v2455
    %v2457 = vrot.slane %v2448, 4
    %v2458 = vsel %vm332, 0.0, %v2457
    %v2459 = vrot.slane %v2452, 4
    %v2460 = vsel %vm332, 0.0, %v2459
    %v2461 = vsel %vm332, %v2399, %v2380
    %v2463 = vunpack.c.l.s4 1983009808
    %v2464 = vunpack.c.0.s8 %v2463
    %v2465 = vperm.slane %v2461, %v2464
    %v2466 = vrot.slane %v2400, 4
    %v2467 = vsel %vm332, %v2466, %v2398
    %v2469 = vunpack.c.l.s4 1983009808
    %v2470 = vunpack.c.0.s8 %v2469
    %v2471 = vperm.slane %v2467, %v2470
    %v2472 = vsel %vm332, %v2403, %v2392
    %v2474 = vunpack.c.l.s4 1983009808
    %v2475 = vunpack.c.0.s8 %v2474
    %v2476 = vperm.slane %v2472, %v2475
    %v2477 = vrot.slane %v2404, 4
    %v2478 = vsel %vm332, %v2477, %v2402
    %v2480 = vunpack.c.l.s4 1983009808
    %v2481 = vunpack.c.0.s8 %v2480
    %v2482 = vperm.slane %v2478, %v2481
    %v2483 = vrot.slane %v2471, 4
    %v2484 = vsel %vm332, %v2483, %v2465
    %v2485 = vrot.slane %v2465, 4
    %v2486 = vsel %vm332, %v2471, %v2485
    %v2488 = vunpack.c.l.s4 1934713408
    %v2489 = vunpack.c.0.s8 %v2488
    %v2490 = vperm.slane %v2484, %v2489
    %v2492 = vunpack.c.l.s4 1934713408
    %v2493 = vunpack.c.0.s8 %v2492
    %v2494 = vperm.slane %v2486, %v2493
    %v2495 = vrot.slane %v2482, 4
    %v2496 = vsel %vm332, %v2495, %v2476
    %v2497 = vrot.slane %v2476, 4
    %v2498 = vsel %vm332, %v2482, %v2497
    %v2500 = vunpack.c.l.s4 1934713408
    %v2501 = vunpack.c.0.s8 %v2500
    %v2502 = vperm.slane %v2496, %v2501
    %v2504 = vunpack.c.l.s4 1934713408
    %v2505 = vunpack.c.0.s8 %v2504
    %v2506 = vperm.slane %v2498, %v2505
    %v2507 = vrot.slane %v2502, 4
    %v2508 = vsel %vm332, %v2507, %v2490
    %v2509 = vrot.slane %v2490, 4
    %v2510 = vsel %vm332, %v2502, %v2509
    %v2511 = vrot.slane %v2506, 4
    %v2512 = vsel %vm332, %v2511, %v2494
    %v2513 = vrot.slane %v2494, 4
    %v2514 = vsel %vm332, %v2506, %v2513
    %v2515 = vsel %vm332, %v2455, %v2436
    %v2517 = vunpack.c.l.s4 1983009808
    %v2518 = vunpack.c.0.s8 %v2517
    %v2519 = vperm.slane %v2515, %v2518
    %v2520 = vrot.slane %v2456, 4
    %v2521 = vsel %vm332, %v2520, %v2454
    %v2523 = vunpack.c.l.s4 1983009808
    %v2524 = vunpack.c.0.s8 %v2523
    %v2525 = vperm.slane %v2521, %v2524
    %v2526 = vsel %vm332, %v2459, %v2448
    %v2528 = vunpack.c.l.s4 1983009808
    %v2529 = vunpack.c.0.s8 %v2528
    %v2530 = vperm.slane %v2526, %v2529
    %v2531 = vrot.slane %v2460, 4
    %v2532 = vsel %vm332, %v2531, %v2458
    %v2534 = vunpack.c.l.s4 1983009808
    %v2535 = vunpack.c.0.s8 %v2534
    %v2536 = vperm.slane %v2532, %v2535
    %v2537 = vrot.slane %v2525, 4
    %v2538 = vsel %vm332, %v2537, %v2519
    %v2539 = vrot.slane %v2519, 4
    %v2540 = vsel %vm332, %v2525, %v2539
    %v2542 = vunpack.c.l.s4 1934713408
    %v2543 = vunpack.c.0.s8 %v2542
    %v2544 = vperm.slane %v2538, %v2543
    %v2546 = vunpack.c.l.s4 1934713408
    %v2547 = vunpack.c.0.s8 %v2546
    %v2548 = vperm.slane %v2540, %v2547
    %v2549 = vrot.slane %v2536, 4
    %v2550 = vsel %vm332, %v2549, %v2530
    %v2551 = vrot.slane %v2530, 4
    %v2552 = vsel %vm332, %v2536, %v2551
    %v2554 = vunpack.c.l.s4 1934713408
    %v2555 = vunpack.c.0.s8 %v2554
    %v2556 = vperm.slane %v2550, %v2555
    %v2558 = vunpack.c.l.s4 1934713408
    %v2559 = vunpack.c.0.s8 %v2558
    %v2560 = vperm.slane %v2552, %v2559
    %v2561 = vrot.slane %v2556, 4
    %v2562 = vsel %vm332, %v2561, %v2544
    %v2563 = vrot.slane %v2544, 4
    %v2564 = vsel %vm332, %v2556, %v2563
    %v2565 = vrot.slane %v2560, 4
    %v2566 = vsel %vm332, %v2565, %v2548
    %v2567 = vrot.slane %v2548, 4
    %v2568 = vsel %vm332, %v2560, %v2567
    %v2569 = vpack.c.bf16 %v2508, %v2508
    %v2570 = vpack.c.bf16 %v2510, %v2510
    %v2571 = vpack.c.bf16 %v2512, %v2512
    %v2572 = vpack.c.bf16 %v2514, %v2514
    %v2573 = vpack.c.bf16 %v2562, %v2562
    %v2574 = vpack.c.bf16 %v2564, %v2564
    %v2575 = vpack.c.bf16 %v2566, %v2566
    %v2576 = vpack.c.bf16 %v2568, %v2568
    %2579 = vrot.lane.b32.xlu0 %v2077, 120
    %v2580 = vpop.permute.xlu0 %2579
    %2581 = vrot.lane.b32.xlu0 %v2079, 120
    %v2582 = vpop.permute.xlu0 %2581
    %2585 = vrot.lane.b32.xlu0 %v2077, 112
    %v2586 = vpop.permute.xlu0 %2585
    %2587 = vrot.lane.b32.xlu0 %v2079, 112
    %v2588 = vpop.permute.xlu0 %2587
    %2591 = vrot.lane.b32.xlu0 %v2077, 104
    %v2592 = vpop.permute.xlu0 %2591
    %2593 = vrot.lane.b32.xlu0 %v2079, 104
    %v2594 = vpop.permute.xlu0 %2593
    %v2597 = vrot.slane %v2586, 4
    %v2598 = vsel %vm332, %v2597, %v2077
    %v2599 = vrot.slane %v2077, 4
    %v2600 = vsel %vm332, %v2586, %v2599
    %v2602 = vunpack.c.l.s4 1983009808
    %v2603 = vunpack.c.0.s8 %v2602
    %v2604 = vperm.slane %v2598, %v2603
    %v2606 = vunpack.c.l.s4 1983009808
    %v2607 = vunpack.c.0.s8 %v2606
    %v2608 = vperm.slane %v2600, %v2607
    %v2609 = vrot.slane %v2592, 4
    %v2610 = vsel %vm332, %v2609, %v2580
    %v2611 = vrot.slane %v2580, 4
    %v2612 = vsel %vm332, %v2592, %v2611
    %v2614 = vunpack.c.l.s4 1983009808
    %v2615 = vunpack.c.0.s8 %v2614
    %v2616 = vperm.slane %v2610, %v2615
    %v2618 = vunpack.c.l.s4 1983009808
    %v2619 = vunpack.c.0.s8 %v2618
    %v2620 = vperm.slane %v2612, %v2619
    %v2621 = vrot.slane %v2616, 4
    %v2622 = vsel %vm332, %v2621, %v2604
    %v2623 = vrot.slane %v2604, 4
    %v2624 = vsel %vm332, %v2616, %v2623
    %v2626 = vunpack.c.l.s4 1934713408
    %v2627 = vunpack.c.0.s8 %v2626
    %v2628 = vperm.slane %v2622, %v2627
    %v2630 = vunpack.c.l.s4 1934713408
    %v2631 = vunpack.c.0.s8 %v2630
    %v2632 = vperm.slane %v2624, %v2631
    %v2633 = vrot.slane %v2620, 4
    %v2634 = vsel %vm332, %v2633, %v2608
    %v2635 = vrot.slane %v2608, 4
    %v2636 = vsel %vm332, %v2620, %v2635
    %v2638 = vunpack.c.l.s4 1934713408
    %v2639 = vunpack.c.0.s8 %v2638
    %v2640 = vperm.slane %v2634, %v2639
    %v2642 = vunpack.c.l.s4 1934713408
    %v2643 = vunpack.c.0.s8 %v2642
    %v2644 = vperm.slane %v2636, %v2643
    %v2645 = vrot.slane %v2628, 4
    %v2646 = vsel %vm332, 0.0, %v2645
    %v2647 = vrot.slane %v2632, 4
    %v2648 = vsel %vm332, 0.0, %v2647
    %v2649 = vrot.slane %v2640, 4
    %v2650 = vsel %vm332, 0.0, %v2649
    %v2651 = vrot.slane %v2644, 4
    %v2652 = vsel %vm332, 0.0, %v2651
    %v2653 = vrot.slane %v2588, 4
    %v2654 = vsel %vm332, %v2653, %v2079
    %v2655 = vrot.slane %v2079, 4
    %v2656 = vsel %vm332, %v2588, %v2655
    %v2658 = vunpack.c.l.s4 1983009808
    %v2659 = vunpack.c.0.s8 %v2658
    %v2660 = vperm.slane %v2654, %v2659
    %v2662 = vunpack.c.l.s4 1983009808
    %v2663 = vunpack.c.0.s8 %v2662
    %v2664 = vperm.slane %v2656, %v2663
    %v2665 = vrot.slane %v2594, 4
    %v2666 = vsel %vm332, %v2665, %v2582
    %v2667 = vrot.slane %v2582, 4
    %v2668 = vsel %vm332, %v2594, %v2667
    %v2670 = vunpack.c.l.s4 1983009808
    %v2671 = vunpack.c.0.s8 %v2670
    %v2672 = vperm.slane %v2666, %v2671
    %v2674 = vunpack.c.l.s4 1983009808
    %v2675 = vunpack.c.0.s8 %v2674
    %v2676 = vperm.slane %v2668, %v2675
    %v2677 = vrot.slane %v2672, 4
    %v2678 = vsel %vm332, %v2677, %v2660
    %v2679 = vrot.slane %v2660, 4
    %v2680 = vsel %vm332, %v2672, %v2679
    %v2682 = vunpack.c.l.s4 1934713408
    %v2683 = vunpack.c.0.s8 %v2682
    %v2684 = vperm.slane %v2678, %v2683
    %v2686 = vunpack.c.l.s4 1934713408
    %v2687 = vunpack.c.0.s8 %v2686
    %v2688 = vperm.slane %v2680, %v2687
    %v2689 = vrot.slane %v2676, 4
    %v2690 = vsel %vm332, %v2689, %v2664
    %v2691 = vrot.slane %v2664, 4
    %v2692 = vsel %vm332, %v2676, %v2691
    %v2694 = vunpack.c.l.s4 1934713408
    %v2695 = vunpack.c.0.s8 %v2694
    %v2696 = vperm.slane %v2690, %v2695
    %v2698 = vunpack.c.l.s4 1934713408
    %v2699 = vunpack.c.0.s8 %v2698
    %v2700 = vperm.slane %v2692, %v2699
    %v2701 = vrot.slane %v2684, 4
    %v2702 = vsel %vm332, 0.0, %v2701
    %v2703 = vrot.slane %v2688, 4
    %v2704 = vsel %vm332, 0.0, %v2703
    %v2705 = vrot.slane %v2696, 4
    %v2706 = vsel %vm332, 0.0, %v2705
    %v2707 = vrot.slane %v2700, 4
    %v2708 = vsel %vm332, 0.0, %v2707
    %v2709 = vsel %vm332, %v2647, %v2628
    %v2711 = vunpack.c.l.s4 1983009808
    %v2712 = vunpack.c.0.s8 %v2711
    %v2713 = vperm.slane %v2709, %v2712
    %v2714 = vrot.slane %v2648, 4
    %v2715 = vsel %vm332, %v2714, %v2646
    %v2717 = vunpack.c.l.s4 1983009808
    %v2718 = vunpack.c.0.s8 %v2717
    %v2719 = vperm.slane %v2715, %v2718
    %v2720 = vsel %vm332, %v2651, %v2640
    %v2722 = vunpack.c.l.s4 1983009808
    %v2723 = vunpack.c.0.s8 %v2722
    %v2724 = vperm.slane %v2720, %v2723
    %v2725 = vrot.slane %v2652, 4
    %v2726 = vsel %vm332, %v2725, %v2650
    %v2728 = vunpack.c.l.s4 1983009808
    %v2729 = vunpack.c.0.s8 %v2728
    %v2730 = vperm.slane %v2726, %v2729
    %v2731 = vrot.slane %v2719, 4
    %v2732 = vsel %vm332, %v2731, %v2713
    %v2733 = vrot.slane %v2713, 4
    %v2734 = vsel %vm332, %v2719, %v2733
    %v2736 = vunpack.c.l.s4 1934713408
    %v2737 = vunpack.c.0.s8 %v2736
    %v2738 = vperm.slane %v2732, %v2737
    %v2740 = vunpack.c.l.s4 1934713408
    %v2741 = vunpack.c.0.s8 %v2740
    %v2742 = vperm.slane %v2734, %v2741
    %v2743 = vrot.slane %v2730, 4
    %v2744 = vsel %vm332, %v2743, %v2724
    %v2745 = vrot.slane %v2724, 4
    %v2746 = vsel %vm332, %v2730, %v2745
    %v2748 = vunpack.c.l.s4 1934713408
    %v2749 = vunpack.c.0.s8 %v2748
    %v2750 = vperm.slane %v2744, %v2749
    %v2752 = vunpack.c.l.s4 1934713408
    %v2753 = vunpack.c.0.s8 %v2752
    %v2754 = vperm.slane %v2746, %v2753
    %v2755 = vrot.slane %v2750, 4
    %v2756 = vsel %vm332, %v2755, %v2738
    %v2757 = vrot.slane %v2738, 4
    %v2758 = vsel %vm332, %v2750, %v2757
    %v2759 = vrot.slane %v2754, 4
    %v2760 = vsel %vm332, %v2759, %v2742
    %v2761 = vrot.slane %v2742, 4
    %v2762 = vsel %vm332, %v2754, %v2761
    %v2763 = vsel %vm332, %v2703, %v2684
    %v2765 = vunpack.c.l.s4 1983009808
    %v2766 = vunpack.c.0.s8 %v2765
    %v2767 = vperm.slane %v2763, %v2766
    %v2768 = vrot.slane %v2704, 4
    %v2769 = vsel %vm332, %v2768, %v2702
    %v2771 = vunpack.c.l.s4 1983009808
    %v2772 = vunpack.c.0.s8 %v2771
    %v2773 = vperm.slane %v2769, %v2772
    %v2774 = vsel %vm332, %v2707, %v2696
    %v2776 = vunpack.c.l.s4 1983009808
    %v2777 = vunpack.c.0.s8 %v2776
    %v2778 = vperm.slane %v2774, %v2777
    %v2779 = vrot.slane %v2708, 4
    %v2780 = vsel %vm332, %v2779, %v2706
    %v2782 = vunpack.c.l.s4 1983009808
    %v2783 = vunpack.c.0.s8 %v2782
    %v2784 = vperm.slane %v2780, %v2783
    %v2785 = vrot.slane %v2773, 4
    %v2786 = vsel %vm332, %v2785, %v2767
    %v2787 = vrot.slane %v2767, 4
    %v2788 = vsel %vm332, %v2773, %v2787
    %v2790 = vunpack.c.l.s4 1934713408
    %v2791 = vunpack.c.0.s8 %v2790
    %v2792 = vperm.slane %v2786, %v2791
    %v2794 = vunpack.c.l.s4 1934713408
    %v2795 = vunpack.c.0.s8 %v2794
    %v2796 = vperm.slane %v2788, %v2795
    %v2797 = vrot.slane %v2784, 4
    %v2798 = vsel %vm332, %v2797, %v2778
    %v2799 = vrot.slane %v2778, 4
    %v2800 = vsel %vm332, %v2784, %v2799
    %v2802 = vunpack.c.l.s4 1934713408
    %v2803 = vunpack.c.0.s8 %v2802
    %v2804 = vperm.slane %v2798, %v2803
    %v2806 = vunpack.c.l.s4 1934713408
    %v2807 = vunpack.c.0.s8 %v2806
    %v2808 = vperm.slane %v2800, %v2807
    %v2809 = vrot.slane %v2804, 4
    %v2810 = vsel %vm332, %v2809, %v2792
    %v2811 = vrot.slane %v2792, 4
    %v2812 = vsel %vm332, %v2804, %v2811
    %v2813 = vrot.slane %v2808, 4
    %v2814 = vsel %vm332, %v2813, %v2796
    %v2815 = vrot.slane %v2796, 4
    %v2816 = vsel %vm332, %v2808, %v2815
    %v2817 = vpack.c.bf16 %v2756, %v2756
    %v2818 = vpack.c.bf16 %v2758, %v2758
    %v2819 = vpack.c.bf16 %v2760, %v2760
    %v2820 = vpack.c.bf16 %v2762, %v2762
    %v2821 = vpack.c.bf16 %v2810, %v2810
    %v2822 = vpack.c.bf16 %v2812, %v2812
    %v2823 = vpack.c.bf16 %v2814, %v2814
    %v2824 = vpack.c.bf16 %v2816, %v2816
    %v2826 = vsel %vm1056, %v2321, 0
    %v2829 = vsel %vm1056, %v2569, 0
    %2831 = vmatpush.bf16.xpose.msra.mxu0 0
    %2832 = vmatpush.bf16.xpose.msra.mxu0 0
    %2833 = vmatpush.bf16.xpose.msra.mxu0 0
    %2834 = vmatpush.bf16.xpose.msra.mxu0 0
    %2835 = vmatpush.bf16.xpose.msra.mxu0 0
    %2836 = vmatpush.bf16.xpose.msra.mxu0 0
    %2837 = vmatpush.bf16.xpose.msra.mxu0 0
    %2838 = vmatpush.bf16.xpose.msra.mxu0 %v2829
    %2839 = vmatmul.bf16.gmra.mxu0 %v2826
    %v2840 = vpop.f32.mrf.mxu0
    %v2841 = vadd.f32 %v151, %v2840
    %v2842 = vpop.f32.mrf.mxu0
    %2843 = vdwg.mxu0
    %v2845 = vsel %vm1056, %v2322, 0
    %v2848 = vsel %vm1056, %v2570, 0
    %2850 = vmatpush.bf16.xpose.msra.mxu0 0
    %2851 = vmatpush.bf16.xpose.msra.mxu0 0
    %2852 = vmatpush.bf16.xpose.msra.mxu0 0
    %2853 = vmatpush.bf16.xpose.msra.mxu0 0
    %2854 = vmatpush.bf16.xpose.msra.mxu0 0
    %2855 = vmatpush.bf16.xpose.msra.mxu0 0
    %2856 = vmatpush.bf16.xpose.msra.mxu0 0
    %2857 = vmatpush.bf16.xpose.msra.mxu0 %v2848
    %2858 = vmatmul.bf16.gmra.mxu0 %v2845
    %v2859 = vpop.f32.mrf.mxu0
    %v2860 = vadd.f32 %v151, %v2859
    %v2861 = vpop.f32.mrf.mxu0
    %2862 = vdwg.mxu0
    %v2864 = vsel %vm1056, %v2323, 0
    %v2867 = vsel %vm1056, %v2571, 0
    %2869 = vmatpush.bf16.xpose.msra.mxu0 0
    %2870 = vmatpush.bf16.xpose.msra.mxu0 0
    %2871 = vmatpush.bf16.xpose.msra.mxu0 0
    %2872 = vmatpush.bf16.xpose.msra.mxu0 0
    %2873 = vmatpush.bf16.xpose.msra.mxu0 0
    %2874 = vmatpush.bf16.xpose.msra.mxu0 0
    %2875 = vmatpush.bf16.xpose.msra.mxu0 0
    %2876 = vmatpush.bf16.xpose.msra.mxu0 %v2867
    %2877 = vmatmul.bf16.gmra.mxu0 %v2864
    %v2878 = vpop.f32.mrf.mxu0
    %v2879 = vadd.f32 %v151, %v2878
    %v2880 = vpop.f32.mrf.mxu0
    %2881 = vdwg.mxu0
    %v2883 = vsel %vm1056, %v2324, 0
    %v2886 = vsel %vm1056, %v2572, 0
    %2888 = vmatpush.bf16.xpose.msra.mxu0 0
    %2889 = vmatpush.bf16.xpose.msra.mxu0 0
    %2890 = vmatpush.bf16.xpose.msra.mxu0 0
    %2891 = vmatpush.bf16.xpose.msra.mxu0 0
    %2892 = vmatpush.bf16.xpose.msra.mxu0 0
    %2893 = vmatpush.bf16.xpose.msra.mxu0 0
    %2894 = vmatpush.bf16.xpose.msra.mxu0 0
    %2895 = vmatpush.bf16.xpose.msra.mxu0 %v2886
    %2896 = vmatmul.bf16.gmra.mxu0 %v2883
    %v2897 = vpop.f32.mrf.mxu0
    %v2898 = vadd.f32 %v151, %v2897
    %v2899 = vpop.f32.mrf.mxu0
    %2900 = vdwg.mxu0
    %v2902 = vsel %vm1056, %v2325, 0
    %v2905 = vsel %vm1056, %v2573, 0
    %2907 = vmatpush.bf16.xpose.msra.mxu0 0
    %2908 = vmatpush.bf16.xpose.msra.mxu0 0
    %2909 = vmatpush.bf16.xpose.msra.mxu0 0
    %2910 = vmatpush.bf16.xpose.msra.mxu0 0
    %2911 = vmatpush.bf16.xpose.msra.mxu0 0
    %2912 = vmatpush.bf16.xpose.msra.mxu0 0
    %2913 = vmatpush.bf16.xpose.msra.mxu0 0
    %2914 = vmatpush.bf16.xpose.msra.mxu0 %v2905
    %2915 = vmatmul.bf16.gmra.mxu0 %v2902
    %v2916 = vpop.f32.mrf.mxu0
    %v2917 = vadd.f32 %v151, %v2916
    %v2918 = vpop.f32.mrf.mxu0
    %2919 = vdwg.mxu0
    %v2921 = vsel %vm1056, %v2326, 0
    %v2924 = vsel %vm1056, %v2574, 0
    %2926 = vmatpush.bf16.xpose.msra.mxu0 0
    %2927 = vmatpush.bf16.xpose.msra.mxu0 0
    %2928 = vmatpush.bf16.xpose.msra.mxu0 0
    %2929 = vmatpush.bf16.xpose.msra.mxu0 0
    %2930 = vmatpush.bf16.xpose.msra.mxu0 0
    %2931 = vmatpush.bf16.xpose.msra.mxu0 0
    %2932 = vmatpush.bf16.xpose.msra.mxu0 0
    %2933 = vmatpush.bf16.xpose.msra.mxu0 %v2924
    %2934 = vmatmul.bf16.gmra.mxu0 %v2921
    %v2935 = vpop.f32.mrf.mxu0
    %v2936 = vadd.f32 %v151, %v2935
    %v2937 = vpop.f32.mrf.mxu0
    %2938 = vdwg.mxu0
    %v2940 = vsel %vm1056, %v2327, 0
    %v2943 = vsel %vm1056, %v2575, 0
    %2945 = vmatpush.bf16.xpose.msra.mxu0 0
    %2946 = vmatpush.bf16.xpose.msra.mxu0 0
    %2947 = vmatpush.bf16.xpose.msra.mxu0 0
    %2948 = vmatpush.bf16.xpose.msra.mxu0 0
    %2949 = vmatpush.bf16.xpose.msra.mxu0 0
    %2950 = vmatpush.bf16.xpose.msra.mxu0 0
    %2951 = vmatpush.bf16.xpose.msra.mxu0 0
    %2952 = vmatpush.bf16.xpose.msra.mxu0 %v2943
    %2953 = vmatmul.bf16.gmra.mxu0 %v2940
    %v2954 = vpop.f32.mrf.mxu0
    %v2955 = vadd.f32 %v151, %v2954
    %v2956 = vpop.f32.mrf.mxu0
    %2957 = vdwg.mxu0
    %v2959 = vsel %vm1056, %v2328, 0
    %v2962 = vsel %vm1056, %v2576, 0
    %2964 = vmatpush.bf16.xpose.msra.mxu0 0
    %2965 = vmatpush.bf16.xpose.msra.mxu0 0
    %2966 = vmatpush.bf16.xpose.msra.mxu0 0
    %2967 = vmatpush.bf16.xpose.msra.mxu0 0
    %2968 = vmatpush.bf16.xpose.msra.mxu0 0
    %2969 = vmatpush.bf16.xpose.msra.mxu0 0
    %2970 = vmatpush.bf16.xpose.msra.mxu0 0
    %2971 = vmatpush.bf16.xpose.msra.mxu0 %v2962
    %2972 = vmatmul.bf16.gmra.mxu0 %v2959
    %v2973 = vpop.f32.mrf.mxu0
    %v2974 = vadd.f32 %v151, %v2973
    %v2975 = vpop.f32.mrf.mxu0
    %2976 = vdwg.mxu0
    %v2977 = vsel %vm1056, %v2841, -inf
    %2978 = vmax.xlane.f32.xlu0 %v2977
    %v2979 = vpop.xlane.xlu0 %2978
    %v2980 = vsel %vm1056, %v2860, -inf
    %2981 = vmax.xlane.f32.xlu0 %v2980
    %v2982 = vpop.xlane.xlu0 %2981
    %v2983 = vsel %vm1056, %v2879, -inf
    %2984 = vmax.xlane.f32.xlu0 %v2983
    %v2985 = vpop.xlane.xlu0 %2984
    %v2986 = vsel %vm1056, %v2898, -inf
    %2987 = vmax.xlane.f32.xlu0 %v2986
    %v2988 = vpop.xlane.xlu0 %2987
    %v2989 = vsel %vm1056, %v2917, -inf
    %2990 = vmax.xlane.f32.xlu0 %v2989
    %v2991 = vpop.xlane.xlu0 %2990
    %v2992 = vsel %vm1056, %v2936, -inf
    %2993 = vmax.xlane.f32.xlu0 %v2992
    %v2994 = vpop.xlane.xlu0 %2993
    %v2995 = vsel %vm1056, %v2955, -inf
    %2996 = vmax.xlane.f32.xlu0 %v2995
    %v2997 = vpop.xlane.xlu0 %2996
    %v2998 = vsel %vm1056, %v2974, -inf
    %2999 = vmax.xlane.f32.xlu0 %v2998
    %v3000 = vpop.xlane.xlu0 %2999
    %v3001 = vsub.f32 %v2841, %v2979
    %v3002 = vsub.f32 %v2860, %v2982
    %v3003 = vsub.f32 %v2879, %v2985
    %v3004 = vsub.f32 %v2898, %v2988
    %v3005 = vsub.f32 %v2917, %v2991
    %v3006 = vsub.f32 %v2936, %v2994
    %v3007 = vsub.f32 %v2955, %v2997
    %v3008 = vsub.f32 %v2974, %v3000
    %v3009 = vmul.f32 %v3001, 1.442695
    %v3010 = vpow.pop %v3009
    %v3011 = vmul.f32 %v3002, 1.442695
    %v3012 = vpow.pop %v3011
    %v3013 = vmul.f32 %v3003, 1.442695
    %v3014 = vpow.pop %v3013
    %v3015 = vmul.f32 %v3004, 1.442695
    %v3016 = vpow.pop %v3015
    %v3017 = vmul.f32 %v3005, 1.442695
    %v3018 = vpow.pop %v3017
    %v3019 = vmul.f32 %v3006, 1.442695
    %v3020 = vpow.pop %v3019
    %v3021 = vmul.f32 %v3007, 1.442695
    %v3022 = vpow.pop %v3021
    %v3023 = vmul.f32 %v3008, 1.442695
    %v3024 = vpow.pop %v3023
    %v3025 = vsel %vm1056, %v3010, 0.0
    %3026 = vadd.xlane.f32.xlu0 %v3025
    %v3027 = vpop.xlane.xlu0 %3026
    %v3028 = vsel %vm1056, %v3012, 0.0
    %3029 = vadd.xlane.f32.xlu0 %v3028
    %v3030 = vpop.xlane.xlu0 %3029
    %v3031 = vsel %vm1056, %v3014, 0.0
    %3032 = vadd.xlane.f32.xlu0 %v3031
    %v3033 = vpop.xlane.xlu0 %3032
    %v3034 = vsel %vm1056, %v3016, 0.0
    %3035 = vadd.xlane.f32.xlu0 %v3034
    %v3036 = vpop.xlane.xlu0 %3035
    %v3037 = vsel %vm1056, %v3018, 0.0
    %3038 = vadd.xlane.f32.xlu0 %v3037
    %v3039 = vpop.xlane.xlu0 %3038
    %v3040 = vsel %vm1056, %v3020, 0.0
    %3041 = vadd.xlane.f32.xlu0 %v3040
    %v3042 = vpop.xlane.xlu0 %3041
    %v3043 = vsel %vm1056, %v3022, 0.0
    %3044 = vadd.xlane.f32.xlu0 %v3043
    %v3045 = vpop.xlane.xlu0 %3044
    %v3046 = vsel %vm1056, %v3024, 0.0
    %3047 = vadd.xlane.f32.xlu0 %v3046
    %v3048 = vpop.xlane.xlu0 %3047
    %v3049 = vrcp.pop %v3027
    %v3050 = vrcp.pop %v3030
    %v3051 = vrcp.pop %v3033
    %v3052 = vrcp.pop %v3036
    %v3053 = vrcp.pop %v3039
    %v3054 = vrcp.pop %v3042
    %v3055 = vrcp.pop %v3045
    %v3056 = vrcp.pop %v3048
    %v3057 = vmul.f32 %v3010, %v3049
    %v3058 = vmul.f32 %v3012, %v3050
    %v3059 = vmul.f32 %v3014, %v3051
    %v3060 = vmul.f32 %v3016, %v3052
    %v3061 = vmul.f32 %v3018, %v3053
    %v3062 = vmul.f32 %v3020, %v3054
    %v3063 = vmul.f32 %v3022, %v3055
    %v3064 = vmul.f32 %v3024, %v3056
    %v3065 = vpack.c.bf16 %v3057, %v3057
    %v3066 = vpack.c.bf16 %v3058, %v3058
    %v3067 = vpack.c.bf16 %v3059, %v3059
    %v3068 = vpack.c.bf16 %v3060, %v3060
    %v3069 = vpack.c.bf16 %v3061, %v3061
    %v3070 = vpack.c.bf16 %v3062, %v3062
    %v3071 = vpack.c.bf16 %v3063, %v3063
    %v3072 = vpack.c.bf16 %v3064, %v3064
    %v3074 = vsel %vm1056, %v3065, 0
    %v3077 = vsel %vm1412, %v2817, 0
    %3079 = vmatpush.bf16.msra.mxu0 0
    %3080 = vmatpush.bf16.msra.mxu0 0
    %3081 = vmatpush.bf16.msra.mxu0 0
    %3082 = vmatpush.bf16.msra.mxu0 0
    %3083 = vmatpush.bf16.msra.mxu0 0
    %3084 = vmatpush.bf16.msra.mxu0 0
    %3085 = vmatpush.bf16.msra.mxu0 0
    %3086 = vmatpush.bf16.msra.mxu0 %v3077
    %3087 = vmatmul.bf16.gmra.mxu0 %v3074
    %v3088 = vpop.f32.mrf.mxu0
    %v3089 = vadd.f32 0.0, %v3088
    %v3090 = vpop.f32.mrf.mxu0
    %3091 = vdwg.mxu0
    %v3093 = vsel %vm1056, %v3066, 0
    %v3096 = vsel %vm1412, %v2818, 0
    %3098 = vmatpush.bf16.msra.mxu0 0
    %3099 = vmatpush.bf16.msra.mxu0 0
    %3100 = vmatpush.bf16.msra.mxu0 0
    %3101 = vmatpush.bf16.msra.mxu0 0
    %3102 = vmatpush.bf16.msra.mxu0 0
    %3103 = vmatpush.bf16.msra.mxu0 0
    %3104 = vmatpush.bf16.msra.mxu0 0
    %3105 = vmatpush.bf16.msra.mxu0 %v3096
    %3106 = vmatmul.bf16.gmra.mxu0 %v3093
    %v3107 = vpop.f32.mrf.mxu0
    %v3108 = vadd.f32 0.0, %v3107
    %v3109 = vpop.f32.mrf.mxu0
    %3110 = vdwg.mxu0
    %v3112 = vsel %vm1056, %v3067, 0
    %v3115 = vsel %vm1412, %v2819, 0
    %3117 = vmatpush.bf16.msra.mxu0 0
    %3118 = vmatpush.bf16.msra.mxu0 0
    %3119 = vmatpush.bf16.msra.mxu0 0
    %3120 = vmatpush.bf16.msra.mxu0 0
    %3121 = vmatpush.bf16.msra.mxu0 0
    %3122 = vmatpush.bf16.msra.mxu0 0
    %3123 = vmatpush.bf16.msra.mxu0 0
    %3124 = vmatpush.bf16.msra.mxu0 %v3115
    %3125 = vmatmul.bf16.gmra.mxu0 %v3112
    %v3126 = vpop.f32.mrf.mxu0
    %v3127 = vadd.f32 0.0, %v3126
    %v3128 = vpop.f32.mrf.mxu0
    %3129 = vdwg.mxu0
    %v3131 = vsel %vm1056, %v3068, 0
    %v3134 = vsel %vm1412, %v2820, 0
    %3136 = vmatpush.bf16.msra.mxu0 0
    %3137 = vmatpush.bf16.msra.mxu0 0
    %3138 = vmatpush.bf16.msra.mxu0 0
    %3139 = vmatpush.bf16.msra.mxu0 0
    %3140 = vmatpush.bf16.msra.mxu0 0
    %3141 = vmatpush.bf16.msra.mxu0 0
    %3142 = vmatpush.bf16.msra.mxu0 0
    %3143 = vmatpush.bf16.msra.mxu0 %v3134
    %3144 = vmatmul.bf16.gmra.mxu0 %v3131
    %v3145 = vpop.f32.mrf.mxu0
    %v3146 = vadd.f32 0.0, %v3145
    %v3147 = vpop.f32.mrf.mxu0
    %3148 = vdwg.mxu0
    %v3150 = vsel %vm1056, %v3069, 0
    %v3153 = vsel %vm1412, %v2821, 0
    %3155 = vmatpush.bf16.msra.mxu0 0
    %3156 = vmatpush.bf16.msra.mxu0 0
    %3157 = vmatpush.bf16.msra.mxu0 0
    %3158 = vmatpush.bf16.msra.mxu0 0
    %3159 = vmatpush.bf16.msra.mxu0 0
    %3160 = vmatpush.bf16.msra.mxu0 0
    %3161 = vmatpush.bf16.msra.mxu0 0
    %3162 = vmatpush.bf16.msra.mxu0 %v3153
    %3163 = vmatmul.bf16.gmra.mxu0 %v3150
    %v3164 = vpop.f32.mrf.mxu0
    %v3165 = vadd.f32 0.0, %v3164
    %v3166 = vpop.f32.mrf.mxu0
    %3167 = vdwg.mxu0
    %v3169 = vsel %vm1056, %v3070, 0
    %v3172 = vsel %vm1412, %v2822, 0
    %3174 = vmatpush.bf16.msra.mxu0 0
    %3175 = vmatpush.bf16.msra.mxu0 0
    %3176 = vmatpush.bf16.msra.mxu0 0
    %3177 = vmatpush.bf16.msra.mxu0 0
    %3178 = vmatpush.bf16.msra.mxu0 0
    %3179 = vmatpush.bf16.msra.mxu0 0
    %3180 = vmatpush.bf16.msra.mxu0 0
    %3181 = vmatpush.bf16.msra.mxu0 %v3172
    %3182 = vmatmul.bf16.gmra.mxu0 %v3169
    %v3183 = vpop.f32.mrf.mxu0
    %v3184 = vadd.f32 0.0, %v3183
    %v3185 = vpop.f32.mrf.mxu0
    %3186 = vdwg.mxu0
    %v3188 = vsel %vm1056, %v3071, 0
    %v3191 = vsel %vm1412, %v2823, 0
    %3193 = vmatpush.bf16.msra.mxu0 0
    %3194 = vmatpush.bf16.msra.mxu0 0
    %3195 = vmatpush.bf16.msra.mxu0 0
    %3196 = vmatpush.bf16.msra.mxu0 0
    %3197 = vmatpush.bf16.msra.mxu0 0
    %3198 = vmatpush.bf16.msra.mxu0 0
    %3199 = vmatpush.bf16.msra.mxu0 0
    %3200 = vmatpush.bf16.msra.mxu0 %v3191
    %3201 = vmatmul.bf16.gmra.mxu0 %v3188
    %v3202 = vpop.f32.mrf.mxu0
    %v3203 = vadd.f32 0.0, %v3202
    %v3204 = vpop.f32.mrf.mxu0
    %3205 = vdwg.mxu0
    %v3207 = vsel %vm1056, %v3072, 0
    %v3210 = vsel %vm1412, %v2824, 0
    %3212 = vmatpush.bf16.msra.mxu0 0
    %3213 = vmatpush.bf16.msra.mxu0 0
    %3214 = vmatpush.bf16.msra.mxu0 0
    %3215 = vmatpush.bf16.msra.mxu0 0
    %3216 = vmatpush.bf16.msra.mxu0 0
    %3217 = vmatpush.bf16.msra.mxu0 0
    %3218 = vmatpush.bf16.msra.mxu0 0
    %3219 = vmatpush.bf16.msra.mxu0 %v3210
    %3220 = vmatmul.bf16.gmra.mxu0 %v3207
    %v3221 = vpop.f32.mrf.mxu0
    %v3222 = vadd.f32 0.0, %v3221
    %v3223 = vpop.f32.mrf.mxu0
    %3224 = vdwg.mxu0
    %v3225 = vrot.slane %v3127, 4
    %v3226 = vsel %vm332, %v3225, %v3089
    %v3227 = vrot.slane %v3089, 4
    %v3228 = vsel %vm332, %v3127, %v3227
    %v3230 = vunpack.c.l.s4 1983009808
    %v3231 = vunpack.c.0.s8 %v3230
    %v3232 = vperm.slane %v3226, %v3231
    %v3234 = vunpack.c.l.s4 1983009808
    %v3235 = vunpack.c.0.s8 %v3234
    %v3236 = vperm.slane %v3228, %v3235
    %v3237 = vrot.slane %v3146, 4
    %v3238 = vsel %vm332, %v3237, %v3108
    %v3239 = vrot.slane %v3108, 4
    %v3240 = vsel %vm332, %v3146, %v3239
    %v3242 = vunpack.c.l.s4 1983009808
    %v3243 = vunpack.c.0.s8 %v3242
    %v3244 = vperm.slane %v3238, %v3243
    %v3246 = vunpack.c.l.s4 1983009808
    %v3247 = vunpack.c.0.s8 %v3246
    %v3248 = vperm.slane %v3240, %v3247
    %v3249 = vrot.slane %v3244, 4
    %v3250 = vsel %vm332, %v3249, %v3232
    %v3251 = vrot.slane %v3232, 4
    %v3252 = vsel %vm332, %v3244, %v3251
    %v3254 = vunpack.c.l.s4 1934713408
    %v3255 = vunpack.c.0.s8 %v3254
    %v3256 = vperm.slane %v3250, %v3255
    %v3258 = vunpack.c.l.s4 1934713408
    %v3259 = vunpack.c.0.s8 %v3258
    %v3260 = vperm.slane %v3252, %v3259
    %v3261 = vrot.slane %v3248, 4
    %v3262 = vsel %vm332, %v3261, %v3236
    %v3263 = vrot.slane %v3236, 4
    %v3264 = vsel %vm332, %v3248, %v3263
    %v3266 = vunpack.c.l.s4 1934713408
    %v3267 = vunpack.c.0.s8 %v3266
    %v3268 = vperm.slane %v3262, %v3267
    %v3270 = vunpack.c.l.s4 1934713408
    %v3271 = vunpack.c.0.s8 %v3270
    %v3272 = vperm.slane %v3264, %v3271
    %v3273 = vrot.slane %v3256, 4
    %v3274 = vsel %vm332, 0.0, %v3273
    %v3275 = vrot.slane %v3260, 4
    %v3276 = vsel %vm332, 0.0, %v3275
    %v3277 = vrot.slane %v3268, 4
    %v3278 = vsel %vm332, 0.0, %v3277
    %v3279 = vrot.slane %v3272, 4
    %v3280 = vsel %vm332, 0.0, %v3279
    %v3281 = vrot.slane %v3203, 4
    %v3282 = vsel %vm332, %v3281, %v3165
    %v3283 = vrot.slane %v3165, 4
    %v3284 = vsel %vm332, %v3203, %v3283
    %v3286 = vunpack.c.l.s4 1983009808
    %v3287 = vunpack.c.0.s8 %v3286
    %v3288 = vperm.slane %v3282, %v3287
    %v3290 = vunpack.c.l.s4 1983009808
    %v3291 = vunpack.c.0.s8 %v3290
    %v3292 = vperm.slane %v3284, %v3291
    %v3293 = vrot.slane %v3222, 4
    %v3294 = vsel %vm332, %v3293, %v3184
    %v3295 = vrot.slane %v3184, 4
    %v3296 = vsel %vm332, %v3222, %v3295
    %v3298 = vunpack.c.l.s4 1983009808
    %v3299 = vunpack.c.0.s8 %v3298
    %v3300 = vperm.slane %v3294, %v3299
    %v3302 = vunpack.c.l.s4 1983009808
    %v3303 = vunpack.c.0.s8 %v3302
    %v3304 = vperm.slane %v3296, %v3303
    %v3305 = vrot.slane %v3300, 4
    %v3306 = vsel %vm332, %v3305, %v3288
    %v3307 = vrot.slane %v3288, 4
    %v3308 = vsel %vm332, %v3300, %v3307
    %v3310 = vunpack.c.l.s4 1934713408
    %v3311 = vunpack.c.0.s8 %v3310
    %v3312 = vperm.slane %v3306, %v3311
    %v3314 = vunpack.c.l.s4 1934713408
    %v3315 = vunpack.c.0.s8 %v3314
    %v3316 = vperm.slane %v3308, %v3315
    %v3317 = vrot.slane %v3304, 4
    %v3318 = vsel %vm332, %v3317, %v3292
    %v3319 = vrot.slane %v3292, 4
    %v3320 = vsel %vm332, %v3304, %v3319
    %v3322 = vunpack.c.l.s4 1934713408
    %v3323 = vunpack.c.0.s8 %v3322
    %v3324 = vperm.slane %v3318, %v3323
    %v3326 = vunpack.c.l.s4 1934713408
    %v3327 = vunpack.c.0.s8 %v3326
    %v3328 = vperm.slane %v3320, %v3327
    %v3329 = vrot.slane %v3312, 4
    %v3330 = vsel %vm332, 0.0, %v3329
    %v3331 = vrot.slane %v3316, 4
    %v3332 = vsel %vm332, 0.0, %v3331
    %v3333 = vrot.slane %v3324, 4
    %v3334 = vsel %vm332, 0.0, %v3333
    %v3335 = vrot.slane %v3328, 4
    %v3336 = vsel %vm332, 0.0, %v3335
    %v3337 = vsel %vm332, %v3275, %v3256
    %v3339 = vunpack.c.l.s4 1983009808
    %v3340 = vunpack.c.0.s8 %v3339
    %v3341 = vperm.slane %v3337, %v3340
    %v3342 = vrot.slane %v3276, 4
    %v3343 = vsel %vm332, %v3342, %v3274
    %v3345 = vunpack.c.l.s4 1983009808
    %v3346 = vunpack.c.0.s8 %v3345
    %v3347 = vperm.slane %v3343, %v3346
    %v3348 = vsel %vm332, %v3279, %v3268
    %v3350 = vunpack.c.l.s4 1983009808
    %v3351 = vunpack.c.0.s8 %v3350
    %v3352 = vperm.slane %v3348, %v3351
    %v3353 = vrot.slane %v3280, 4
    %v3354 = vsel %vm332, %v3353, %v3278
    %v3356 = vunpack.c.l.s4 1983009808
    %v3357 = vunpack.c.0.s8 %v3356
    %v3358 = vperm.slane %v3354, %v3357
    %v3359 = vrot.slane %v3347, 4
    %v3360 = vsel %vm332, %v3359, %v3341
    %v3361 = vrot.slane %v3341, 4
    %v3362 = vsel %vm332, %v3347, %v3361
    %v3364 = vunpack.c.l.s4 1934713408
    %v3365 = vunpack.c.0.s8 %v3364
    %v3366 = vperm.slane %v3360, %v3365
    %v3368 = vunpack.c.l.s4 1934713408
    %v3369 = vunpack.c.0.s8 %v3368
    %v3370 = vperm.slane %v3362, %v3369
    %v3371 = vrot.slane %v3358, 4
    %v3372 = vsel %vm332, %v3371, %v3352
    %v3373 = vrot.slane %v3352, 4
    %v3374 = vsel %vm332, %v3358, %v3373
    %v3376 = vunpack.c.l.s4 1934713408
    %v3377 = vunpack.c.0.s8 %v3376
    %v3378 = vperm.slane %v3372, %v3377
    %v3380 = vunpack.c.l.s4 1934713408
    %v3381 = vunpack.c.0.s8 %v3380
    %v3382 = vperm.slane %v3374, %v3381
    %v3383 = vrot.slane %v3378, 4
    %v3384 = vsel %vm332, %v3383, %v3366
    %v3385 = vrot.slane %v3366, 4
    %v3386 = vsel %vm332, %v3378, %v3385
    %v3387 = vrot.slane %v3382, 4
    %v3388 = vsel %vm332, %v3387, %v3370
    %v3389 = vrot.slane %v3370, 4
    %v3390 = vsel %vm332, %v3382, %v3389
    %v3391 = vsel %vm332, %v3331, %v3312
    %v3393 = vunpack.c.l.s4 1983009808
    %v3394 = vunpack.c.0.s8 %v3393
    %v3395 = vperm.slane %v3391, %v3394
    %v3396 = vrot.slane %v3332, 4
    %v3397 = vsel %vm332, %v3396, %v3330
    %v3399 = vunpack.c.l.s4 1983009808
    %v3400 = vunpack.c.0.s8 %v3399
    %v3401 = vperm.slane %v3397, %v3400
    %v3402 = vsel %vm332, %v3335, %v3324
    %v3404 = vunpack.c.l.s4 1983009808
    %v3405 = vunpack.c.0.s8 %v3404
    %v3406 = vperm.slane %v3402, %v3405
    %v3407 = vrot.slane %v3336, 4
    %v3408 = vsel %vm332, %v3407, %v3334
    %v3410 = vunpack.c.l.s4 1983009808
    %v3411 = vunpack.c.0.s8 %v3410
    %v3412 = vperm.slane %v3408, %v3411
    %v3413 = vrot.slane %v3401, 4
    %v3414 = vsel %vm332, %v3413, %v3395
    %v3415 = vrot.slane %v3395, 4
    %v3416 = vsel %vm332, %v3401, %v3415
    %v3418 = vunpack.c.l.s4 1934713408
    %v3419 = vunpack.c.0.s8 %v3418
    %v3420 = vperm.slane %v3414, %v3419
    %v3422 = vunpack.c.l.s4 1934713408
    %v3423 = vunpack.c.0.s8 %v3422
    %v3424 = vperm.slane %v3416, %v3423
    %v3425 = vrot.slane %v3412, 4
    %v3426 = vsel %vm332, %v3425, %v3406
    %v3427 = vrot.slane %v3406, 4
    %v3428 = vsel %vm332, %v3412, %v3427
    %v3430 = vunpack.c.l.s4 1934713408
    %v3431 = vunpack.c.0.s8 %v3430
    %v3432 = vperm.slane %v3426, %v3431
    %v3434 = vunpack.c.l.s4 1934713408
    %v3435 = vunpack.c.0.s8 %v3434
    %v3436 = vperm.slane %v3428, %v3435
    %v3437 = vrot.slane %v3432, 4
    %v3438 = vsel %vm332, %v3437, %v3420
    %v3439 = vrot.slane %v3420, 4
    %v3440 = vsel %vm332, %v3432, %v3439
    %v3441 = vrot.slane %v3436, 4
    %v3442 = vsel %vm332, %v3441, %v3424
    %v3443 = vrot.slane %v3424, 4
    %v3444 = vsel %vm332, %v3436, %v3443
    %3447 = vrot.lane.b32.xlu0 %v3386, 8
    %v3448 = vpop.permute.xlu0 %3447
    %3449 = vrot.lane.b32.xlu0 %v3440, 8
    %v3450 = vpop.permute.xlu0 %3449
    %3455 = vrot.lane.b32.xlu0 %v3388, 16
    %v3456 = vpop.permute.xlu0 %3455
    %3457 = vrot.lane.b32.xlu0 %v3442, 16
    %v3458 = vpop.permute.xlu0 %3457
    %3463 = vrot.lane.b32.xlu0 %v3390, 24
    %v3464 = vpop.permute.xlu0 %3463
    %3465 = vrot.lane.b32.xlu0 %v3444, 24
    %v3466 = vpop.permute.xlu0 %3465
    %v3469 = vsel %vm1056, %v3384, %v3448
    %v3470 = vsel %vm1056, %v3438, %v3450
    %v3471 = vsel %vm1808, %v3469, %v3456
    %v3472 = vsel %vm1808, %v3470, %v3458
    %v3473 = vsel %vm1811, %v3471, %v3464
    %v3474 = vsel %vm1811, %v3472, %v3466
    %v3475 = vpack.c.bf16 %v3474, %v3473
    %s3476 = scalar_lea.vmem [#allocation7], 112
    %v3477 = vld [vmem:[%s3476] sm:$0xf]
    %v3478 = vld [vmem:[%s3476 + $0x4] sm:$0xf]
    %v3479 = vld [vmem:[%s3476 + $0x8] sm:$0xf]
    %v3480 = vld [vmem:[%s3476 + $0xc] sm:$0xf]
    %v3481 = vperm.slane %v153, 7
    %v3486 = vunpack.c.l.b16 %v3477
    %v3487 = vunpack.c.l.b16 %v3478
    %v3488 = vunpack.c.l.b16 %v3479
    %v3489 = vunpack.c.l.b16 %v3480
    %v3490 = vpack.c.b16 %v3487, %v3486
    %v3491 = vpack.c.b16 %v3489, %v3488
    %v3495 = vsel %vm154, %v3475, 0
    %3497 = vmatpush.bf16.msra.mxu0 0
    %3498 = vmatpush.bf16.msra.mxu0 0
    %3499 = vmatpush.bf16.msra.mxu0 0
    %3500 = vmatpush.bf16.msra.mxu0 0
    %3501 = vmatpush.bf16.msra.mxu0 0
    %3502 = vmatpush.bf16.msra.mxu0 0
    %3503 = vmatpush.bf16.msra.mxu0 %v3491
    %3504 = vmatpush.bf16.msra.mxu0 %v3490
    %3505 = vmatmul.bf16.gmra.mxu0 %v3495
    %v3506 = vpop.f32.mrf.mxu0
    %v3507 = vadd.f32 %v3481, %v3506
    %v3508 = vpop.f32.mrf.mxu0
    %v3509 = vadd.f32 %v3481, %v3508
    %3510 = vdwg.mxu0
    %v3511 = vadd.f32 %v3507, %v1975
    %v3512 = vadd.f32 %v3509, %v1976
    %v3513 = vsel %vm154, %v3511, 0.0
    %3514 = vadd.xlane.f32.xlu0 %v3513
    %v3515 = vpop.xlane.xlu0 %3514
    %v3516 = vsel %vm154, %v3512, 0.0
    %3517 = vadd.xlane.f32.xlu0 %v3516
    %v3518 = vpop.xlane.xlu0 %3517
    %v3519 = vmul.f32 %v3515, %v167
    %v3520 = vmul.f32 %v3518, %v167
    %v3521 = vsub.f32 %v3511, %v3519
    %v3522 = vsub.f32 %v3512, %v3520
    %v3523 = vmul.f32 %v3521, %v3521
    %v3524 = vmul.f32 %v3522, %v3522
    %v3525 = vsel %vm154, %v3523, 0.0
    %3526 = vadd.xlane.f32.xlu0 %v3525
    %v3527 = vpop.xlane.xlu0 %3526
    %v3528 = vsel %vm154, %v3524, 0.0
    %3529 = vadd.xlane.f32.xlu0 %v3528
    %v3530 = vpop.xlane.xlu0 %3529
    %v3531 = vmul.f32 %v3527, %v167
    %v3532 = vmul.f32 %v3530, %v167
    %v3533 = vadd.f32 %v3531, 1e-05
    %v3534 = vadd.f32 %v3532, 1e-05
    %v3535 = vrsqrt.pop %v3533
    %v3536 = vmul.f32 %v3535, %v3533
    %v3537 = vmul.f32 %v3536, %v3535
    %v3538 = vmul.f32 0.5, %v3537
    %v3539 = vsub.f32 1.5, %v3538
    %v3540 = vmul.f32 %v3535, %v3539
    %vm3541 = vweird.f32 %v3533
    %vm3542 = vweird.f32 %v3535
    %vm3543 = vmor %vm3541, %vm3542
    %v3544 = vsel %vm3543, %v3535, %v3540
    %v3545 = vrsqrt.pop %v3534
    %v3546 = vmul.f32 %v3545, %v3534
    %v3547 = vmul.f32 %v3546, %v3545
    %v3548 = vmul.f32 0.5, %v3547
    %v3549 = vsub.f32 1.5, %v3548
    %v3550 = vmul.f32 %v3545, %v3549
    %vm3551 = vweird.f32 %v3534
    %vm3552 = vweird.f32 %v3545
    %vm3553 = vmor %vm3551, %vm3552
    %v3554 = vsel %vm3553, %v3545, %v3550
    %v3555 = vmul.f32 %v3521, %v3544
    %v3556 = vmul.f32 %v3522, %v3554
    %v3557 = vperm.slane %v152, 6
    %v3558 = vmul.f32 %v3555, %v3557
    %v3559 = vmul.f32 %v3556, %v3557
    %v3560 = vperm.slane %v152, 7
    %v3561 = vadd.f32 %v3558, %v3560
    %v3562 = vadd.f32 %v3559, %v3560
    %v3563 = vpack.c.bf16 %v3562, %v3561
    %v3564 = vld [vmem:[#allocation8] sm:$0xf]
    %v3565 = vld [vmem:[#allocation8 + $0x4] sm:$0xf]
    %v3566 = vld [vmem:[#allocation8 + $0x8] sm:$0xf]
    %v3567 = vld [vmem:[#allocation8 + $0xc] sm:$0xf]
    %v3568 = vld [vmem:[%s7] sm:$0x1]
    %v3570 = vperm.slane %v3568, 0
    %v3576 = vunpack.c.l.b16 %v3564
    %v3577 = vunpack.c.l.b16 %v3565
    %v3578 = vunpack.c.l.b16 %v3566
    %v3579 = vunpack.c.l.b16 %v3567
    %v3580 = vpack.c.b16 %v3577, %v3576
    %v3581 = vpack.c.b16 %v3579, %v3578
    %v3585 = vsel %vm154, %v3563, 0
    %3587 = vmatpush.bf16.msra.mxu0 0
    %3588 = vmatpush.bf16.msra.mxu0 0
    %3589 = vmatpush.bf16.msra.mxu0 0
    %3590 = vmatpush.bf16.msra.mxu0 0
    %3591 = vmatpush.bf16.msra.mxu0 0
    %3592 = vmatpush.bf16.msra.mxu0 0
    %3593 = vmatpush.bf16.msra.mxu0 %v3581
    %3594 = vmatpush.bf16.msra.mxu0 %v3580
    %3595 = vmatmul.bf16.gmra.mxu0 %v3585
    %v3596 = vpop.f32.mrf.mxu0
    %v3597 = vadd.f32 %v3570, %v3596
    %v3598 = vpop.f32.mrf.mxu0
    %v3599 = vadd.f32 %v3570, %v3598
    %3600 = vdwg.mxu0
    %v3601 = vmax.f32 %v3597, 0.0
    %v3602 = vmax.f32 %v3599, 0.0
    %v3603 = vpack.c.bf16 %v3602, %v3601
    %v3604 = vld [vmem:[#allocation10] sm:$0xf]
    %v3605 = vld [vmem:[#allocation10 + $0x4] sm:$0xf]
    %v3606 = vld [vmem:[#allocation10 + $0x8] sm:$0xf]
    %v3607 = vld [vmem:[#allocation10 + $0xc] sm:$0xf]
    %v3612 = vunpack.c.l.b16 %v3604
    %v3613 = vunpack.c.l.b16 %v3605
    %v3614 = vunpack.c.l.b16 %v3606
    %v3615 = vunpack.c.l.b16 %v3607
    %v3616 = vpack.c.b16 %v3613, %v3612
    %v3617 = vpack.c.b16 %v3615, %v3614
    %v3621 = vsel %vm154, %v3603, 0
    %3623 = vmatpush.bf16.msra.mxu0 0
    %3624 = vmatpush.bf16.msra.mxu0 0
    %3625 = vmatpush.bf16.msra.mxu0 0
    %3626 = vmatpush.bf16.msra.mxu0 0
    %3627 = vmatpush.bf16.msra.mxu0 0
    %3628 = vmatpush.bf16.msra.mxu0 0
    %3629 = vmatpush.bf16.msra.mxu0 %v3617
    %3630 = vmatpush.bf16.msra.mxu0 %v3616
    %3631 = vmatmul.bf16.gmra.mxu0 %v3621
    %v3632 = vpop.f32.mrf.mxu0
    %v3633 = vadd.f32 0.0, %v3632
    %v3634 = vpop.f32.mrf.mxu0
    %v3635 = vadd.f32 0.0, %v3634
    %3636 = vdwg.mxu0
    %v3637 = vld [vmem:[%s8] sm:$0xff]
    %3639 = vset.pattern.permute.xlu0 0
    %3640 = vperm.xlu0 %3639, %v3637
    %v3641 = vpop.permute.xlu0 %3640
    %v3643 = vmul.f32 %v3633, %v3641
    %v3644 = vmul.f32 %v3635, %v3641
    %v3645 = vld [vmem:[#allocation13] sm:$0xff]
    %v3646 = vadd.f32 %v3643, %v3645
    %v3647 = vadd.f32 %v3644, %v3645
    %v3648 = vadd.f32 %v3646, %v3561
    %v3649 = vadd.f32 %v3647, %v3562
    %v3650 = vrot.slane %v3648, 4
    %v3651 = vsel %vm332, 0.0, %v3650
    %v3653 = vunpack.c.l.s4 1983009808
    %v3654 = vunpack.c.0.s8 %v3653
    %v3655 = vperm.slane %v3648, %v3654
    %v3657 = vunpack.c.l.s4 1983009808
    %v3658 = vunpack.c.0.s8 %v3657
    %v3659 = vperm.slane %v3651, %v3658
    %v3660 = vrot.slane %v3655, 4
    %v3661 = vsel %vm332, 0.0, %v3660
    %v3663 = vunpack.c.l.s4 1934713408
    %v3664 = vunpack.c.0.s8 %v3663
    %v3665 = vperm.slane %v3655, %v3664
    %v3667 = vunpack.c.l.s4 1934713408
    %v3668 = vunpack.c.0.s8 %v3667
    %v3669 = vperm.slane %v3661, %v3668
    %v3670 = vrot.slane %v3659, 4
    %v3671 = vsel %vm332, 0.0, %v3670
    %v3673 = vunpack.c.l.s4 1934713408
    %v3674 = vunpack.c.0.s8 %v3673
    %v3675 = vperm.slane %v3659, %v3674
    %v3677 = vunpack.c.l.s4 1934713408
    %v3678 = vunpack.c.0.s8 %v3677
    %v3679 = vperm.slane %v3671, %v3678
    %v3680 = vrot.slane %v3665, 4
    %v3681 = vsel %vm332, 0.0, %v3680
    %v3682 = vrot.slane %v3669, 4
    %v3683 = vsel %vm332, 0.0, %v3682
    %v3684 = vrot.slane %v3675, 4
    %v3685 = vsel %vm332, 0.0, %v3684
    %v3686 = vrot.slane %v3679, 4
    %v3687 = vsel %vm332, 0.0, %v3686
    %v3688 = vrot.slane %v3649, 4
    %v3689 = vsel %vm332, 0.0, %v3688
    %v3691 = vunpack.c.l.s4 1983009808
    %v3692 = vunpack.c.0.s8 %v3691
    %v3693 = vperm.slane %v3649, %v3692
    %v3695 = vunpack.c.l.s4 1983009808
    %v3696 = vunpack.c.0.s8 %v3695
    %v3697 = vperm.slane %v3689, %v3696
    %v3698 = vrot.slane %v3693, 4
    %v3699 = vsel %vm332, 0.0, %v3698
    %v3701 = vunpack.c.l.s4 1934713408
    %v3702 = vunpack.c.0.s8 %v3701
    %v3703 = vperm.slane %v3693, %v3702
    %v3705 = vunpack.c.l.s4 1934713408
    %v3706 = vunpack.c.0.s8 %v3705
    %v3707 = vperm.slane %v3699, %v3706
    %v3708 = vrot.slane %v3697, 4
    %v3709 = vsel %vm332, 0.0, %v3708
    %v3711 = vunpack.c.l.s4 1934713408
    %v3712 = vunpack.c.0.s8 %v3711
    %v3713 = vperm.slane %v3697, %v3712
    %v3715 = vunpack.c.l.s4 1934713408
    %v3716 = vunpack.c.0.s8 %v3715
    %v3717 = vperm.slane %v3709, %v3716
    %v3718 = vrot.slane %v3703, 4
    %v3719 = vsel %vm332, 0.0, %v3718
    %v3720 = vrot.slane %v3707, 4
    %v3721 = vsel %vm332, 0.0, %v3720
    %v3722 = vrot.slane %v3713, 4
    %v3723 = vsel %vm332, 0.0, %v3722
    %v3724 = vrot.slane %v3717, 4
    %v3725 = vsel %vm332, 0.0, %v3724
    %3728 = vrot.lane.b32.xlu0 %v3681, 32
    %v3729 = vpop.permute.xlu0 %3728
    %3730 = vrot.lane.b32.xlu0 %v3719, 32
    %v3731 = vpop.permute.xlu0 %3730
    %3736 = vrot.lane.b32.xlu0 %v3669, 64
    %v3737 = vpop.permute.xlu0 %3736
    %3738 = vrot.lane.b32.xlu0 %v3707, 64
    %v3739 = vpop.permute.xlu0 %3738
    %3744 = vrot.lane.b32.xlu0 %v3683, 96
    %v3745 = vpop.permute.xlu0 %3744
    %3746 = vrot.lane.b32.xlu0 %v3721, 96
    %v3747 = vpop.permute.xlu0 %3746
    %3752 = vrot.lane.b32.xlu0 %v3685, 32
    %v3753 = vpop.permute.xlu0 %3752
    %3754 = vrot.lane.b32.xlu0 %v3723, 32
    %v3755 = vpop.permute.xlu0 %3754
    %3760 = vrot.lane.b32.xlu0 %v3679, 64
    %v3761 = vpop.permute.xlu0 %3760
    %3762 = vrot.lane.b32.xlu0 %v3717, 64
    %v3763 = vpop.permute.xlu0 %3762
    %3768 = vrot.lane.b32.xlu0 %v3687, 96
    %v3769 = vpop.permute.xlu0 %3768
    %3770 = vrot.lane.b32.xlu0 %v3725, 96
    %v3771 = vpop.permute.xlu0 %3770
    %v3774 = vsel %vm154, %v3665, %v3729
    %v3775 = vsel %vm154, %v3703, %v3731
    %vm3776 = vcmask 523264
    %v3777 = vsel %vm3776, %v3774, %v3737
    %v3778 = vsel %vm3776, %v3775, %v3739
    %vm3779 = vcmask 785408
    %v3780 = vsel %vm3779, %v3777, %v3745
    %v3781 = vsel %vm3779, %v3778, %v3747
    %v3782 = vsel %vm154, %v3675, %v3753
    %v3783 = vsel %vm154, %v3713, %v3755
    %v3784 = vsel %vm3776, %v3782, %v3761
    %v3785 = vsel %vm3776, %v3783, %v3763
    %v3786 = vsel %vm3779, %v3784, %v3769
    %v3787 = vsel %vm3779, %v3785, %v3771
    %v3792 = vrot.slane %v3786, 7
    %v3793 = vrot.slane %v3787, 7
    %vm3794 = vcmask 1040384
    %v3795 = vsel %vm3794, %v3780, %v3792
    %v3796 = vsel %vm3794, %v3781, %v3793
    %v3799 = vlaneseq
    %vm3800 = vcmp.ge.s32.totalorder %v3799, 0
    %vm3801 = vcmp.lt.s32.totalorder %v3799, 256
    %vm3802 = vmand %vm3800, %vm3801
    %3803 = vst.msk [vmem:[#allocation14] sm:$0x3] %vm3802, %v3795
    %3804 = vst.msk [vmem:[#allocation14 + $0x2] sm:$0x3] %vm3802, %v3796
    // Predicated region
    $region70: #{tpu_custom_call.1} parent=1 // pred_check
      _
    $region71: #{tpu_custom_call.1} parent=1 // pred_check_branch
      %3806 = sbr.rel (0) target = $region73
    $region72: #{tpu_custom_call.1} parent=1 // pred_region
      %3808 = vsyncadd [#allocation4], 0
      %s3809 = sshll.u32 [#allocation14], 4
      %s3810 = int_to_ptr.vmem [resolvable:$true] %s3809
      %s3811 = sshll.u32 %s10, 4
      %s3812 = int_to_ptr.hbm [resolvable:$true] %s3811
      %3817 = dma.vmem_to_hbm [thread:$0]  %s3810, 64, %s3812, [#allocation4], 32, 32, 2
    $region73: #{tpu_custom_call.1} parent=1 // pred_fallthru
      _
    // Predicated region
    $region74: #{tpu_custom_call.1} parent=1 // pred_check
      _
    $region75: #{tpu_custom_call.1} parent=1 // pred_check_branch
      %3819 = sbr.rel (0) target = $region77
    $region76: #{tpu_custom_call.1} parent=1 // pred_region
      %3821 = vsyncadd [#allocation16], 0
      %s3822 = sshll.u32 [#allocation15], 4
      %s3823 = int_to_ptr.vmem [resolvable:$true] %s3822
      %s3824 = sshll.u32 %s11, 4
      %s3825 = int_to_ptr.hbm [resolvable:$true] %s3824
      %3830 = dma.vmem_to_hbm [thread:$0]  %s3823, 256, %s3825, [#allocation16], 128, 128, 8
    $region77: #{tpu_custom_call.1} parent=1 // pred_fallthru
      _
    // Predicated region
    $region78: #{tpu_custom_call.1} parent=1 // pred_check
      _
    $region79: #{tpu_custom_call.1} parent=1 // pred_check_branch
      %3832 = sbr.rel (0) target = $region81
    $region80: #{tpu_custom_call.1} parent=1 // pred_region
      %3834 = dma.done [#allocation4], 64
    $region81: #{tpu_custom_call.1} parent=1 // pred_fallthru
      _
    // Predicated region
    $region82: #{tpu_custom_call.1} parent=1 // pred_check
      _
    $region83: #{tpu_custom_call.1} parent=1 // pred_check_branch
      %3836 = sbr.rel (0) target = $region85
    $region84: #{tpu_custom_call.1} parent=1 // pred_region
      %3838 = dma.done [#allocation16], 256
    $region85: #{tpu_custom_call.1} parent=1 // pred_fallthru
      _
    %3839 = vsyncpa [#allocation3], 1
    %3840 = vsyncpa [#allocation6], 1
    %3841 = vsyncpa [#allocation9], 1
    %3842 = vsyncpa [#allocation12], 1
    %3843 = vsyncpa [#allocation4], 1
    %3844 = vsyncpa [#allocation16], 1

</llo_original>
